<compile_context>
chip_gen: v5e
topology: v5e:2x2
jax: 0.10.0
libtpu: 0.0.40
codegen_flags: <defaults>
</compile_context>

<pallas_src>
from functools import partial

import numpy as np
import jax
import jax.numpy as jnp
from jax.experimental import pallas as pl
from jax.experimental.pallas import tpu as pltpu

EPS = 1e-5          # nn.InstanceNorm2d / nn.LayerNorm default eps
RANK = 6
LORA_ALPHA = 1.0
LORA_SCALE = LORA_ALPHA / RANK

# static geometry (fc1 = Linear(16*4*4, 120) pins the input to 1x28x28, MNIST)
K = 5
H1, W1 = 28, 28
OH1, OW1 = 24, 24          # conv1 output map
PH1, PW1 = 12, 12          # after first 2x2 max-pool
L1 = PH1 * PW1             # 144 lanes per pool group
S1 = 4 * L1                # 576 valid conv1 lanes per sample (4 pool groups)
S1P = 640                  # per-sample conv1 lane segment, padded to 5*128
OH2, OW2 = 8, 8            # conv2 output map
L2 = OH2 * OW2             # 64
L2P = 128                  # per-sample conv2 lane segment, padded to 128
PH2, PW2 = 4, 4            # after second 2x2 max-pool
C1, C2 = 6, 16
P1C = 25                   # conv1 contraction dim (Cin*K*K)
P2C = 150                  # conv2 contraction dim
FEAT = C2 * PH2 * PW2      # 256


def _layernorm(h, g, b):
    mu = jnp.mean(h, axis=-1, keepdims=True)
    var = jnp.mean((h - mu) ** 2, axis=-1, keepdims=True)
    return (h - mu) * jax.lax.rsqrt(var + EPS) * g + b


# ----------------------------------------------------------------------------
# Fused kernel: conv1 -> IN -> ReLU -> pool -> conv2 -> IN -> ReLU -> pool ->
#               fc1 -> LN -> ReLU -> fc2 -> LN -> ReLU -> fc3   (TB samples/step)
# ----------------------------------------------------------------------------
def _lenet_kernel(cols1_ref, w1_ref, cp1_ref, w2_ref, cp2_ref, sel_ref,
                  f1_ref, p1_ref, f2_ref, p2_ref, f3_ref, b3_ref, out_ref):
    tb = out_ref.shape[1]

    # ---- conv1 (+folded LoRA) for all TB samples: one MXU call ----
    cols1 = cols1_ref[0]                                                    # (25, TB*640)
    y1 = jnp.dot(w1_ref[...], cols1, preferred_element_type=jnp.float32)    # (6, TB*640)

    zpad = jnp.zeros((P2C, L2P - L2), jnp.float32)
    cols2_parts = []
    for b in range(tb):
        # per-sample segment; 640 = 5*128 keeps segment starts lane-aligned
        seg = y1[:, b * S1P: b * S1P + S1] + cp1_ref[:, 0:1]                # (6, 576)
        # InstanceNorm2d(6): one-pass stats over the full 24x24 map
        mu = jnp.sum(seg, axis=1, keepdims=True) * (1.0 / S1)
        ex2 = jnp.sum(seg * seg, axis=1, keepdims=True) * (1.0 / S1)
        var = jnp.maximum(ex2 - mu * mu, 0.0)
        seg = (seg - mu) * jax.lax.rsqrt(var + EPS) * cp1_ref[:, 1:2] + cp1_ref[:, 2:3]
        seg = jnp.maximum(seg, 0.0)
        # 2x2 max-pool == elementwise max over the 4 pool-group lane blocks
        pooled1 = jnp.maximum(jnp.maximum(seg[:, 0:L1], seg[:, L1:2 * L1]),
                              jnp.maximum(seg[:, 2 * L1:3 * L1], seg[:, 3 * L1:4 * L1]))  # (6,144)

        # conv2 im2col in VMEM, contiguous lane slices + concats only.
        # shifted[dj][:, 8*r + ow] = pooled1_map[:, r, ow + dj]
        shifted = []
        for dj in range(K):
            rows = [pooled1[:, PW1 * r + dj: PW1 * r + dj + OW2] for r in range(PH1)]
            shifted.append(jnp.concatenate(rows, axis=1))                   # (6, 96)
        wins = []
        for di in range(K):
            for dj in range(K):
                wins.append(shifted[dj][:, OW2 * di: OW2 * di + L2])        # (6, 64)
        cols2_b = jnp.concatenate(wins, axis=0)                             # (150, 64), rows=(di,dj,ci)
        cols2_parts.append(jnp.concatenate([cols2_b, zpad], axis=1))        # (150, 128)

    cols2 = jnp.concatenate(cols2_parts, axis=1)                            # (150, TB*128)

    # ---- conv2 (+folded LoRA) for all TB samples: one MXU call ----
    y2 = jnp.dot(w2_ref[...], cols2, preferred_element_type=jnp.float32)    # (16, TB*128)

    sel = sel_ref[...]                                                      # (64, 64) 0/1 gather
    feat_rows = []
    for b in range(tb):
        yb = y2[:, b * L2P: b * L2P + L2] + cp2_ref[:, 0:1]                 # (16, 64)
        mu = jnp.sum(yb, axis=1, keepdims=True) * (1.0 / L2)
        ex2 = jnp.sum(yb * yb, axis=1, keepdims=True) * (1.0 / L2)
        var = jnp.maximum(ex2 - mu * mu, 0.0)
        yb = (yb - mu) * jax.lax.rsqrt(var + EPS) * cp2_ref[:, 1:2] + cp2_ref[:, 2:3]
        yb = jnp.maximum(yb, 0.0)
        # 2x2 max-pool: gather the 4 window members with a 0/1 matmul, slice-max
        g = jnp.dot(yb, sel, preferred_element_type=jnp.float32)            # (16, 64)
        pooled2 = jnp.maximum(jnp.maximum(g[:, 0:16], g[:, 16:32]),
                              jnp.maximum(g[:, 32:48], g[:, 48:64]))        # (16, 16)
        # flatten channel-major (matches torch x.view(-1, 16*4*4))
        feat_rows.append(jnp.concatenate(
            [pooled2[c:c + 1, :] for c in range(C2)], axis=1))              # (1, 256)
    feat = jnp.concatenate(feat_rows, axis=0)                               # (TB, 256)

    # ---- batched FC stack (LoRA folded into the dense weights) ----
    h = jnp.dot(feat, f1_ref[...], preferred_element_type=jnp.float32) + p1_ref[0:1, :]
    h = jnp.maximum(_layernorm(h, p1_ref[1:2, :], p1_ref[2:3, :]), 0.0)
    h = jnp.dot(h, f2_ref[...], preferred_element_type=jnp.float32) + p2_ref[0:1, :]
    h = jnp.maximum(_layernorm(h, p2_ref[1:2, :], p2_ref[2:3, :]), 0.0)
    out_ref[0] = jnp.dot(h, f3_ref[...], preferred_element_type=jnp.float32) + b3_ref[...]


def lenet_block(cols1b, params, tb):
    """cols1b: (G, 25, tb*640) pool-grouped conv1 columns; returns (G*tb, 10)."""
    G = cols1b.shape[0]
    nclass = params['f3'].shape[1]
    out = pl.pallas_call(
        _lenet_kernel,
        out_shape=jax.ShapeDtypeStruct((G, tb, nclass), jnp.float32),
        grid=(G,),
        in_specs=[
            pl.BlockSpec((1, P1C, tb * S1P), lambda i: (i, 0, 0)),
            pl.BlockSpec(params['w1'].shape, lambda i: (0, 0)),
            pl.BlockSpec(params['cp1'].shape, lambda i: (0, 0)),
            pl.BlockSpec(params['w2'].shape, lambda i: (0, 0)),
            pl.BlockSpec(params['cp2'].shape, lambda i: (0, 0)),
            pl.BlockSpec(params['sel'].shape, lambda i: (0, 0)),
            pl.BlockSpec(params['f1'].shape, lambda i: (0, 0)),
            pl.BlockSpec(params['p1'].shape, lambda i: (0, 0)),
            pl.BlockSpec(params['f2'].shape, lambda i: (0, 0)),
            pl.BlockSpec(params['p2'].shape, lambda i: (0, 0)),
            pl.BlockSpec(params['f3'].shape, lambda i: (0, 0)),
            pl.BlockSpec(params['b3'].shape, lambda i: (0, 0)),
        ],
        out_specs=pl.BlockSpec((1, tb, nclass), lambda i: (i, 0, 0)),
        compiler_params=pltpu.CompilerParams(dimension_semantics=("parallel",)),
    )(cols1b, params['w1'], params['cp1'], params['w2'], params['cp2'], params['sel'],
      params['f1'], params['p1'], params['f2'], params['p2'], params['f3'], params['b3'])
    return out.reshape(G * tb, nclass)


# ----------------------------------------------------------------------------
# Wrapper glue: pool-grouped im2col for conv1, padded + batch-on-lanes layout
# ----------------------------------------------------------------------------
def _build_cols1(x, tb):
    B = x.shape[0]
    xi = x.reshape(B, H1, W1)
    pats = jnp.stack([xi[:, di:di + OH1, dj:dj + OW1]
                      for di in range(K) for dj in range(K)], axis=1)        # (B,25,24,24)
    groups = [pats[:, :, gi::2, gj::2].reshape(B, K * K, L1)
              for gi in range(2) for gj in range(2)]
    cols = jnp.concatenate(groups, axis=-1)                                  # (B,25,576)
    cols = jnp.pad(cols, ((0, 0), (0, 0), (0, S1P - S1)))                    # (B,25,640)
    G = B // tb
    cols = cols.reshape(G, tb, K * K, S1P).transpose(0, 2, 1, 3).reshape(G, K * K, tb * S1P)
    return cols


def _make_pool_select():
    # S[oh*8+ow, g*16 + p*4 + q] = 1 iff (oh, ow) == (2p+gi, 2q+gj), g = gi*2+gj
    S = np.zeros((L2, 4 * PH2 * PW2), np.float32)
    for gi in range(2):
        for gj in range(2):
            g = gi * 2 + gj
            for p in range(PH2):
                for q in range(PW2):
                    S[(2 * p + gi) * OW2 + (2 * q + gj), g * 16 + p * 4 + q] = 1.0
    return jnp.asarray(S)                                                    # (64, 64)


def _pick_tb(B, target=8):
    # largest divisor of B that is <= target and keeps >= 2 grid steps (v7x: 2 TCs)
    cap = max(1, min(target, B // 2 if B >= 2 else B))
    tb = 1
    for d in range(1, cap + 1):
        if B % d == 0:
            tb = d
    return tb


# ----------------------------------------------------------------------------
# Deterministic synthetic parameters (shapes from the module's __init__)
# ----------------------------------------------------------------------------
def init_params(key):
    ks = jax.random.split(key, 32)
    n = lambda i, shape, s=0.1: s * jax.random.normal(ks[i], shape, jnp.float32)

    p = {}
    # conv1: 1->6 k=5, LoRA2d rank 6 folded into the conv weight
    conv1_w = n(0, (6, 1, 5, 5))
    d1 = (n(2, (6, RANK)) @ n(1, (RANK, 25))) * LORA_SCALE
    p['w1'] = conv1_w.reshape(6, 25) + d1                                    # rows=out ch, cols=(di,dj)
    p['cp1'] = jnp.stack([n(3, (6,)), 1.0 + n(4, (6,)), n(5, (6,))], axis=1)   # [bias|gamma|beta] (6,3)

    # conv2: 6->16 k=5, LoRA folded; columns permuted to (di,dj,ci) to match in-kernel im2col
    conv2_w = n(6, (16, 6, 5, 5))
    d2 = (n(8, (16, RANK)) @ n(7, (RANK, 150))).reshape(16, 6, 5, 5) * LORA_SCALE
    p['w2'] = jnp.transpose(conv2_w + d2, (0, 2, 3, 1)).reshape(16, 150)
    p['cp2'] = jnp.stack([n(9, (16,)), 1.0 + n(10, (16,)), n(11, (16,))], axis=1)  # (16,3)

    # constant 0/1 gather matrix for the second 2x2 max-pool
    p['sel'] = _make_pool_select()

    # fc1: 256->120 (+LoRA folded), LayerNorm(120)
    fc1_w = n(12, (120, 256))
    d3 = (n(15, (120, RANK)) @ n(14, (RANK, 256))) * LORA_SCALE
    p['f1'] = (fc1_w + d3).T                                                 # (256,120)
    p['p1'] = jnp.stack([n(13, (120,)), 1.0 + n(16, (120,)), n(17, (120,))], axis=0)  # (3,120)

    # fc2: 120->84 (+LoRA folded), LayerNorm(84)
    fc2_w = n(18, (84, 120))
    d4 = (n(21, (84, RANK)) @ n(20, (RANK, 120))) * LORA_SCALE
    p['f2'] = (fc2_w + d4).T                                                 # (120,84)
    p['p2'] = jnp.stack([n(19, (84,)), 1.0 + n(22, (84,)), n(23, (84,))], axis=0)     # (3,84)

    # fc3: 84->10 (+LoRA folded)
    fc3_w = n(24, (10, 84))
    d5 = (n(27, (10, RANK)) @ n(26, (RANK, 84))) * LORA_SCALE
    p['f3'] = (fc3_w + d5).T                                                 # (84,10)
    p['b3'] = n(25, (10,)).reshape(1, 10)
    return p


# ----------------------------------------------------------------------------
# Forward pass
# ----------------------------------------------------------------------------
@partial(jax.jit, static_argnames=("tb",))
def forward(x, params, *, tb):
    cols1 = _build_cols1(x, tb)          # one XLA gather fusion (see TODO above)
    return lenet_block(cols1, params, tb)


if __name__ == "__main__":
    key = jax.random.PRNGKey(0)
    kx, kp = jax.random.split(key)
    B = 8                                 # fc1 hard-codes 16*4*4 -> input must be 1x28x28
    x = jax.random.normal(kx, (B, 1, 28, 28), jnp.float32)
    params = init_params(kp)
    tb = _pick_tb(B)                      # -> 4 samples/step, grid=2 (both v7x TCs busy)
    out = forward(x, params, tb=tb)
    out = jax.block_until_ready(out)
    assert out.shape == (B, 10)
    assert bool(jnp.all(jnp.isfinite(out)))
    print("KERNEL_OK")
</pallas_src>

<mosaic_0001>
module attributes {stable_mosaic.version = 11 : i64} {
  func.func @_lenet_kernel(%arg0: i32, %arg1: memref<1x25x2560xf32, #tpu.memory_space<vmem>>, %arg2: memref<6x25xf32, #tpu.memory_space<vmem>>, %arg3: memref<6x3xf32, #tpu.memory_space<vmem>>, %arg4: memref<16x150xf32, #tpu.memory_space<vmem>>, %arg5: memref<16x3xf32, #tpu.memory_space<vmem>>, %arg6: memref<64x64xf32, #tpu.memory_space<vmem>>, %arg7: memref<256x120xf32, #tpu.memory_space<vmem>>, %arg8: memref<3x120xf32, #tpu.memory_space<vmem>>, %arg9: memref<120x84xf32, #tpu.memory_space<vmem>>, %arg10: memref<3x84xf32, #tpu.memory_space<vmem>>, %arg11: memref<84x10xf32, #tpu.memory_space<vmem>>, %arg12: memref<1x10xf32, #tpu.memory_space<vmem>>, %arg13: memref<1x4x10xf32, #tpu.memory_space<vmem>>) attributes {dimension_semantics = [#tpu.dimension_semantics<parallel>], iteration_bounds = array<i64: 2>, scalar_prefetch = 0 : i64, scratch_operands = 0 : i64, tpu.core_type = #tpu.core_type<tc>, window_params = [{transform_indices = @transform_0, window_bounds = array<i64: 1, 25, 2560>}, {pipeline_mode = #tpu.pipeline_mode<synchronous>, transform_indices = @transform_1, window_bounds = array<i64: 6, 25>}, {pipeline_mode = #tpu.pipeline_mode<synchronous>, transform_indices = @transform_2, window_bounds = array<i64: 6, 3>}, {pipeline_mode = #tpu.pipeline_mode<synchronous>, transform_indices = @transform_3, window_bounds = array<i64: 16, 150>}, {pipeline_mode = #tpu.pipeline_mode<synchronous>, transform_indices = @transform_4, window_bounds = array<i64: 16, 3>}, {pipeline_mode = #tpu.pipeline_mode<synchronous>, transform_indices = @transform_5, window_bounds = array<i64: 64, 64>}, {pipeline_mode = #tpu.pipeline_mode<synchronous>, transform_indices = @transform_6, window_bounds = array<i64: 256, 120>}, {pipeline_mode = #tpu.pipeline_mode<synchronous>, transform_indices = @transform_7, window_bounds = array<i64: 3, 120>}, {pipeline_mode = #tpu.pipeline_mode<synchronous>, transform_indices = @transform_8, window_bounds = array<i64: 120, 84>}, {pipeline_mode = #tpu.pipeline_mode<synchronous>, transform_indices = @transform_9, window_bounds = array<i64: 3, 84>}, {pipeline_mode = #tpu.pipeline_mode<synchronous>, transform_indices = @transform_10, window_bounds = array<i64: 84, 10>}, {pipeline_mode = #tpu.pipeline_mode<synchronous>, transform_indices = @transform_11, window_bounds = array<i64: 1, 10>}, {transform_indices = @transform_12, window_bounds = array<i64: 1, 4, 10>}]} {
    %c0 = arith.constant 0 : index
    %c0_0 = arith.constant 0 : index
    %c0_1 = arith.constant 0 : index
    %0 = vector.load %arg1[%c0, %c0_0, %c0_1] : memref<1x25x2560xf32, #tpu.memory_space<vmem>>, vector<1x25x2560xf32>
    %1 = vector.shape_cast %0 : vector<1x25x2560xf32> to vector<25x2560xf32>
    %c0_2 = arith.constant 0 : index
    %c0_3 = arith.constant 0 : index
    %2 = vector.load %arg2[%c0_2, %c0_3] : memref<6x25xf32, #tpu.memory_space<vmem>>, vector<6x25xf32>
    %cst = arith.constant dense<0.000000e+00> : vector<6x2560xf32>
    %3 = tpu.matmul %2, %1, %cst {dimension_numbers = #tpu.dot_dimension_numbers<[1], [0], [0], [1], [0, 0, 1, 1], [], []>} : vector<6x25xf32>, vector<25x2560xf32>, vector<6x2560xf32> -> vector<6x2560xf32>
    %cst_4 = arith.constant 0.000000e+00 : f32
    %4 = vector.broadcast %cst_4 : f32 to vector<150x64xf32>
    %5 = vector.extract_strided_slice %3 {offsets = [0, 0], sizes = [6, 576], strides = [1, 1]} : vector<6x2560xf32> to vector<6x576xf32>
    %c0_5 = arith.constant 0 : index
    %c0_6 = arith.constant 0 : index
    %6 = vector.load %arg3[%c0_5, %c0_6] : memref<6x3xf32, #tpu.memory_space<vmem>>, vector<6x1xf32>
    %7 = vector.broadcast %6 : vector<6x1xf32> to vector<6x576xf32>
    %8 = arith.addf %5, %7 : vector<6x576xf32>
    %cst_7 = arith.constant dense<0.000000e+00> : vector<6xf32>
    %9 = vector.multi_reduction <add>, %8, %cst_7 [1] : vector<6x576xf32> to vector<6xf32>
    %10 = vector.shape_cast %9 : vector<6xf32> to vector<6x1xf32>
    %cst_8 = arith.constant 0.00173611112 : f32
    %11 = vector.broadcast %cst_8 : f32 to vector<6x1xf32>
    %12 = arith.mulf %10, %11 : vector<6x1xf32>
    %13 = arith.mulf %8, %8 : vector<6x576xf32>
    %cst_9 = arith.constant dense<0.000000e+00> : vector<6xf32>
    %14 = vector.multi_reduction <add>, %13, %cst_9 [1] : vector<6x576xf32> to vector<6xf32>
    %15 = vector.shape_cast %14 : vector<6xf32> to vector<6x1xf32>
    %cst_10 = arith.constant 0.00173611112 : f32
    %16 = vector.broadcast %cst_10 : f32 to vector<6x1xf32>
    %17 = arith.mulf %15, %16 : vector<6x1xf32>
    %18 = arith.mulf %12, %12 : vector<6x1xf32>
    %19 = arith.subf %17, %18 : vector<6x1xf32>
    %cst_11 = arith.constant 0.000000e+00 : f32
    %20 = vector.broadcast %cst_11 : f32 to vector<6x1xf32>
    %21 = arith.maximumf %19, %20 : vector<6x1xf32>
    %22 = vector.broadcast %12 : vector<6x1xf32> to vector<6x576xf32>
    %23 = arith.subf %8, %22 : vector<6x576xf32>
    %cst_12 = arith.constant 9.99999974E-6 : f32
    %24 = vector.broadcast %cst_12 : f32 to vector<6x1xf32>
    %25 = arith.addf %21, %24 : vector<6x1xf32>
    %26 = math.rsqrt %25 : vector<6x1xf32>
    %27 = vector.broadcast %26 : vector<6x1xf32> to vector<6x576xf32>
    %28 = arith.mulf %23, %27 : vector<6x576xf32>
    %c0_13 = arith.constant 0 : index
    %c1 = arith.constant 1 : index
    %29 = vector.load %arg3[%c0_13, %c1] : memref<6x3xf32, #tpu.memory_space<vmem>>, vector<6x1xf32>
    %30 = vector.broadcast %29 : vector<6x1xf32> to vector<6x576xf32>
    %31 = arith.mulf %28, %30 : vector<6x576xf32>
    %c0_14 = arith.constant 0 : index
    %c2 = arith.constant 2 : index
    %32 = vector.load %arg3[%c0_14, %c2] : memref<6x3xf32, #tpu.memory_space<vmem>>, vector<6x1xf32>
    %33 = vector.broadcast %32 : vector<6x1xf32> to vector<6x576xf32>
    %34 = arith.addf %31, %33 : vector<6x576xf32>
    %cst_15 = arith.constant 0.000000e+00 : f32
    %35 = vector.broadcast %cst_15 : f32 to vector<6x576xf32>
    %36 = arith.maximumf %34, %35 : vector<6x576xf32>
    %37 = vector.extract_strided_slice %36 {offsets = [0, 0], sizes = [6, 144], strides = [1, 1]} : vector<6x576xf32> to vector<6x144xf32>
    %38 = vector.extract_strided_slice %36 {offsets = [0, 144], sizes = [6, 144], strides = [1, 1]} : vector<6x576xf32> to vector<6x144xf32>
    %39 = arith.maximumf %37, %38 : vector<6x144xf32>
    %40 = vector.extract_strided_slice %36 {offsets = [0, 288], sizes = [6, 144], strides = [1, 1]} : vector<6x576xf32> to vector<6x144xf32>
    %41 = vector.extract_strided_slice %36 {offsets = [0, 432], sizes = [6, 144], strides = [1, 1]} : vector<6x576xf32> to vector<6x144xf32>
    %42 = arith.maximumf %40, %41 : vector<6x144xf32>
    %43 = arith.maximumf %39, %42 : vector<6x144xf32>
    %44 = vector.extract_strided_slice %43 {offsets = [0, 0], sizes = [6, 8], strides = [1, 1]} : vector<6x144xf32> to vector<6x8xf32>
    %45 = vector.extract_strided_slice %43 {offsets = [0, 12], sizes = [6, 8], strides = [1, 1]} : vector<6x144xf32> to vector<6x8xf32>
    %46 = vector.extract_strided_slice %43 {offsets = [0, 24], sizes = [6, 8], strides = [1, 1]} : vector<6x144xf32> to vector<6x8xf32>
    %47 = vector.extract_strided_slice %43 {offsets = [0, 36], sizes = [6, 8], strides = [1, 1]} : vector<6x144xf32> to vector<6x8xf32>
    %48 = vector.extract_strided_slice %43 {offsets = [0, 48], sizes = [6, 8], strides = [1, 1]} : vector<6x144xf32> to vector<6x8xf32>
    %49 = vector.extract_strided_slice %43 {offsets = [0, 60], sizes = [6, 8], strides = [1, 1]} : vector<6x144xf32> to vector<6x8xf32>
    %50 = vector.extract_strided_slice %43 {offsets = [0, 72], sizes = [6, 8], strides = [1, 1]} : vector<6x144xf32> to vector<6x8xf32>
    %51 = vector.extract_strided_slice %43 {offsets = [0, 84], sizes = [6, 8], strides = [1, 1]} : vector<6x144xf32> to vector<6x8xf32>
    %52 = vector.extract_strided_slice %43 {offsets = [0, 96], sizes = [6, 8], strides = [1, 1]} : vector<6x144xf32> to vector<6x8xf32>
    %53 = vector.extract_strided_slice %43 {offsets = [0, 108], sizes = [6, 8], strides = [1, 1]} : vector<6x144xf32> to vector<6x8xf32>
    %54 = vector.extract_strided_slice %43 {offsets = [0, 120], sizes = [6, 8], strides = [1, 1]} : vector<6x144xf32> to vector<6x8xf32>
    %55 = vector.extract_strided_slice %43 {offsets = [0, 132], sizes = [6, 8], strides = [1, 1]} : vector<6x144xf32> to vector<6x8xf32>
    %56 = tpu.concatenate %44, %45, %46, %47, %48, %49, %50, %51, %52, %53, %54, %55 in 1 : vector<6x8xf32>, vector<6x8xf32>, vector<6x8xf32>, vector<6x8xf32>, vector<6x8xf32>, vector<6x8xf32>, vector<6x8xf32>, vector<6x8xf32>, vector<6x8xf32>, vector<6x8xf32>, vector<6x8xf32>, vector<6x8xf32> -> vector<6x96xf32>
    %57 = vector.extract_strided_slice %43 {offsets = [0, 1], sizes = [6, 8], strides = [1, 1]} : vector<6x144xf32> to vector<6x8xf32>
    %58 = vector.extract_strided_slice %43 {offsets = [0, 13], sizes = [6, 8], strides = [1, 1]} : vector<6x144xf32> to vector<6x8xf32>
    %59 = vector.extract_strided_slice %43 {offsets = [0, 25], sizes = [6, 8], strides = [1, 1]} : vector<6x144xf32> to vector<6x8xf32>
    %60 = vector.extract_strided_slice %43 {offsets = [0, 37], sizes = [6, 8], strides = [1, 1]} : vector<6x144xf32> to vector<6x8xf32>
    %61 = vector.extract_strided_slice %43 {offsets = [0, 49], sizes = [6, 8], strides = [1, 1]} : vector<6x144xf32> to vector<6x8xf32>
    %62 = vector.extract_strided_slice %43 {offsets = [0, 61], sizes = [6, 8], strides = [1, 1]} : vector<6x144xf32> to vector<6x8xf32>
    %63 = vector.extract_strided_slice %43 {offsets = [0, 73], sizes = [6, 8], strides = [1, 1]} : vector<6x144xf32> to vector<6x8xf32>
    %64 = vector.extract_strided_slice %43 {offsets = [0, 85], sizes = [6, 8], strides = [1, 1]} : vector<6x144xf32> to vector<6x8xf32>
    %65 = vector.extract_strided_slice %43 {offsets = [0, 97], sizes = [6, 8], strides = [1, 1]} : vector<6x144xf32> to vector<6x8xf32>
    %66 = vector.extract_strided_slice %43 {offsets = [0, 109], sizes = [6, 8], strides = [1, 1]} : vector<6x144xf32> to vector<6x8xf32>
    %67 = vector.extract_strided_slice %43 {offsets = [0, 121], sizes = [6, 8], strides = [1, 1]} : vector<6x144xf32> to vector<6x8xf32>
    %68 = vector.extract_strided_slice %43 {offsets = [0, 133], sizes = [6, 8], strides = [1, 1]} : vector<6x144xf32> to vector<6x8xf32>
    %69 = tpu.concatenate %57, %58, %59, %60, %61, %62, %63, %64, %65, %66, %67, %68 in 1 : vector<6x8xf32>, vector<6x8xf32>, vector<6x8xf32>, vector<6x8xf32>, vector<6x8xf32>, vector<6x8xf32>, vector<6x8xf32>, vector<6x8xf32>, vector<6x8xf32>, vector<6x8xf32>, vector<6x8xf32>, vector<6x8xf32> -> vector<6x96xf32>
    %70 = vector.extract_strided_slice %43 {offsets = [0, 2], sizes = [6, 8], strides = [1, 1]} : vector<6x144xf32> to vector<6x8xf32>
    %71 = vector.extract_strided_slice %43 {offsets = [0, 14], sizes = [6, 8], strides = [1, 1]} : vector<6x144xf32> to vector<6x8xf32>
    %72 = vector.extract_strided_slice %43 {offsets = [0, 26], sizes = [6, 8], strides = [1, 1]} : vector<6x144xf32> to vector<6x8xf32>
    %73 = vector.extract_strided_slice %43 {offsets = [0, 38], sizes = [6, 8], strides = [1, 1]} : vector<6x144xf32> to vector<6x8xf32>
    %74 = vector.extract_strided_slice %43 {offsets = [0, 50], sizes = [6, 8], strides = [1, 1]} : vector<6x144xf32> to vector<6x8xf32>
    %75 = vector.extract_strided_slice %43 {offsets = [0, 62], sizes = [6, 8], strides = [1, 1]} : vector<6x144xf32> to vector<6x8xf32>
    %76 = vector.extract_strided_slice %43 {offsets = [0, 74], sizes = [6, 8], strides = [1, 1]} : vector<6x144xf32> to vector<6x8xf32>
    %77 = vector.extract_strided_slice %43 {offsets = [0, 86], sizes = [6, 8], strides = [1, 1]} : vector<6x144xf32> to vector<6x8xf32>
    %78 = vector.extract_strided_slice %43 {offsets = [0, 98], sizes = [6, 8], strides = [1, 1]} : vector<6x144xf32> to vector<6x8xf32>
    %79 = vector.extract_strided_slice %43 {offsets = [0, 110], sizes = [6, 8], strides = [1, 1]} : vector<6x144xf32> to vector<6x8xf32>
    %80 = vector.extract_strided_slice %43 {offsets = [0, 122], sizes = [6, 8], strides = [1, 1]} : vector<6x144xf32> to vector<6x8xf32>
    %81 = vector.extract_strided_slice %43 {offsets = [0, 134], sizes = [6, 8], strides = [1, 1]} : vector<6x144xf32> to vector<6x8xf32>
    %82 = tpu.concatenate %70, %71, %72, %73, %74, %75, %76, %77, %78, %79, %80, %81 in 1 : vector<6x8xf32>, vector<6x8xf32>, vector<6x8xf32>, vector<6x8xf32>, vector<6x8xf32>, vector<6x8xf32>, vector<6x8xf32>, vector<6x8xf32>, vector<6x8xf32>, vector<6x8xf32>, vector<6x8xf32>, vector<6x8xf32> -> vector<6x96xf32>
    %83 = vector.extract_strided_slice %43 {offsets = [0, 3], sizes = [6, 8], strides = [1, 1]} : vector<6x144xf32> to vector<6x8xf32>
    %84 = vector.extract_strided_slice %43 {offsets = [0, 15], sizes = [6, 8], strides = [1, 1]} : vector<6x144xf32> to vector<6x8xf32>
    %85 = vector.extract_strided_slice %43 {offsets = [0, 27], sizes = [6, 8], strides = [1, 1]} : vector<6x144xf32> to vector<6x8xf32>
    %86 = vector.extract_strided_slice %43 {offsets = [0, 39], sizes = [6, 8], strides = [1, 1]} : vector<6x144xf32> to vector<6x8xf32>
    %87 = vector.extract_strided_slice %43 {offsets = [0, 51], sizes = [6, 8], strides = [1, 1]} : vector<6x144xf32> to vector<6x8xf32>
    %88 = vector.extract_strided_slice %43 {offsets = [0, 63], sizes = [6, 8], strides = [1, 1]} : vector<6x144xf32> to vector<6x8xf32>
    %89 = vector.extract_strided_slice %43 {offsets = [0, 75], sizes = [6, 8], strides = [1, 1]} : vector<6x144xf32> to vector<6x8xf32>
    %90 = vector.extract_strided_slice %43 {offsets = [0, 87], sizes = [6, 8], strides = [1, 1]} : vector<6x144xf32> to vector<6x8xf32>
    %91 = vector.extract_strided_slice %43 {offsets = [0, 99], sizes = [6, 8], strides = [1, 1]} : vector<6x144xf32> to vector<6x8xf32>
    %92 = vector.extract_strided_slice %43 {offsets = [0, 111], sizes = [6, 8], strides = [1, 1]} : vector<6x144xf32> to vector<6x8xf32>
    %93 = vector.extract_strided_slice %43 {offsets = [0, 123], sizes = [6, 8], strides = [1, 1]} : vector<6x144xf32> to vector<6x8xf32>
    %94 = vector.extract_strided_slice %43 {offsets = [0, 135], sizes = [6, 8], strides = [1, 1]} : vector<6x144xf32> to vector<6x8xf32>
    %95 = tpu.concatenate %83, %84, %85, %86, %87, %88, %89, %90, %91, %92, %93, %94 in 1 : vector<6x8xf32>, vector<6x8xf32>, vector<6x8xf32>, vector<6x8xf32>, vector<6x8xf32>, vector<6x8xf32>, vector<6x8xf32>, vector<6x8xf32>, vector<6x8xf32>, vector<6x8xf32>, vector<6x8xf32>, vector<6x8xf32> -> vector<6x96xf32>
    %96 = vector.extract_strided_slice %43 {offsets = [0, 4], sizes = [6, 8], strides = [1, 1]} : vector<6x144xf32> to vector<6x8xf32>
    %97 = vector.extract_strided_slice %43 {offsets = [0, 16], sizes = [6, 8], strides = [1, 1]} : vector<6x144xf32> to vector<6x8xf32>
    %98 = vector.extract_strided_slice %43 {offsets = [0, 28], sizes = [6, 8], strides = [1, 1]} : vector<6x144xf32> to vector<6x8xf32>
    %99 = vector.extract_strided_slice %43 {offsets = [0, 40], sizes = [6, 8], strides = [1, 1]} : vector<6x144xf32> to vector<6x8xf32>
    %100 = vector.extract_strided_slice %43 {offsets = [0, 52], sizes = [6, 8], strides = [1, 1]} : vector<6x144xf32> to vector<6x8xf32>
    %101 = vector.extract_strided_slice %43 {offsets = [0, 64], sizes = [6, 8], strides = [1, 1]} : vector<6x144xf32> to vector<6x8xf32>
    %102 = vector.extract_strided_slice %43 {offsets = [0, 76], sizes = [6, 8], strides = [1, 1]} : vector<6x144xf32> to vector<6x8xf32>
    %103 = vector.extract_strided_slice %43 {offsets = [0, 88], sizes = [6, 8], strides = [1, 1]} : vector<6x144xf32> to vector<6x8xf32>
    %104 = vector.extract_strided_slice %43 {offsets = [0, 100], sizes = [6, 8], strides = [1, 1]} : vector<6x144xf32> to vector<6x8xf32>
    %105 = vector.extract_strided_slice %43 {offsets = [0, 112], sizes = [6, 8], strides = [1, 1]} : vector<6x144xf32> to vector<6x8xf32>
    %106 = vector.extract_strided_slice %43 {offsets = [0, 124], sizes = [6, 8], strides = [1, 1]} : vector<6x144xf32> to vector<6x8xf32>
    %107 = vector.extract_strided_slice %43 {offsets = [0, 136], sizes = [6, 8], strides = [1, 1]} : vector<6x144xf32> to vector<6x8xf32>
    %108 = tpu.concatenate %96, %97, %98, %99, %100, %101, %102, %103, %104, %105, %106, %107 in 1 : vector<6x8xf32>, vector<6x8xf32>, vector<6x8xf32>, vector<6x8xf32>, vector<6x8xf32>, vector<6x8xf32>, vector<6x8xf32>, vector<6x8xf32>, vector<6x8xf32>, vector<6x8xf32>, vector<6x8xf32>, vector<6x8xf32> -> vector<6x96xf32>
    %109 = vector.extract_strided_slice %56 {offsets = [0, 0], sizes = [6, 64], strides = [1, 1]} : vector<6x96xf32> to vector<6x64xf32>
    %110 = vector.extract_strided_slice %69 {offsets = [0, 0], sizes = [6, 64], strides = [1, 1]} : vector<6x96xf32> to vector<6x64xf32>
    %111 = vector.extract_strided_slice %82 {offsets = [0, 0], sizes = [6, 64], strides = [1, 1]} : vector<6x96xf32> to vector<6x64xf32>
    %112 = vector.extract_strided_slice %95 {offsets = [0, 0], sizes = [6, 64], strides = [1, 1]} : vector<6x96xf32> to vector<6x64xf32>
    %113 = vector.extract_strided_slice %108 {offsets = [0, 0], sizes = [6, 64], strides = [1, 1]} : vector<6x96xf32> to vector<6x64xf32>
    %114 = vector.extract_strided_slice %56 {offsets = [0, 8], sizes = [6, 64], strides = [1, 1]} : vector<6x96xf32> to vector<6x64xf32>
    %115 = vector.extract_strided_slice %69 {offsets = [0, 8], sizes = [6, 64], strides = [1, 1]} : vector<6x96xf32> to vector<6x64xf32>
    %116 = vector.extract_strided_slice %82 {offsets = [0, 8], sizes = [6, 64], strides = [1, 1]} : vector<6x96xf32> to vector<6x64xf32>
    %117 = vector.extract_strided_slice %95 {offsets = [0, 8], sizes = [6, 64], strides = [1, 1]} : vector<6x96xf32> to vector<6x64xf32>
    %118 = vector.extract_strided_slice %108 {offsets = [0, 8], sizes = [6, 64], strides = [1, 1]} : vector<6x96xf32> to vector<6x64xf32>
    %119 = vector.extract_strided_slice %56 {offsets = [0, 16], sizes = [6, 64], strides = [1, 1]} : vector<6x96xf32> to vector<6x64xf32>
    %120 = vector.extract_strided_slice %69 {offsets = [0, 16], sizes = [6, 64], strides = [1, 1]} : vector<6x96xf32> to vector<6x64xf32>
    %121 = vector.extract_strided_slice %82 {offsets = [0, 16], sizes = [6, 64], strides = [1, 1]} : vector<6x96xf32> to vector<6x64xf32>
    %122 = vector.extract_strided_slice %95 {offsets = [0, 16], sizes = [6, 64], strides = [1, 1]} : vector<6x96xf32> to vector<6x64xf32>
    %123 = vector.extract_strided_slice %108 {offsets = [0, 16], sizes = [6, 64], strides = [1, 1]} : vector<6x96xf32> to vector<6x64xf32>
    %124 = vector.extract_strided_slice %56 {offsets = [0, 24], sizes = [6, 64], strides = [1, 1]} : vector<6x96xf32> to vector<6x64xf32>
    %125 = vector.extract_strided_slice %69 {offsets = [0, 24], sizes = [6, 64], strides = [1, 1]} : vector<6x96xf32> to vector<6x64xf32>
    %126 = vector.extract_strided_slice %82 {offsets = [0, 24], sizes = [6, 64], strides = [1, 1]} : vector<6x96xf32> to vector<6x64xf32>
    %127 = vector.extract_strided_slice %95 {offsets = [0, 24], sizes = [6, 64], strides = [1, 1]} : vector<6x96xf32> to vector<6x64xf32>
    %128 = vector.extract_strided_slice %108 {offsets = [0, 24], sizes = [6, 64], strides = [1, 1]} : vector<6x96xf32> to vector<6x64xf32>
    %129 = vector.extract_strided_slice %56 {offsets = [0, 32], sizes = [6, 64], strides = [1, 1]} : vector<6x96xf32> to vector<6x64xf32>
    %130 = vector.extract_strided_slice %69 {offsets = [0, 32], sizes = [6, 64], strides = [1, 1]} : vector<6x96xf32> to vector<6x64xf32>
    %131 = vector.extract_strided_slice %82 {offsets = [0, 32], sizes = [6, 64], strides = [1, 1]} : vector<6x96xf32> to vector<6x64xf32>
    %132 = vector.extract_strided_slice %95 {offsets = [0, 32], sizes = [6, 64], strides = [1, 1]} : vector<6x96xf32> to vector<6x64xf32>
    %133 = vector.extract_strided_slice %108 {offsets = [0, 32], sizes = [6, 64], strides = [1, 1]} : vector<6x96xf32> to vector<6x64xf32>
    %134 = tpu.concatenate %109, %110, %111, %112, %113, %114, %115, %116, %117, %118, %119, %120, %121, %122, %123, %124 in 0 : vector<6x64xf32>, vector<6x64xf32>, vector<6x64xf32>, vector<6x64xf32>, vector<6x64xf32>, vector<6x64xf32>, vector<6x64xf32>, vector<6x64xf32>, vector<6x64xf32>, vector<6x64xf32>, vector<6x64xf32>, vector<6x64xf32>, vector<6x64xf32>, vector<6x64xf32>, vector<6x64xf32>, vector<6x64xf32> -> vector<96x64xf32>
    %135 = tpu.concatenate %125, %126, %127, %128, %129, %130, %131, %132, %133 in 0 : vector<6x64xf32>, vector<6x64xf32>, vector<6x64xf32>, vector<6x64xf32>, vector<6x64xf32>, vector<6x64xf32>, vector<6x64xf32>, vector<6x64xf32>, vector<6x64xf32> -> vector<54x64xf32>
    %136 = tpu.concatenate %134, %135 in 0 : vector<96x64xf32>, vector<54x64xf32> -> vector<150x64xf32>
    %137 = tpu.concatenate %136, %4 in 1 : vector<150x64xf32>, vector<150x64xf32> -> vector<150x128xf32>
    %138 = vector.extract_strided_slice %3 {offsets = [0, 640], sizes = [6, 576], strides = [1, 1]} : vector<6x2560xf32> to vector<6x576xf32>
    %c0_16 = arith.constant 0 : index
    %c0_17 = arith.constant 0 : index
    %139 = vector.load %arg3[%c0_16, %c0_17] : memref<6x3xf32, #tpu.memory_space<vmem>>, vector<6x1xf32>
    %140 = vector.broadcast %139 : vector<6x1xf32> to vector<6x576xf32>
    %141 = arith.addf %138, %140 : vector<6x576xf32>
    %cst_18 = arith.constant dense<0.000000e+00> : vector<6xf32>
    %142 = vector.multi_reduction <add>, %141, %cst_18 [1] : vector<6x576xf32> to vector<6xf32>
    %143 = vector.shape_cast %142 : vector<6xf32> to vector<6x1xf32>
    %cst_19 = arith.constant 0.00173611112 : f32
    %144 = vector.broadcast %cst_19 : f32 to vector<6x1xf32>
    %145 = arith.mulf %143, %144 : vector<6x1xf32>
    %146 = arith.mulf %141, %141 : vector<6x576xf32>
    %cst_20 = arith.constant dense<0.000000e+00> : vector<6xf32>
    %147 = vector.multi_reduction <add>, %146, %cst_20 [1] : vector<6x576xf32> to vector<6xf32>
    %148 = vector.shape_cast %147 : vector<6xf32> to vector<6x1xf32>
    %cst_21 = arith.constant 0.00173611112 : f32
    %149 = vector.broadcast %cst_21 : f32 to vector<6x1xf32>
    %150 = arith.mulf %148, %149 : vector<6x1xf32>
    %151 = arith.mulf %145, %145 : vector<6x1xf32>
    %152 = arith.subf %150, %151 : vector<6x1xf32>
    %cst_22 = arith.constant 0.000000e+00 : f32
    %153 = vector.broadcast %cst_22 : f32 to vector<6x1xf32>
    %154 = arith.maximumf %152, %153 : vector<6x1xf32>
    %155 = vector.broadcast %145 : vector<6x1xf32> to vector<6x576xf32>
    %156 = arith.subf %141, %155 : vector<6x576xf32>
    %cst_23 = arith.constant 9.99999974E-6 : f32
    %157 = vector.broadcast %cst_23 : f32 to vector<6x1xf32>
    %158 = arith.addf %154, %157 : vector<6x1xf32>
    %159 = math.rsqrt %158 : vector<6x1xf32>
    %160 = vector.broadcast %159 : vector<6x1xf32> to vector<6x576xf32>
    %161 = arith.mulf %156, %160 : vector<6x576xf32>
    %c0_24 = arith.constant 0 : index
    %c1_25 = arith.constant 1 : index
    %162 = vector.load %arg3[%c0_24, %c1_25] : memref<6x3xf32, #tpu.memory_space<vmem>>, vector<6x1xf32>
    %163 = vector.broadcast %162 : vector<6x1xf32> to vector<6x576xf32>
    %164 = arith.mulf %161, %163 : vector<6x576xf32>
    %c0_26 = arith.constant 0 : index
    %c2_27 = arith.constant 2 : index
    %165 = vector.load %arg3[%c0_26, %c2_27] : memref<6x3xf32, #tpu.memory_space<vmem>>, vector<6x1xf32>
    %166 = vector.broadcast %165 : vector<6x1xf32> to vector<6x576xf32>
    %167 = arith.addf %164, %166 : vector<6x576xf32>
    %cst_28 = arith.constant 0.000000e+00 : f32
    %168 = vector.broadcast %cst_28 : f32 to vector<6x576xf32>
    %169 = arith.maximumf %167, %168 : vector<6x576xf32>
    %170 = vector.extract_strided_slice %169 {offsets = [0, 0], sizes = [6, 144], strides = [1, 1]} : vector<6x576xf32> to vector<6x144xf32>
    %171 = vector.extract_strided_slice %169 {offsets = [0, 144], sizes = [6, 144], strides = [1, 1]} : vector<6x576xf32> to vector<6x144xf32>
    %172 = arith.maximumf %170, %171 : vector<6x144xf32>
    %173 = vector.extract_strided_slice %169 {offsets = [0, 288], sizes = [6, 144], strides = [1, 1]} : vector<6x576xf32> to vector<6x144xf32>
    %174 = vector.extract_strided_slice %169 {offsets = [0, 432], sizes = [6, 144], strides = [1, 1]} : vector<6x576xf32> to vector<6x144xf32>
    %175 = arith.maximumf %173, %174 : vector<6x144xf32>
    %176 = arith.maximumf %172, %175 : vector<6x144xf32>
    %177 = vector.extract_strided_slice %176 {offsets = [0, 0], sizes = [6, 8], strides = [1, 1]} : vector<6x144xf32> to vector<6x8xf32>
    %178 = vector.extract_strided_slice %176 {offsets = [0, 12], sizes = [6, 8], strides = [1, 1]} : vector<6x144xf32> to vector<6x8xf32>
    %179 = vector.extract_strided_slice %176 {offsets = [0, 24], sizes = [6, 8], strides = [1, 1]} : vector<6x144xf32> to vector<6x8xf32>
    %180 = vector.extract_strided_slice %176 {offsets = [0, 36], sizes = [6, 8], strides = [1, 1]} : vector<6x144xf32> to vector<6x8xf32>
    %181 = vector.extract_strided_slice %176 {offsets = [0, 48], sizes = [6, 8], strides = [1, 1]} : vector<6x144xf32> to vector<6x8xf32>
    %182 = vector.extract_strided_slice %176 {offsets = [0, 60], sizes = [6, 8], strides = [1, 1]} : vector<6x144xf32> to vector<6x8xf32>
    %183 = vector.extract_strided_slice %176 {offsets = [0, 72], sizes = [6, 8], strides = [1, 1]} : vector<6x144xf32> to vector<6x8xf32>
    %184 = vector.extract_strided_slice %176 {offsets = [0, 84], sizes = [6, 8], strides = [1, 1]} : vector<6x144xf32> to vector<6x8xf32>
    %185 = vector.extract_strided_slice %176 {offsets = [0, 96], sizes = [6, 8], strides = [1, 1]} : vector<6x144xf32> to vector<6x8xf32>
    %186 = vector.extract_strided_slice %176 {offsets = [0, 108], sizes = [6, 8], strides = [1, 1]} : vector<6x144xf32> to vector<6x8xf32>
    %187 = vector.extract_strided_slice %176 {offsets = [0, 120], sizes = [6, 8], strides = [1, 1]} : vector<6x144xf32> to vector<6x8xf32>
    %188 = vector.extract_strided_slice %176 {offsets = [0, 132], sizes = [6, 8], strides = [1, 1]} : vector<6x144xf32> to vector<6x8xf32>
    %189 = tpu.concatenate %177, %178, %179, %180, %181, %182, %183, %184, %185, %186, %187, %188 in 1 : vector<6x8xf32>, vector<6x8xf32>, vector<6x8xf32>, vector<6x8xf32>, vector<6x8xf32>, vector<6x8xf32>, vector<6x8xf32>, vector<6x8xf32>, vector<6x8xf32>, vector<6x8xf32>, vector<6x8xf32>, vector<6x8xf32> -> vector<6x96xf32>
    %190 = vector.extract_strided_slice %176 {offsets = [0, 1], sizes = [6, 8], strides = [1, 1]} : vector<6x144xf32> to vector<6x8xf32>
    %191 = vector.extract_strided_slice %176 {offsets = [0, 13], sizes = [6, 8], strides = [1, 1]} : vector<6x144xf32> to vector<6x8xf32>
    %192 = vector.extract_strided_slice %176 {offsets = [0, 25], sizes = [6, 8], strides = [1, 1]} : vector<6x144xf32> to vector<6x8xf32>
    %193 = vector.extract_strided_slice %176 {offsets = [0, 37], sizes = [6, 8], strides = [1, 1]} : vector<6x144xf32> to vector<6x8xf32>
    %194 = vector.extract_strided_slice %176 {offsets = [0, 49], sizes = [6, 8], strides = [1, 1]} : vector<6x144xf32> to vector<6x8xf32>
    %195 = vector.extract_strided_slice %176 {offsets = [0, 61], sizes = [6, 8], strides = [1, 1]} : vector<6x144xf32> to vector<6x8xf32>
    %196 = vector.extract_strided_slice %176 {offsets = [0, 73], sizes = [6, 8], strides = [1, 1]} : vector<6x144xf32> to vector<6x8xf32>
    %197 = vector.extract_strided_slice %176 {offsets = [0, 85], sizes = [6, 8], strides = [1, 1]} : vector<6x144xf32> to vector<6x8xf32>
    %198 = vector.extract_strided_slice %176 {offsets = [0, 97], sizes = [6, 8], strides = [1, 1]} : vector<6x144xf32> to vector<6x8xf32>
    %199 = vector.extract_strided_slice %176 {offsets = [0, 109], sizes = [6, 8], strides = [1, 1]} : vector<6x144xf32> to vector<6x8xf32>
    %200 = vector.extract_strided_slice %176 {offsets = [0, 121], sizes = [6, 8], strides = [1, 1]} : vector<6x144xf32> to vector<6x8xf32>
    %201 = vector.extract_strided_slice %176 {offsets = [0, 133], sizes = [6, 8], strides = [1, 1]} : vector<6x144xf32> to vector<6x8xf32>
    %202 = tpu.concatenate %190, %191, %192, %193, %194, %195, %196, %197, %198, %199, %200, %201 in 1 : vector<6x8xf32>, vector<6x8xf32>, vector<6x8xf32>, vector<6x8xf32>, vector<6x8xf32>, vector<6x8xf32>, vector<6x8xf32>, vector<6x8xf32>, vector<6x8xf32>, vector<6x8xf32>, vector<6x8xf32>, vector<6x8xf32> -> vector<6x96xf32>
    %203 = vector.extract_strided_slice %176 {offsets = [0, 2], sizes = [6, 8], strides = [1, 1]} : vector<6x144xf32> to vector<6x8xf32>
    %204 = vector.extract_strided_slice %176 {offsets = [0, 14], sizes = [6, 8], strides = [1, 1]} : vector<6x144xf32> to vector<6x8xf32>
    %205 = vector.extract_strided_slice %176 {offsets = [0, 26], sizes = [6, 8], strides = [1, 1]} : vector<6x144xf32> to vector<6x8xf32>
    %206 = vector.extract_strided_slice %176 {offsets = [0, 38], sizes = [6, 8], strides = [1, 1]} : vector<6x144xf32> to vector<6x8xf32>
    %207 = vector.extract_strided_slice %176 {offsets = [0, 50], sizes = [6, 8], strides = [1, 1]} : vector<6x144xf32> to vector<6x8xf32>
    %208 = vector.extract_strided_slice %176 {offsets = [0, 62], sizes = [6, 8], strides = [1, 1]} : vector<6x144xf32> to vector<6x8xf32>
    %209 = vector.extract_strided_slice %176 {offsets = [0, 74], sizes = [6, 8], strides = [1, 1]} : vector<6x144xf32> to vector<6x8xf32>
    %210 = vector.extract_strided_slice %176 {offsets = [0, 86], sizes = [6, 8], strides = [1, 1]} : vector<6x144xf32> to vector<6x8xf32>
    %211 = vector.extract_strided_slice %176 {offsets = [0, 98], sizes = [6, 8], strides = [1, 1]} : vector<6x144xf32> to vector<6x8xf32>
    %212 = vector.extract_strided_slice %176 {offsets = [0, 110], sizes = [6, 8], strides = [1, 1]} : vector<6x144xf32> to vector<6x8xf32>
    %213 = vector.extract_strided_slice %176 {offsets = [0, 122], sizes = [6, 8], strides = [1, 1]} : vector<6x144xf32> to vector<6x8xf32>
    %214 = vector.extract_strided_slice %176 {offsets = [0, 134], sizes = [6, 8], strides = [1, 1]} : vector<6x144xf32> to vector<6x8xf32>
    %215 = tpu.concatenate %203, %204, %205, %206, %207, %208, %209, %210, %211, %212, %213, %214 in 1 : vector<6x8xf32>, vector<6x8xf32>, vector<6x8xf32>, vector<6x8xf32>, vector<6x8xf32>, vector<6x8xf32>, vector<6x8xf32>, vector<6x8xf32>, vector<6x8xf32>, vector<6x8xf32>, vector<6x8xf32>, vector<6x8xf32> -> vector<6x96xf32>
    %216 = vector.extract_strided_slice %176 {offsets = [0, 3], sizes = [6, 8], strides = [1, 1]} : vector<6x144xf32> to vector<6x8xf32>
    %217 = vector.extract_strided_slice %176 {offsets = [0, 15], sizes = [6, 8], strides = [1, 1]} : vector<6x144xf32> to vector<6x8xf32>
    %218 = vector.extract_strided_slice %176 {offsets = [0, 27], sizes = [6, 8], strides = [1, 1]} : vector<6x144xf32> to vector<6x8xf32>
    %219 = vector.extract_strided_slice %176 {offsets = [0, 39], sizes = [6, 8], strides = [1, 1]} : vector<6x144xf32> to vector<6x8xf32>
    %220 = vector.extract_strided_slice %176 {offsets = [0, 51], sizes = [6, 8], strides = [1, 1]} : vector<6x144xf32> to vector<6x8xf32>
    %221 = vector.extract_strided_slice %176 {offsets = [0, 63], sizes = [6, 8], strides = [1, 1]} : vector<6x144xf32> to vector<6x8xf32>
    %222 = vector.extract_strided_slice %176 {offsets = [0, 75], sizes = [6, 8], strides = [1, 1]} : vector<6x144xf32> to vector<6x8xf32>
    %223 = vector.extract_strided_slice %176 {offsets = [0, 87], sizes = [6, 8], strides = [1, 1]} : vector<6x144xf32> to vector<6x8xf32>
    %224 = vector.extract_strided_slice %176 {offsets = [0, 99], sizes = [6, 8], strides = [1, 1]} : vector<6x144xf32> to vector<6x8xf32>
    %225 = vector.extract_strided_slice %176 {offsets = [0, 111], sizes = [6, 8], strides = [1, 1]} : vector<6x144xf32> to vector<6x8xf32>
    %226 = vector.extract_strided_slice %176 {offsets = [0, 123], sizes = [6, 8], strides = [1, 1]} : vector<6x144xf32> to vector<6x8xf32>
    %227 = vector.extract_strided_slice %176 {offsets = [0, 135], sizes = [6, 8], strides = [1, 1]} : vector<6x144xf32> to vector<6x8xf32>
    %228 = tpu.concatenate %216, %217, %218, %219, %220, %221, %222, %223, %224, %225, %226, %227 in 1 : vector<6x8xf32>, vector<6x8xf32>, vector<6x8xf32>, vector<6x8xf32>, vector<6x8xf32>, vector<6x8xf32>, vector<6x8xf32>, vector<6x8xf32>, vector<6x8xf32>, vector<6x8xf32>, vector<6x8xf32>, vector<6x8xf32> -> vector<6x96xf32>
    %229 = vector.extract_strided_slice %176 {offsets = [0, 4], sizes = [6, 8], strides = [1, 1]} : vector<6x144xf32> to vector<6x8xf32>
    %230 = vector.extract_strided_slice %176 {offsets = [0, 16], sizes = [6, 8], strides = [1, 1]} : vector<6x144xf32> to vector<6x8xf32>
    %231 = vector.extract_strided_slice %176 {offsets = [0, 28], sizes = [6, 8], strides = [1, 1]} : vector<6x144xf32> to vector<6x8xf32>
    %232 = vector.extract_strided_slice %176 {offsets = [0, 40], sizes = [6, 8], strides = [1, 1]} : vector<6x144xf32> to vector<6x8xf32>
    %233 = vector.extract_strided_slice %176 {offsets = [0, 52], sizes = [6, 8], strides = [1, 1]} : vector<6x144xf32> to vector<6x8xf32>
    %234 = vector.extract_strided_slice %176 {offsets = [0, 64], sizes = [6, 8], strides = [1, 1]} : vector<6x144xf32> to vector<6x8xf32>
    %235 = vector.extract_strided_slice %176 {offsets = [0, 76], sizes = [6, 8], strides = [1, 1]} : vector<6x144xf32> to vector<6x8xf32>
    %236 = vector.extract_strided_slice %176 {offsets = [0, 88], sizes = [6, 8], strides = [1, 1]} : vector<6x144xf32> to vector<6x8xf32>
    %237 = vector.extract_strided_slice %176 {offsets = [0, 100], sizes = [6, 8], strides = [1, 1]} : vector<6x144xf32> to vector<6x8xf32>
    %238 = vector.extract_strided_slice %176 {offsets = [0, 112], sizes = [6, 8], strides = [1, 1]} : vector<6x144xf32> to vector<6x8xf32>
    %239 = vector.extract_strided_slice %176 {offsets = [0, 124], sizes = [6, 8], strides = [1, 1]} : vector<6x144xf32> to vector<6x8xf32>
    %240 = vector.extract_strided_slice %176 {offsets = [0, 136], sizes = [6, 8], strides = [1, 1]} : vector<6x144xf32> to vector<6x8xf32>
    %241 = tpu.concatenate %229, %230, %231, %232, %233, %234, %235, %236, %237, %238, %239, %240 in 1 : vector<6x8xf32>, vector<6x8xf32>, vector<6x8xf32>, vector<6x8xf32>, vector<6x8xf32>, vector<6x8xf32>, vector<6x8xf32>, vector<6x8xf32>, vector<6x8xf32>, vector<6x8xf32>, vector<6x8xf32>, vector<6x8xf32> -> vector<6x96xf32>
    %242 = vector.extract_strided_slice %189 {offsets = [0, 0], sizes = [6, 64], strides = [1, 1]} : vector<6x96xf32> to vector<6x64xf32>
    %243 = vector.extract_strided_slice %202 {offsets = [0, 0], sizes = [6, 64], strides = [1, 1]} : vector<6x96xf32> to vector<6x64xf32>
    %244 = vector.extract_strided_slice %215 {offsets = [0, 0], sizes = [6, 64], strides = [1, 1]} : vector<6x96xf32> to vector<6x64xf32>
    %245 = vector.extract_strided_slice %228 {offsets = [0, 0], sizes = [6, 64], strides = [1, 1]} : vector<6x96xf32> to vector<6x64xf32>
    %246 = vector.extract_strided_slice %241 {offsets = [0, 0], sizes = [6, 64], strides = [1, 1]} : vector<6x96xf32> to vector<6x64xf32>
    %247 = vector.extract_strided_slice %189 {offsets = [0, 8], sizes = [6, 64], strides = [1, 1]} : vector<6x96xf32> to vector<6x64xf32>
    %248 = vector.extract_strided_slice %202 {offsets = [0, 8], sizes = [6, 64], strides = [1, 1]} : vector<6x96xf32> to vector<6x64xf32>
    %249 = vector.extract_strided_slice %215 {offsets = [0, 8], sizes = [6, 64], strides = [1, 1]} : vector<6x96xf32> to vector<6x64xf32>
    %250 = vector.extract_strided_slice %228 {offsets = [0, 8], sizes = [6, 64], strides = [1, 1]} : vector<6x96xf32> to vector<6x64xf32>
    %251 = vector.extract_strided_slice %241 {offsets = [0, 8], sizes = [6, 64], strides = [1, 1]} : vector<6x96xf32> to vector<6x64xf32>
    %252 = vector.extract_strided_slice %189 {offsets = [0, 16], sizes = [6, 64], strides = [1, 1]} : vector<6x96xf32> to vector<6x64xf32>
    %253 = vector.extract_strided_slice %202 {offsets = [0, 16], sizes = [6, 64], strides = [1, 1]} : vector<6x96xf32> to vector<6x64xf32>
    %254 = vector.extract_strided_slice %215 {offsets = [0, 16], sizes = [6, 64], strides = [1, 1]} : vector<6x96xf32> to vector<6x64xf32>
    %255 = vector.extract_strided_slice %228 {offsets = [0, 16], sizes = [6, 64], strides = [1, 1]} : vector<6x96xf32> to vector<6x64xf32>
    %256 = vector.extract_strided_slice %241 {offsets = [0, 16], sizes = [6, 64], strides = [1, 1]} : vector<6x96xf32> to vector<6x64xf32>
    %257 = vector.extract_strided_slice %189 {offsets = [0, 24], sizes = [6, 64], strides = [1, 1]} : vector<6x96xf32> to vector<6x64xf32>
    %258 = vector.extract_strided_slice %202 {offsets = [0, 24], sizes = [6, 64], strides = [1, 1]} : vector<6x96xf32> to vector<6x64xf32>
    %259 = vector.extract_strided_slice %215 {offsets = [0, 24], sizes = [6, 64], strides = [1, 1]} : vector<6x96xf32> to vector<6x64xf32>
    %260 = vector.extract_strided_slice %228 {offsets = [0, 24], sizes = [6, 64], strides = [1, 1]} : vector<6x96xf32> to vector<6x64xf32>
    %261 = vector.extract_strided_slice %241 {offsets = [0, 24], sizes = [6, 64], strides = [1, 1]} : vector<6x96xf32> to vector<6x64xf32>
    %262 = vector.extract_strided_slice %189 {offsets = [0, 32], sizes = [6, 64], strides = [1, 1]} : vector<6x96xf32> to vector<6x64xf32>
    %263 = vector.extract_strided_slice %202 {offsets = [0, 32], sizes = [6, 64], strides = [1, 1]} : vector<6x96xf32> to vector<6x64xf32>
    %264 = vector.extract_strided_slice %215 {offsets = [0, 32], sizes = [6, 64], strides = [1, 1]} : vector<6x96xf32> to vector<6x64xf32>
    %265 = vector.extract_strided_slice %228 {offsets = [0, 32], sizes = [6, 64], strides = [1, 1]} : vector<6x96xf32> to vector<6x64xf32>
    %266 = vector.extract_strided_slice %241 {offsets = [0, 32], sizes = [6, 64], strides = [1, 1]} : vector<6x96xf32> to vector<6x64xf32>
    %267 = tpu.concatenate %242, %243, %244, %245, %246, %247, %248, %249, %250, %251, %252, %253, %254, %255, %256, %257 in 0 : vector<6x64xf32>, vector<6x64xf32>, vector<6x64xf32>, vector<6x64xf32>, vector<6x64xf32>, vector<6x64xf32>, vector<6x64xf32>, vector<6x64xf32>, vector<6x64xf32>, vector<6x64xf32>, vector<6x64xf32>, vector<6x64xf32>, vector<6x64xf32>, vector<6x64xf32>, vector<6x64xf32>, vector<6x64xf32> -> vector<96x64xf32>
    %268 = tpu.concatenate %258, %259, %260, %261, %262, %263, %264, %265, %266 in 0 : vector<6x64xf32>, vector<6x64xf32>, vector<6x64xf32>, vector<6x64xf32>, vector<6x64xf32>, vector<6x64xf32>, vector<6x64xf32>, vector<6x64xf32>, vector<6x64xf32> -> vector<54x64xf32>
    %269 = tpu.concatenate %267, %268 in 0 : vector<96x64xf32>, vector<54x64xf32> -> vector<150x64xf32>
    %270 = tpu.concatenate %269, %4 in 1 : vector<150x64xf32>, vector<150x64xf32> -> vector<150x128xf32>
    %271 = vector.extract_strided_slice %3 {offsets = [0, 1280], sizes = [6, 576], strides = [1, 1]} : vector<6x2560xf32> to vector<6x576xf32>
    %c0_29 = arith.constant 0 : index
    %c0_30 = arith.constant 0 : index
    %272 = vector.load %arg3[%c0_29, %c0_30] : memref<6x3xf32, #tpu.memory_space<vmem>>, vector<6x1xf32>
    %273 = vector.broadcast %272 : vector<6x1xf32> to vector<6x576xf32>
    %274 = arith.addf %271, %273 : vector<6x576xf32>
    %cst_31 = arith.constant dense<0.000000e+00> : vector<6xf32>
    %275 = vector.multi_reduction <add>, %274, %cst_31 [1] : vector<6x576xf32> to vector<6xf32>
    %276 = vector.shape_cast %275 : vector<6xf32> to vector<6x1xf32>
    %cst_32 = arith.constant 0.00173611112 : f32
    %277 = vector.broadcast %cst_32 : f32 to vector<6x1xf32>
    %278 = arith.mulf %276, %277 : vector<6x1xf32>
    %279 = arith.mulf %274, %274 : vector<6x576xf32>
    %cst_33 = arith.constant dense<0.000000e+00> : vector<6xf32>
    %280 = vector.multi_reduction <add>, %279, %cst_33 [1] : vector<6x576xf32> to vector<6xf32>
    %281 = vector.shape_cast %280 : vector<6xf32> to vector<6x1xf32>
    %cst_34 = arith.constant 0.00173611112 : f32
    %282 = vector.broadcast %cst_34 : f32 to vector<6x1xf32>
    %283 = arith.mulf %281, %282 : vector<6x1xf32>
    %284 = arith.mulf %278, %278 : vector<6x1xf32>
    %285 = arith.subf %283, %284 : vector<6x1xf32>
    %cst_35 = arith.constant 0.000000e+00 : f32
    %286 = vector.broadcast %cst_35 : f32 to vector<6x1xf32>
    %287 = arith.maximumf %285, %286 : vector<6x1xf32>
    %288 = vector.broadcast %278 : vector<6x1xf32> to vector<6x576xf32>
    %289 = arith.subf %274, %288 : vector<6x576xf32>
    %cst_36 = arith.constant 9.99999974E-6 : f32
    %290 = vector.broadcast %cst_36 : f32 to vector<6x1xf32>
    %291 = arith.addf %287, %290 : vector<6x1xf32>
    %292 = math.rsqrt %291 : vector<6x1xf32>
    %293 = vector.broadcast %292 : vector<6x1xf32> to vector<6x576xf32>
    %294 = arith.mulf %289, %293 : vector<6x576xf32>
    %c0_37 = arith.constant 0 : index
    %c1_38 = arith.constant 1 : index
    %295 = vector.load %arg3[%c0_37, %c1_38] : memref<6x3xf32, #tpu.memory_space<vmem>>, vector<6x1xf32>
    %296 = vector.broadcast %295 : vector<6x1xf32> to vector<6x576xf32>
    %297 = arith.mulf %294, %296 : vector<6x576xf32>
    %c0_39 = arith.constant 0 : index
    %c2_40 = arith.constant 2 : index
    %298 = vector.load %arg3[%c0_39, %c2_40] : memref<6x3xf32, #tpu.memory_space<vmem>>, vector<6x1xf32>
    %299 = vector.broadcast %298 : vector<6x1xf32> to vector<6x576xf32>
    %300 = arith.addf %297, %299 : vector<6x576xf32>
    %cst_41 = arith.constant 0.000000e+00 : f32
    %301 = vector.broadcast %cst_41 : f32 to vector<6x576xf32>
    %302 = arith.maximumf %300, %301 : vector<6x576xf32>
    %303 = vector.extract_strided_slice %302 {offsets = [0, 0], sizes = [6, 144], strides = [1, 1]} : vector<6x576xf32> to vector<6x144xf32>
    %304 = vector.extract_strided_slice %302 {offsets = [0, 144], sizes = [6, 144], strides = [1, 1]} : vector<6x576xf32> to vector<6x144xf32>
    %305 = arith.maximumf %303, %304 : vector<6x144xf32>
    %306 = vector.extract_strided_slice %302 {offsets = [0, 288], sizes = [6, 144], strides = [1, 1]} : vector<6x576xf32> to vector<6x144xf32>
    %307 = vector.extract_strided_slice %302 {offsets = [0, 432], sizes = [6, 144], strides = [1, 1]} : vector<6x576xf32> to vector<6x144xf32>
    %308 = arith.maximumf %306, %307 : vector<6x144xf32>
    %309 = arith.maximumf %305, %308 : vector<6x144xf32>
    %310 = vector.extract_strided_slice %309 {offsets = [0, 0], sizes = [6, 8], strides = [1, 1]} : vector<6x144xf32> to vector<6x8xf32>
    %311 = vector.extract_strided_slice %309 {offsets = [0, 12], sizes = [6, 8], strides = [1, 1]} : vector<6x144xf32> to vector<6x8xf32>
    %312 = vector.extract_strided_slice %309 {offsets = [0, 24], sizes = [6, 8], strides = [1, 1]} : vector<6x144xf32> to vector<6x8xf32>
    %313 = vector.extract_strided_slice %309 {offsets = [0, 36], sizes = [6, 8], strides = [1, 1]} : vector<6x144xf32> to vector<6x8xf32>
    %314 = vector.extract_strided_slice %309 {offsets = [0, 48], sizes = [6, 8], strides = [1, 1]} : vector<6x144xf32> to vector<6x8xf32>
    %315 = vector.extract_strided_slice %309 {offsets = [0, 60], sizes = [6, 8], strides = [1, 1]} : vector<6x144xf32> to vector<6x8xf32>
    %316 = vector.extract_strided_slice %309 {offsets = [0, 72], sizes = [6, 8], strides = [1, 1]} : vector<6x144xf32> to vector<6x8xf32>
    %317 = vector.extract_strided_slice %309 {offsets = [0, 84], sizes = [6, 8], strides = [1, 1]} : vector<6x144xf32> to vector<6x8xf32>
    %318 = vector.extract_strided_slice %309 {offsets = [0, 96], sizes = [6, 8], strides = [1, 1]} : vector<6x144xf32> to vector<6x8xf32>
    %319 = vector.extract_strided_slice %309 {offsets = [0, 108], sizes = [6, 8], strides = [1, 1]} : vector<6x144xf32> to vector<6x8xf32>
    %320 = vector.extract_strided_slice %309 {offsets = [0, 120], sizes = [6, 8], strides = [1, 1]} : vector<6x144xf32> to vector<6x8xf32>
    %321 = vector.extract_strided_slice %309 {offsets = [0, 132], sizes = [6, 8], strides = [1, 1]} : vector<6x144xf32> to vector<6x8xf32>
    %322 = tpu.concatenate %310, %311, %312, %313, %314, %315, %316, %317, %318, %319, %320, %321 in 1 : vector<6x8xf32>, vector<6x8xf32>, vector<6x8xf32>, vector<6x8xf32>, vector<6x8xf32>, vector<6x8xf32>, vector<6x8xf32>, vector<6x8xf32>, vector<6x8xf32>, vector<6x8xf32>, vector<6x8xf32>, vector<6x8xf32> -> vector<6x96xf32>
    %323 = vector.extract_strided_slice %309 {offsets = [0, 1], sizes = [6, 8], strides = [1, 1]} : vector<6x144xf32> to vector<6x8xf32>
    %324 = vector.extract_strided_slice %309 {offsets = [0, 13], sizes = [6, 8], strides = [1, 1]} : vector<6x144xf32> to vector<6x8xf32>
    %325 = vector.extract_strided_slice %309 {offsets = [0, 25], sizes = [6, 8], strides = [1, 1]} : vector<6x144xf32> to vector<6x8xf32>
    %326 = vector.extract_strided_slice %309 {offsets = [0, 37], sizes = [6, 8], strides = [1, 1]} : vector<6x144xf32> to vector<6x8xf32>
    %327 = vector.extract_strided_slice %309 {offsets = [0, 49], sizes = [6, 8], strides = [1, 1]} : vector<6x144xf32> to vector<6x8xf32>
    %328 = vector.extract_strided_slice %309 {offsets = [0, 61], sizes = [6, 8], strides = [1, 1]} : vector<6x144xf32> to vector<6x8xf32>
    %329 = vector.extract_strided_slice %309 {offsets = [0, 73], sizes = [6, 8], strides = [1, 1]} : vector<6x144xf32> to vector<6x8xf32>
    %330 = vector.extract_strided_slice %309 {offsets = [0, 85], sizes = [6, 8], strides = [1, 1]} : vector<6x144xf32> to vector<6x8xf32>
    %331 = vector.extract_strided_slice %309 {offsets = [0, 97], sizes = [6, 8], strides = [1, 1]} : vector<6x144xf32> to vector<6x8xf32>
    %332 = vector.extract_strided_slice %309 {offsets = [0, 109], sizes = [6, 8], strides = [1, 1]} : vector<6x144xf32> to vector<6x8xf32>
    %333 = vector.extract_strided_slice %309 {offsets = [0, 121], sizes = [6, 8], strides = [1, 1]} : vector<6x144xf32> to vector<6x8xf32>
    %334 = vector.extract_strided_slice %309 {offsets = [0, 133], sizes = [6, 8], strides = [1, 1]} : vector<6x144xf32> to vector<6x8xf32>
    %335 = tpu.concatenate %323, %324, %325, %326, %327, %328, %329, %330, %331, %332, %333, %334 in 1 : vector<6x8xf32>, vector<6x8xf32>, vector<6x8xf32>, vector<6x8xf32>, vector<6x8xf32>, vector<6x8xf32>, vector<6x8xf32>, vector<6x8xf32>, vector<6x8xf32>, vector<6x8xf32>, vector<6x8xf32>, vector<6x8xf32> -> vector<6x96xf32>
    %336 = vector.extract_strided_slice %309 {offsets = [0, 2], sizes = [6, 8], strides = [1, 1]} : vector<6x144xf32> to vector<6x8xf32>
    %337 = vector.extract_strided_slice %309 {offsets = [0, 14], sizes = [6, 8], strides = [1, 1]} : vector<6x144xf32> to vector<6x8xf32>
    %338 = vector.extract_strided_slice %309 {offsets = [0, 26], sizes = [6, 8], strides = [1, 1]} : vector<6x144xf32> to vector<6x8xf32>
    %339 = vector.extract_strided_slice %309 {offsets = [0, 38], sizes = [6, 8], strides = [1, 1]} : vector<6x144xf32> to vector<6x8xf32>
    %340 = vector.extract_strided_slice %309 {offsets = [0, 50], sizes = [6, 8], strides = [1, 1]} : vector<6x144xf32> to vector<6x8xf32>
    %341 = vector.extract_strided_slice %309 {offsets = [0, 62], sizes = [6, 8], strides = [1, 1]} : vector<6x144xf32> to vector<6x8xf32>
    %342 = vector.extract_strided_slice %309 {offsets = [0, 74], sizes = [6, 8], strides = [1, 1]} : vector<6x144xf32> to vector<6x8xf32>
    %343 = vector.extract_strided_slice %309 {offsets = [0, 86], sizes = [6, 8], strides = [1, 1]} : vector<6x144xf32> to vector<6x8xf32>
    %344 = vector.extract_strided_slice %309 {offsets = [0, 98], sizes = [6, 8], strides = [1, 1]} : vector<6x144xf32> to vector<6x8xf32>
    %345 = vector.extract_strided_slice %309 {offsets = [0, 110], sizes = [6, 8], strides = [1, 1]} : vector<6x144xf32> to vector<6x8xf32>
    %346 = vector.extract_strided_slice %309 {offsets = [0, 122], sizes = [6, 8], strides = [1, 1]} : vector<6x144xf32> to vector<6x8xf32>
    %347 = vector.extract_strided_slice %309 {offsets = [0, 134], sizes = [6, 8], strides = [1, 1]} : vector<6x144xf32> to vector<6x8xf32>
    %348 = tpu.concatenate %336, %337, %338, %339, %340, %341, %342, %343, %344, %345, %346, %347 in 1 : vector<6x8xf32>, vector<6x8xf32>, vector<6x8xf32>, vector<6x8xf32>, vector<6x8xf32>, vector<6x8xf32>, vector<6x8xf32>, vector<6x8xf32>, vector<6x8xf32>, vector<6x8xf32>, vector<6x8xf32>, vector<6x8xf32> -> vector<6x96xf32>
    %349 = vector.extract_strided_slice %309 {offsets = [0, 3], sizes = [6, 8], strides = [1, 1]} : vector<6x144xf32> to vector<6x8xf32>
    %350 = vector.extract_strided_slice %309 {offsets = [0, 15], sizes = [6, 8], strides = [1, 1]} : vector<6x144xf32> to vector<6x8xf32>
    %351 = vector.extract_strided_slice %309 {offsets = [0, 27], sizes = [6, 8], strides = [1, 1]} : vector<6x144xf32> to vector<6x8xf32>
    %352 = vector.extract_strided_slice %309 {offsets = [0, 39], sizes = [6, 8], strides = [1, 1]} : vector<6x144xf32> to vector<6x8xf32>
    %353 = vector.extract_strided_slice %309 {offsets = [0, 51], sizes = [6, 8], strides = [1, 1]} : vector<6x144xf32> to vector<6x8xf32>
    %354 = vector.extract_strided_slice %309 {offsets = [0, 63], sizes = [6, 8], strides = [1, 1]} : vector<6x144xf32> to vector<6x8xf32>
    %355 = vector.extract_strided_slice %309 {offsets = [0, 75], sizes = [6, 8], strides = [1, 1]} : vector<6x144xf32> to vector<6x8xf32>
    %356 = vector.extract_strided_slice %309 {offsets = [0, 87], sizes = [6, 8], strides = [1, 1]} : vector<6x144xf32> to vector<6x8xf32>
    %357 = vector.extract_strided_slice %309 {offsets = [0, 99], sizes = [6, 8], strides = [1, 1]} : vector<6x144xf32> to vector<6x8xf32>
    %358 = vector.extract_strided_slice %309 {offsets = [0, 111], sizes = [6, 8], strides = [1, 1]} : vector<6x144xf32> to vector<6x8xf32>
    %359 = vector.extract_strided_slice %309 {offsets = [0, 123], sizes = [6, 8], strides = [1, 1]} : vector<6x144xf32> to vector<6x8xf32>
    %360 = vector.extract_strided_slice %309 {offsets = [0, 135], sizes = [6, 8], strides = [1, 1]} : vector<6x144xf32> to vector<6x8xf32>
    %361 = tpu.concatenate %349, %350, %351, %352, %353, %354, %355, %356, %357, %358, %359, %360 in 1 : vector<6x8xf32>, vector<6x8xf32>, vector<6x8xf32>, vector<6x8xf32>, vector<6x8xf32>, vector<6x8xf32>, vector<6x8xf32>, vector<6x8xf32>, vector<6x8xf32>, vector<6x8xf32>, vector<6x8xf32>, vector<6x8xf32> -> vector<6x96xf32>
    %362 = vector.extract_strided_slice %309 {offsets = [0, 4], sizes = [6, 8], strides = [1, 1]} : vector<6x144xf32> to vector<6x8xf32>
    %363 = vector.extract_strided_slice %309 {offsets = [0, 16], sizes = [6, 8], strides = [1, 1]} : vector<6x144xf32> to vector<6x8xf32>
    %364 = vector.extract_strided_slice %309 {offsets = [0, 28], sizes = [6, 8], strides = [1, 1]} : vector<6x144xf32> to vector<6x8xf32>
    %365 = vector.extract_strided_slice %309 {offsets = [0, 40], sizes = [6, 8], strides = [1, 1]} : vector<6x144xf32> to vector<6x8xf32>
    %366 = vector.extract_strided_slice %309 {offsets = [0, 52], sizes = [6, 8], strides = [1, 1]} : vector<6x144xf32> to vector<6x8xf32>
    %367 = vector.extract_strided_slice %309 {offsets = [0, 64], sizes = [6, 8], strides = [1, 1]} : vector<6x144xf32> to vector<6x8xf32>
    %368 = vector.extract_strided_slice %309 {offsets = [0, 76], sizes = [6, 8], strides = [1, 1]} : vector<6x144xf32> to vector<6x8xf32>
    %369 = vector.extract_strided_slice %309 {offsets = [0, 88], sizes = [6, 8], strides = [1, 1]} : vector<6x144xf32> to vector<6x8xf32>
    %370 = vector.extract_strided_slice %309 {offsets = [0, 100], sizes = [6, 8], strides = [1, 1]} : vector<6x144xf32> to vector<6x8xf32>
    %371 = vector.extract_strided_slice %309 {offsets = [0, 112], sizes = [6, 8], strides = [1, 1]} : vector<6x144xf32> to vector<6x8xf32>
    %372 = vector.extract_strided_slice %309 {offsets = [0, 124], sizes = [6, 8], strides = [1, 1]} : vector<6x144xf32> to vector<6x8xf32>
    %373 = vector.extract_strided_slice %309 {offsets = [0, 136], sizes = [6, 8], strides = [1, 1]} : vector<6x144xf32> to vector<6x8xf32>
    %374 = tpu.concatenate %362, %363, %364, %365, %366, %367, %368, %369, %370, %371, %372, %373 in 1 : vector<6x8xf32>, vector<6x8xf32>, vector<6x8xf32>, vector<6x8xf32>, vector<6x8xf32>, vector<6x8xf32>, vector<6x8xf32>, vector<6x8xf32>, vector<6x8xf32>, vector<6x8xf32>, vector<6x8xf32>, vector<6x8xf32> -> vector<6x96xf32>
    %375 = vector.extract_strided_slice %322 {offsets = [0, 0], sizes = [6, 64], strides = [1, 1]} : vector<6x96xf32> to vector<6x64xf32>
    %376 = vector.extract_strided_slice %335 {offsets = [0, 0], sizes = [6, 64], strides = [1, 1]} : vector<6x96xf32> to vector<6x64xf32>
    %377 = vector.extract_strided_slice %348 {offsets = [0, 0], sizes = [6, 64], strides = [1, 1]} : vector<6x96xf32> to vector<6x64xf32>
    %378 = vector.extract_strided_slice %361 {offsets = [0, 0], sizes = [6, 64], strides = [1, 1]} : vector<6x96xf32> to vector<6x64xf32>
    %379 = vector.extract_strided_slice %374 {offsets = [0, 0], sizes = [6, 64], strides = [1, 1]} : vector<6x96xf32> to vector<6x64xf32>
    %380 = vector.extract_strided_slice %322 {offsets = [0, 8], sizes = [6, 64], strides = [1, 1]} : vector<6x96xf32> to vector<6x64xf32>
    %381 = vector.extract_strided_slice %335 {offsets = [0, 8], sizes = [6, 64], strides = [1, 1]} : vector<6x96xf32> to vector<6x64xf32>
    %382 = vector.extract_strided_slice %348 {offsets = [0, 8], sizes = [6, 64], strides = [1, 1]} : vector<6x96xf32> to vector<6x64xf32>
    %383 = vector.extract_strided_slice %361 {offsets = [0, 8], sizes = [6, 64], strides = [1, 1]} : vector<6x96xf32> to vector<6x64xf32>
    %384 = vector.extract_strided_slice %374 {offsets = [0, 8], sizes = [6, 64], strides = [1, 1]} : vector<6x96xf32> to vector<6x64xf32>
    %385 = vector.extract_strided_slice %322 {offsets = [0, 16], sizes = [6, 64], strides = [1, 1]} : vector<6x96xf32> to vector<6x64xf32>
    %386 = vector.extract_strided_slice %335 {offsets = [0, 16], sizes = [6, 64], strides = [1, 1]} : vector<6x96xf32> to vector<6x64xf32>
    %387 = vector.extract_strided_slice %348 {offsets = [0, 16], sizes = [6, 64], strides = [1, 1]} : vector<6x96xf32> to vector<6x64xf32>
    %388 = vector.extract_strided_slice %361 {offsets = [0, 16], sizes = [6, 64], strides = [1, 1]} : vector<6x96xf32> to vector<6x64xf32>
    %389 = vector.extract_strided_slice %374 {offsets = [0, 16], sizes = [6, 64], strides = [1, 1]} : vector<6x96xf32> to vector<6x64xf32>
    %390 = vector.extract_strided_slice %322 {offsets = [0, 24], sizes = [6, 64], strides = [1, 1]} : vector<6x96xf32> to vector<6x64xf32>
    %391 = vector.extract_strided_slice %335 {offsets = [0, 24], sizes = [6, 64], strides = [1, 1]} : vector<6x96xf32> to vector<6x64xf32>
    %392 = vector.extract_strided_slice %348 {offsets = [0, 24], sizes = [6, 64], strides = [1, 1]} : vector<6x96xf32> to vector<6x64xf32>
    %393 = vector.extract_strided_slice %361 {offsets = [0, 24], sizes = [6, 64], strides = [1, 1]} : vector<6x96xf32> to vector<6x64xf32>
    %394 = vector.extract_strided_slice %374 {offsets = [0, 24], sizes = [6, 64], strides = [1, 1]} : vector<6x96xf32> to vector<6x64xf32>
    %395 = vector.extract_strided_slice %322 {offsets = [0, 32], sizes = [6, 64], strides = [1, 1]} : vector<6x96xf32> to vector<6x64xf32>
    %396 = vector.extract_strided_slice %335 {offsets = [0, 32], sizes = [6, 64], strides = [1, 1]} : vector<6x96xf32> to vector<6x64xf32>
    %397 = vector.extract_strided_slice %348 {offsets = [0, 32], sizes = [6, 64], strides = [1, 1]} : vector<6x96xf32> to vector<6x64xf32>
    %398 = vector.extract_strided_slice %361 {offsets = [0, 32], sizes = [6, 64], strides = [1, 1]} : vector<6x96xf32> to vector<6x64xf32>
    %399 = vector.extract_strided_slice %374 {offsets = [0, 32], sizes = [6, 64], strides = [1, 1]} : vector<6x96xf32> to vector<6x64xf32>
    %400 = tpu.concatenate %375, %376, %377, %378, %379, %380, %381, %382, %383, %384, %385, %386, %387, %388, %389, %390 in 0 : vector<6x64xf32>, vector<6x64xf32>, vector<6x64xf32>, vector<6x64xf32>, vector<6x64xf32>, vector<6x64xf32>, vector<6x64xf32>, vector<6x64xf32>, vector<6x64xf32>, vector<6x64xf32>, vector<6x64xf32>, vector<6x64xf32>, vector<6x64xf32>, vector<6x64xf32>, vector<6x64xf32>, vector<6x64xf32> -> vector<96x64xf32>
    %401 = tpu.concatenate %391, %392, %393, %394, %395, %396, %397, %398, %399 in 0 : vector<6x64xf32>, vector<6x64xf32>, vector<6x64xf32>, vector<6x64xf32>, vector<6x64xf32>, vector<6x64xf32>, vector<6x64xf32>, vector<6x64xf32>, vector<6x64xf32> -> vector<54x64xf32>
    %402 = tpu.concatenate %400, %401 in 0 : vector<96x64xf32>, vector<54x64xf32> -> vector<150x64xf32>
    %403 = tpu.concatenate %402, %4 in 1 : vector<150x64xf32>, vector<150x64xf32> -> vector<150x128xf32>
    %404 = vector.extract_strided_slice %3 {offsets = [0, 1920], sizes = [6, 576], strides = [1, 1]} : vector<6x2560xf32> to vector<6x576xf32>
    %c0_42 = arith.constant 0 : index
    %c0_43 = arith.constant 0 : index
    %405 = vector.load %arg3[%c0_42, %c0_43] : memref<6x3xf32, #tpu.memory_space<vmem>>, vector<6x1xf32>
    %406 = vector.broadcast %405 : vector<6x1xf32> to vector<6x576xf32>
    %407 = arith.addf %404, %406 : vector<6x576xf32>
    %cst_44 = arith.constant dense<0.000000e+00> : vector<6xf32>
    %408 = vector.multi_reduction <add>, %407, %cst_44 [1] : vector<6x576xf32> to vector<6xf32>
    %409 = vector.shape_cast %408 : vector<6xf32> to vector<6x1xf32>
    %cst_45 = arith.constant 0.00173611112 : f32
    %410 = vector.broadcast %cst_45 : f32 to vector<6x1xf32>
    %411 = arith.mulf %409, %410 : vector<6x1xf32>
    %412 = arith.mulf %407, %407 : vector<6x576xf32>
    %cst_46 = arith.constant dense<0.000000e+00> : vector<6xf32>
    %413 = vector.multi_reduction <add>, %412, %cst_46 [1] : vector<6x576xf32> to vector<6xf32>
    %414 = vector.shape_cast %413 : vector<6xf32> to vector<6x1xf32>
    %cst_47 = arith.constant 0.00173611112 : f32
    %415 = vector.broadcast %cst_47 : f32 to vector<6x1xf32>
    %416 = arith.mulf %414, %415 : vector<6x1xf32>
    %417 = arith.mulf %411, %411 : vector<6x1xf32>
    %418 = arith.subf %416, %417 : vector<6x1xf32>
    %cst_48 = arith.constant 0.000000e+00 : f32
    %419 = vector.broadcast %cst_48 : f32 to vector<6x1xf32>
    %420 = arith.maximumf %418, %419 : vector<6x1xf32>
    %421 = vector.broadcast %411 : vector<6x1xf32> to vector<6x576xf32>
    %422 = arith.subf %407, %421 : vector<6x576xf32>
    %cst_49 = arith.constant 9.99999974E-6 : f32
    %423 = vector.broadcast %cst_49 : f32 to vector<6x1xf32>
    %424 = arith.addf %420, %423 : vector<6x1xf32>
    %425 = math.rsqrt %424 : vector<6x1xf32>
    %426 = vector.broadcast %425 : vector<6x1xf32> to vector<6x576xf32>
    %427 = arith.mulf %422, %426 : vector<6x576xf32>
    %c0_50 = arith.constant 0 : index
    %c1_51 = arith.constant 1 : index
    %428 = vector.load %arg3[%c0_50, %c1_51] : memref<6x3xf32, #tpu.memory_space<vmem>>, vector<6x1xf32>
    %429 = vector.broadcast %428 : vector<6x1xf32> to vector<6x576xf32>
    %430 = arith.mulf %427, %429 : vector<6x576xf32>
    %c0_52 = arith.constant 0 : index
    %c2_53 = arith.constant 2 : index
    %431 = vector.load %arg3[%c0_52, %c2_53] : memref<6x3xf32, #tpu.memory_space<vmem>>, vector<6x1xf32>
    %432 = vector.broadcast %431 : vector<6x1xf32> to vector<6x576xf32>
    %433 = arith.addf %430, %432 : vector<6x576xf32>
    %cst_54 = arith.constant 0.000000e+00 : f32
    %434 = vector.broadcast %cst_54 : f32 to vector<6x576xf32>
    %435 = arith.maximumf %433, %434 : vector<6x576xf32>
    %436 = vector.extract_strided_slice %435 {offsets = [0, 0], sizes = [6, 144], strides = [1, 1]} : vector<6x576xf32> to vector<6x144xf32>
    %437 = vector.extract_strided_slice %435 {offsets = [0, 144], sizes = [6, 144], strides = [1, 1]} : vector<6x576xf32> to vector<6x144xf32>
    %438 = arith.maximumf %436, %437 : vector<6x144xf32>
    %439 = vector.extract_strided_slice %435 {offsets = [0, 288], sizes = [6, 144], strides = [1, 1]} : vector<6x576xf32> to vector<6x144xf32>
    %440 = vector.extract_strided_slice %435 {offsets = [0, 432], sizes = [6, 144], strides = [1, 1]} : vector<6x576xf32> to vector<6x144xf32>
    %441 = arith.maximumf %439, %440 : vector<6x144xf32>
    %442 = arith.maximumf %438, %441 : vector<6x144xf32>
    %443 = vector.extract_strided_slice %442 {offsets = [0, 0], sizes = [6, 8], strides = [1, 1]} : vector<6x144xf32> to vector<6x8xf32>
    %444 = vector.extract_strided_slice %442 {offsets = [0, 12], sizes = [6, 8], strides = [1, 1]} : vector<6x144xf32> to vector<6x8xf32>
    %445 = vector.extract_strided_slice %442 {offsets = [0, 24], sizes = [6, 8], strides = [1, 1]} : vector<6x144xf32> to vector<6x8xf32>
    %446 = vector.extract_strided_slice %442 {offsets = [0, 36], sizes = [6, 8], strides = [1, 1]} : vector<6x144xf32> to vector<6x8xf32>
    %447 = vector.extract_strided_slice %442 {offsets = [0, 48], sizes = [6, 8], strides = [1, 1]} : vector<6x144xf32> to vector<6x8xf32>
    %448 = vector.extract_strided_slice %442 {offsets = [0, 60], sizes = [6, 8], strides = [1, 1]} : vector<6x144xf32> to vector<6x8xf32>
    %449 = vector.extract_strided_slice %442 {offsets = [0, 72], sizes = [6, 8], strides = [1, 1]} : vector<6x144xf32> to vector<6x8xf32>
    %450 = vector.extract_strided_slice %442 {offsets = [0, 84], sizes = [6, 8], strides = [1, 1]} : vector<6x144xf32> to vector<6x8xf32>
    %451 = vector.extract_strided_slice %442 {offsets = [0, 96], sizes = [6, 8], strides = [1, 1]} : vector<6x144xf32> to vector<6x8xf32>
    %452 = vector.extract_strided_slice %442 {offsets = [0, 108], sizes = [6, 8], strides = [1, 1]} : vector<6x144xf32> to vector<6x8xf32>
    %453 = vector.extract_strided_slice %442 {offsets = [0, 120], sizes = [6, 8], strides = [1, 1]} : vector<6x144xf32> to vector<6x8xf32>
    %454 = vector.extract_strided_slice %442 {offsets = [0, 132], sizes = [6, 8], strides = [1, 1]} : vector<6x144xf32> to vector<6x8xf32>
    %455 = tpu.concatenate %443, %444, %445, %446, %447, %448, %449, %450, %451, %452, %453, %454 in 1 : vector<6x8xf32>, vector<6x8xf32>, vector<6x8xf32>, vector<6x8xf32>, vector<6x8xf32>, vector<6x8xf32>, vector<6x8xf32>, vector<6x8xf32>, vector<6x8xf32>, vector<6x8xf32>, vector<6x8xf32>, vector<6x8xf32> -> vector<6x96xf32>
    %456 = vector.extract_strided_slice %442 {offsets = [0, 1], sizes = [6, 8], strides = [1, 1]} : vector<6x144xf32> to vector<6x8xf32>
    %457 = vector.extract_strided_slice %442 {offsets = [0, 13], sizes = [6, 8], strides = [1, 1]} : vector<6x144xf32> to vector<6x8xf32>
    %458 = vector.extract_strided_slice %442 {offsets = [0, 25], sizes = [6, 8], strides = [1, 1]} : vector<6x144xf32> to vector<6x8xf32>
    %459 = vector.extract_strided_slice %442 {offsets = [0, 37], sizes = [6, 8], strides = [1, 1]} : vector<6x144xf32> to vector<6x8xf32>
    %460 = vector.extract_strided_slice %442 {offsets = [0, 49], sizes = [6, 8], strides = [1, 1]} : vector<6x144xf32> to vector<6x8xf32>
    %461 = vector.extract_strided_slice %442 {offsets = [0, 61], sizes = [6, 8], strides = [1, 1]} : vector<6x144xf32> to vector<6x8xf32>
    %462 = vector.extract_strided_slice %442 {offsets = [0, 73], sizes = [6, 8], strides = [1, 1]} : vector<6x144xf32> to vector<6x8xf32>
    %463 = vector.extract_strided_slice %442 {offsets = [0, 85], sizes = [6, 8], strides = [1, 1]} : vector<6x144xf32> to vector<6x8xf32>
    %464 = vector.extract_strided_slice %442 {offsets = [0, 97], sizes = [6, 8], strides = [1, 1]} : vector<6x144xf32> to vector<6x8xf32>
    %465 = vector.extract_strided_slice %442 {offsets = [0, 109], sizes = [6, 8], strides = [1, 1]} : vector<6x144xf32> to vector<6x8xf32>
    %466 = vector.extract_strided_slice %442 {offsets = [0, 121], sizes = [6, 8], strides = [1, 1]} : vector<6x144xf32> to vector<6x8xf32>
    %467 = vector.extract_strided_slice %442 {offsets = [0, 133], sizes = [6, 8], strides = [1, 1]} : vector<6x144xf32> to vector<6x8xf32>
    %468 = tpu.concatenate %456, %457, %458, %459, %460, %461, %462, %463, %464, %465, %466, %467 in 1 : vector<6x8xf32>, vector<6x8xf32>, vector<6x8xf32>, vector<6x8xf32>, vector<6x8xf32>, vector<6x8xf32>, vector<6x8xf32>, vector<6x8xf32>, vector<6x8xf32>, vector<6x8xf32>, vector<6x8xf32>, vector<6x8xf32> -> vector<6x96xf32>
    %469 = vector.extract_strided_slice %442 {offsets = [0, 2], sizes = [6, 8], strides = [1, 1]} : vector<6x144xf32> to vector<6x8xf32>
    %470 = vector.extract_strided_slice %442 {offsets = [0, 14], sizes = [6, 8], strides = [1, 1]} : vector<6x144xf32> to vector<6x8xf32>
    %471 = vector.extract_strided_slice %442 {offsets = [0, 26], sizes = [6, 8], strides = [1, 1]} : vector<6x144xf32> to vector<6x8xf32>
    %472 = vector.extract_strided_slice %442 {offsets = [0, 38], sizes = [6, 8], strides = [1, 1]} : vector<6x144xf32> to vector<6x8xf32>
    %473 = vector.extract_strided_slice %442 {offsets = [0, 50], sizes = [6, 8], strides = [1, 1]} : vector<6x144xf32> to vector<6x8xf32>
    %474 = vector.extract_strided_slice %442 {offsets = [0, 62], sizes = [6, 8], strides = [1, 1]} : vector<6x144xf32> to vector<6x8xf32>
    %475 = vector.extract_strided_slice %442 {offsets = [0, 74], sizes = [6, 8], strides = [1, 1]} : vector<6x144xf32> to vector<6x8xf32>
    %476 = vector.extract_strided_slice %442 {offsets = [0, 86], sizes = [6, 8], strides = [1, 1]} : vector<6x144xf32> to vector<6x8xf32>
    %477 = vector.extract_strided_slice %442 {offsets = [0, 98], sizes = [6, 8], strides = [1, 1]} : vector<6x144xf32> to vector<6x8xf32>
    %478 = vector.extract_strided_slice %442 {offsets = [0, 110], sizes = [6, 8], strides = [1, 1]} : vector<6x144xf32> to vector<6x8xf32>
    %479 = vector.extract_strided_slice %442 {offsets = [0, 122], sizes = [6, 8], strides = [1, 1]} : vector<6x144xf32> to vector<6x8xf32>
    %480 = vector.extract_strided_slice %442 {offsets = [0, 134], sizes = [6, 8], strides = [1, 1]} : vector<6x144xf32> to vector<6x8xf32>
    %481 = tpu.concatenate %469, %470, %471, %472, %473, %474, %475, %476, %477, %478, %479, %480 in 1 : vector<6x8xf32>, vector<6x8xf32>, vector<6x8xf32>, vector<6x8xf32>, vector<6x8xf32>, vector<6x8xf32>, vector<6x8xf32>, vector<6x8xf32>, vector<6x8xf32>, vector<6x8xf32>, vector<6x8xf32>, vector<6x8xf32> -> vector<6x96xf32>
    %482 = vector.extract_strided_slice %442 {offsets = [0, 3], sizes = [6, 8], strides = [1, 1]} : vector<6x144xf32> to vector<6x8xf32>
    %483 = vector.extract_strided_slice %442 {offsets = [0, 15], sizes = [6, 8], strides = [1, 1]} : vector<6x144xf32> to vector<6x8xf32>
    %484 = vector.extract_strided_slice %442 {offsets = [0, 27], sizes = [6, 8], strides = [1, 1]} : vector<6x144xf32> to vector<6x8xf32>
    %485 = vector.extract_strided_slice %442 {offsets = [0, 39], sizes = [6, 8], strides = [1, 1]} : vector<6x144xf32> to vector<6x8xf32>
    %486 = vector.extract_strided_slice %442 {offsets = [0, 51], sizes = [6, 8], strides = [1, 1]} : vector<6x144xf32> to vector<6x8xf32>
    %487 = vector.extract_strided_slice %442 {offsets = [0, 63], sizes = [6, 8], strides = [1, 1]} : vector<6x144xf32> to vector<6x8xf32>
    %488 = vector.extract_strided_slice %442 {offsets = [0, 75], sizes = [6, 8], strides = [1, 1]} : vector<6x144xf32> to vector<6x8xf32>
    %489 = vector.extract_strided_slice %442 {offsets = [0, 87], sizes = [6, 8], strides = [1, 1]} : vector<6x144xf32> to vector<6x8xf32>
    %490 = vector.extract_strided_slice %442 {offsets = [0, 99], sizes = [6, 8], strides = [1, 1]} : vector<6x144xf32> to vector<6x8xf32>
    %491 = vector.extract_strided_slice %442 {offsets = [0, 111], sizes = [6, 8], strides = [1, 1]} : vector<6x144xf32> to vector<6x8xf32>
    %492 = vector.extract_strided_slice %442 {offsets = [0, 123], sizes = [6, 8], strides = [1, 1]} : vector<6x144xf32> to vector<6x8xf32>
    %493 = vector.extract_strided_slice %442 {offsets = [0, 135], sizes = [6, 8], strides = [1, 1]} : vector<6x144xf32> to vector<6x8xf32>
    %494 = tpu.concatenate %482, %483, %484, %485, %486, %487, %488, %489, %490, %491, %492, %493 in 1 : vector<6x8xf32>, vector<6x8xf32>, vector<6x8xf32>, vector<6x8xf32>, vector<6x8xf32>, vector<6x8xf32>, vector<6x8xf32>, vector<6x8xf32>, vector<6x8xf32>, vector<6x8xf32>, vector<6x8xf32>, vector<6x8xf32> -> vector<6x96xf32>
    %495 = vector.extract_strided_slice %442 {offsets = [0, 4], sizes = [6, 8], strides = [1, 1]} : vector<6x144xf32> to vector<6x8xf32>
    %496 = vector.extract_strided_slice %442 {offsets = [0, 16], sizes = [6, 8], strides = [1, 1]} : vector<6x144xf32> to vector<6x8xf32>
    %497 = vector.extract_strided_slice %442 {offsets = [0, 28], sizes = [6, 8], strides = [1, 1]} : vector<6x144xf32> to vector<6x8xf32>
    %498 = vector.extract_strided_slice %442 {offsets = [0, 40], sizes = [6, 8], strides = [1, 1]} : vector<6x144xf32> to vector<6x8xf32>
    %499 = vector.extract_strided_slice %442 {offsets = [0, 52], sizes = [6, 8], strides = [1, 1]} : vector<6x144xf32> to vector<6x8xf32>
    %500 = vector.extract_strided_slice %442 {offsets = [0, 64], sizes = [6, 8], strides = [1, 1]} : vector<6x144xf32> to vector<6x8xf32>
    %501 = vector.extract_strided_slice %442 {offsets = [0, 76], sizes = [6, 8], strides = [1, 1]} : vector<6x144xf32> to vector<6x8xf32>
    %502 = vector.extract_strided_slice %442 {offsets = [0, 88], sizes = [6, 8], strides = [1, 1]} : vector<6x144xf32> to vector<6x8xf32>
    %503 = vector.extract_strided_slice %442 {offsets = [0, 100], sizes = [6, 8], strides = [1, 1]} : vector<6x144xf32> to vector<6x8xf32>
    %504 = vector.extract_strided_slice %442 {offsets = [0, 112], sizes = [6, 8], strides = [1, 1]} : vector<6x144xf32> to vector<6x8xf32>
    %505 = vector.extract_strided_slice %442 {offsets = [0, 124], sizes = [6, 8], strides = [1, 1]} : vector<6x144xf32> to vector<6x8xf32>
    %506 = vector.extract_strided_slice %442 {offsets = [0, 136], sizes = [6, 8], strides = [1, 1]} : vector<6x144xf32> to vector<6x8xf32>
    %507 = tpu.concatenate %495, %496, %497, %498, %499, %500, %501, %502, %503, %504, %505, %506 in 1 : vector<6x8xf32>, vector<6x8xf32>, vector<6x8xf32>, vector<6x8xf32>, vector<6x8xf32>, vector<6x8xf32>, vector<6x8xf32>, vector<6x8xf32>, vector<6x8xf32>, vector<6x8xf32>, vector<6x8xf32>, vector<6x8xf32> -> vector<6x96xf32>
    %508 = vector.extract_strided_slice %455 {offsets = [0, 0], sizes = [6, 64], strides = [1, 1]} : vector<6x96xf32> to vector<6x64xf32>
    %509 = vector.extract_strided_slice %468 {offsets = [0, 0], sizes = [6, 64], strides = [1, 1]} : vector<6x96xf32> to vector<6x64xf32>
    %510 = vector.extract_strided_slice %481 {offsets = [0, 0], sizes = [6, 64], strides = [1, 1]} : vector<6x96xf32> to vector<6x64xf32>
    %511 = vector.extract_strided_slice %494 {offsets = [0, 0], sizes = [6, 64], strides = [1, 1]} : vector<6x96xf32> to vector<6x64xf32>
    %512 = vector.extract_strided_slice %507 {offsets = [0, 0], sizes = [6, 64], strides = [1, 1]} : vector<6x96xf32> to vector<6x64xf32>
    %513 = vector.extract_strided_slice %455 {offsets = [0, 8], sizes = [6, 64], strides = [1, 1]} : vector<6x96xf32> to vector<6x64xf32>
    %514 = vector.extract_strided_slice %468 {offsets = [0, 8], sizes = [6, 64], strides = [1, 1]} : vector<6x96xf32> to vector<6x64xf32>
    %515 = vector.extract_strided_slice %481 {offsets = [0, 8], sizes = [6, 64], strides = [1, 1]} : vector<6x96xf32> to vector<6x64xf32>
    %516 = vector.extract_strided_slice %494 {offsets = [0, 8], sizes = [6, 64], strides = [1, 1]} : vector<6x96xf32> to vector<6x64xf32>
    %517 = vector.extract_strided_slice %507 {offsets = [0, 8], sizes = [6, 64], strides = [1, 1]} : vector<6x96xf32> to vector<6x64xf32>
    %518 = vector.extract_strided_slice %455 {offsets = [0, 16], sizes = [6, 64], strides = [1, 1]} : vector<6x96xf32> to vector<6x64xf32>
    %519 = vector.extract_strided_slice %468 {offsets = [0, 16], sizes = [6, 64], strides = [1, 1]} : vector<6x96xf32> to vector<6x64xf32>
    %520 = vector.extract_strided_slice %481 {offsets = [0, 16], sizes = [6, 64], strides = [1, 1]} : vector<6x96xf32> to vector<6x64xf32>
    %521 = vector.extract_strided_slice %494 {offsets = [0, 16], sizes = [6, 64], strides = [1, 1]} : vector<6x96xf32> to vector<6x64xf32>
    %522 = vector.extract_strided_slice %507 {offsets = [0, 16], sizes = [6, 64], strides = [1, 1]} : vector<6x96xf32> to vector<6x64xf32>
    %523 = vector.extract_strided_slice %455 {offsets = [0, 24], sizes = [6, 64], strides = [1, 1]} : vector<6x96xf32> to vector<6x64xf32>
    %524 = vector.extract_strided_slice %468 {offsets = [0, 24], sizes = [6, 64], strides = [1, 1]} : vector<6x96xf32> to vector<6x64xf32>
    %525 = vector.extract_strided_slice %481 {offsets = [0, 24], sizes = [6, 64], strides = [1, 1]} : vector<6x96xf32> to vector<6x64xf32>
    %526 = vector.extract_strided_slice %494 {offsets = [0, 24], sizes = [6, 64], strides = [1, 1]} : vector<6x96xf32> to vector<6x64xf32>
    %527 = vector.extract_strided_slice %507 {offsets = [0, 24], sizes = [6, 64], strides = [1, 1]} : vector<6x96xf32> to vector<6x64xf32>
    %528 = vector.extract_strided_slice %455 {offsets = [0, 32], sizes = [6, 64], strides = [1, 1]} : vector<6x96xf32> to vector<6x64xf32>
    %529 = vector.extract_strided_slice %468 {offsets = [0, 32], sizes = [6, 64], strides = [1, 1]} : vector<6x96xf32> to vector<6x64xf32>
    %530 = vector.extract_strided_slice %481 {offsets = [0, 32], sizes = [6, 64], strides = [1, 1]} : vector<6x96xf32> to vector<6x64xf32>
    %531 = vector.extract_strided_slice %494 {offsets = [0, 32], sizes = [6, 64], strides = [1, 1]} : vector<6x96xf32> to vector<6x64xf32>
    %532 = vector.extract_strided_slice %507 {offsets = [0, 32], sizes = [6, 64], strides = [1, 1]} : vector<6x96xf32> to vector<6x64xf32>
    %533 = tpu.concatenate %508, %509, %510, %511, %512, %513, %514, %515, %516, %517, %518, %519, %520, %521, %522, %523 in 0 : vector<6x64xf32>, vector<6x64xf32>, vector<6x64xf32>, vector<6x64xf32>, vector<6x64xf32>, vector<6x64xf32>, vector<6x64xf32>, vector<6x64xf32>, vector<6x64xf32>, vector<6x64xf32>, vector<6x64xf32>, vector<6x64xf32>, vector<6x64xf32>, vector<6x64xf32>, vector<6x64xf32>, vector<6x64xf32> -> vector<96x64xf32>
    %534 = tpu.concatenate %524, %525, %526, %527, %528, %529, %530, %531, %532 in 0 : vector<6x64xf32>, vector<6x64xf32>, vector<6x64xf32>, vector<6x64xf32>, vector<6x64xf32>, vector<6x64xf32>, vector<6x64xf32>, vector<6x64xf32>, vector<6x64xf32> -> vector<54x64xf32>
    %535 = tpu.concatenate %533, %534 in 0 : vector<96x64xf32>, vector<54x64xf32> -> vector<150x64xf32>
    %536 = tpu.concatenate %535, %4 in 1 : vector<150x64xf32>, vector<150x64xf32> -> vector<150x128xf32>
    %537 = tpu.concatenate %137, %270, %403, %536 in 1 : vector<150x128xf32>, vector<150x128xf32>, vector<150x128xf32>, vector<150x128xf32> -> vector<150x512xf32>
    %c0_55 = arith.constant 0 : index
    %c0_56 = arith.constant 0 : index
    %538 = vector.load %arg4[%c0_55, %c0_56] : memref<16x150xf32, #tpu.memory_space<vmem>>, vector<16x150xf32>
    %cst_57 = arith.constant dense<0.000000e+00> : vector<16x512xf32>
    %539 = tpu.matmul %538, %537, %cst_57 {dimension_numbers = #tpu.dot_dimension_numbers<[1], [0], [0], [1], [0, 0, 1, 1], [], []>} : vector<16x150xf32>, vector<150x512xf32>, vector<16x512xf32> -> vector<16x512xf32>
    %c0_58 = arith.constant 0 : index
    %c0_59 = arith.constant 0 : index
    %540 = vector.load %arg6[%c0_58, %c0_59] : memref<64x64xf32, #tpu.memory_space<vmem>>, vector<64x64xf32>
    %541 = vector.extract_strided_slice %539 {offsets = [0, 0], sizes = [16, 64], strides = [1, 1]} : vector<16x512xf32> to vector<16x64xf32>
    %c0_60 = arith.constant 0 : index
    %c0_61 = arith.constant 0 : index
    %542 = vector.load %arg5[%c0_60, %c0_61] : memref<16x3xf32, #tpu.memory_space<vmem>>, vector<16x1xf32>
    %543 = vector.broadcast %542 : vector<16x1xf32> to vector<16x64xf32>
    %544 = arith.addf %541, %543 : vector<16x64xf32>
    %cst_62 = arith.constant dense<0.000000e+00> : vector<16xf32>
    %545 = vector.multi_reduction <add>, %544, %cst_62 [1] : vector<16x64xf32> to vector<16xf32>
    %546 = vector.shape_cast %545 : vector<16xf32> to vector<16x1xf32>
    %cst_63 = arith.constant 1.562500e-02 : f32
    %547 = vector.broadcast %cst_63 : f32 to vector<16x1xf32>
    %548 = arith.mulf %546, %547 : vector<16x1xf32>
    %549 = arith.mulf %544, %544 : vector<16x64xf32>
    %cst_64 = arith.constant dense<0.000000e+00> : vector<16xf32>
    %550 = vector.multi_reduction <add>, %549, %cst_64 [1] : vector<16x64xf32> to vector<16xf32>
    %551 = vector.shape_cast %550 : vector<16xf32> to vector<16x1xf32>
    %cst_65 = arith.constant 1.562500e-02 : f32
    %552 = vector.broadcast %cst_65 : f32 to vector<16x1xf32>
    %553 = arith.mulf %551, %552 : vector<16x1xf32>
    %554 = arith.mulf %548, %548 : vector<16x1xf32>
    %555 = arith.subf %553, %554 : vector<16x1xf32>
    %cst_66 = arith.constant 0.000000e+00 : f32
    %556 = vector.broadcast %cst_66 : f32 to vector<16x1xf32>
    %557 = arith.maximumf %555, %556 : vector<16x1xf32>
    %558 = vector.broadcast %548 : vector<16x1xf32> to vector<16x64xf32>
    %559 = arith.subf %544, %558 : vector<16x64xf32>
    %cst_67 = arith.constant 9.99999974E-6 : f32
    %560 = vector.broadcast %cst_67 : f32 to vector<16x1xf32>
    %561 = arith.addf %557, %560 : vector<16x1xf32>
    %562 = math.rsqrt %561 : vector<16x1xf32>
    %563 = vector.broadcast %562 : vector<16x1xf32> to vector<16x64xf32>
    %564 = arith.mulf %559, %563 : vector<16x64xf32>
    %c0_68 = arith.constant 0 : index
    %c1_69 = arith.constant 1 : index
    %565 = vector.load %arg5[%c0_68, %c1_69] : memref<16x3xf32, #tpu.memory_space<vmem>>, vector<16x1xf32>
    %566 = vector.broadcast %565 : vector<16x1xf32> to vector<16x64xf32>
    %567 = arith.mulf %564, %566 : vector<16x64xf32>
    %c0_70 = arith.constant 0 : index
    %c2_71 = arith.constant 2 : index
    %568 = vector.load %arg5[%c0_70, %c2_71] : memref<16x3xf32, #tpu.memory_space<vmem>>, vector<16x1xf32>
    %569 = vector.broadcast %568 : vector<16x1xf32> to vector<16x64xf32>
    %570 = arith.addf %567, %569 : vector<16x64xf32>
    %cst_72 = arith.constant 0.000000e+00 : f32
    %571 = vector.broadcast %cst_72 : f32 to vector<16x64xf32>
    %572 = arith.maximumf %570, %571 : vector<16x64xf32>
    %cst_73 = arith.constant dense<0.000000e+00> : vector<16x64xf32>
    %573 = tpu.matmul %572, %540, %cst_73 {dimension_numbers = #tpu.dot_dimension_numbers<[1], [0], [0], [1], [0, 0, 1, 1], [], []>} : vector<16x64xf32>, vector<64x64xf32>, vector<16x64xf32> -> vector<16x64xf32>
    %574 = vector.extract_strided_slice %573 {offsets = [0, 0], sizes = [16, 16], strides = [1, 1]} : vector<16x64xf32> to vector<16x16xf32>
    %575 = vector.extract_strided_slice %573 {offsets = [0, 16], sizes = [16, 16], strides = [1, 1]} : vector<16x64xf32> to vector<16x16xf32>
    %576 = arith.maximumf %574, %575 : vector<16x16xf32>
    %577 = vector.extract_strided_slice %573 {offsets = [0, 32], sizes = [16, 16], strides = [1, 1]} : vector<16x64xf32> to vector<16x16xf32>
    %578 = vector.extract_strided_slice %573 {offsets = [0, 48], sizes = [16, 16], strides = [1, 1]} : vector<16x64xf32> to vector<16x16xf32>
    %579 = arith.maximumf %577, %578 : vector<16x16xf32>
    %580 = arith.maximumf %576, %579 : vector<16x16xf32>
    %581 = vector.extract_strided_slice %580 {offsets = [0, 0], sizes = [1, 16], strides = [1, 1]} : vector<16x16xf32> to vector<1x16xf32>
    %582 = vector.extract_strided_slice %580 {offsets = [1, 0], sizes = [1, 16], strides = [1, 1]} : vector<16x16xf32> to vector<1x16xf32>
    %583 = vector.extract_strided_slice %580 {offsets = [2, 0], sizes = [1, 16], strides = [1, 1]} : vector<16x16xf32> to vector<1x16xf32>
    %584 = vector.extract_strided_slice %580 {offsets = [3, 0], sizes = [1, 16], strides = [1, 1]} : vector<16x16xf32> to vector<1x16xf32>
    %585 = vector.extract_strided_slice %580 {offsets = [4, 0], sizes = [1, 16], strides = [1, 1]} : vector<16x16xf32> to vector<1x16xf32>
    %586 = vector.extract_strided_slice %580 {offsets = [5, 0], sizes = [1, 16], strides = [1, 1]} : vector<16x16xf32> to vector<1x16xf32>
    %587 = vector.extract_strided_slice %580 {offsets = [6, 0], sizes = [1, 16], strides = [1, 1]} : vector<16x16xf32> to vector<1x16xf32>
    %588 = vector.extract_strided_slice %580 {offsets = [7, 0], sizes = [1, 16], strides = [1, 1]} : vector<16x16xf32> to vector<1x16xf32>
    %589 = vector.extract_strided_slice %580 {offsets = [8, 0], sizes = [1, 16], strides = [1, 1]} : vector<16x16xf32> to vector<1x16xf32>
    %590 = vector.extract_strided_slice %580 {offsets = [9, 0], sizes = [1, 16], strides = [1, 1]} : vector<16x16xf32> to vector<1x16xf32>
    %591 = vector.extract_strided_slice %580 {offsets = [10, 0], sizes = [1, 16], strides = [1, 1]} : vector<16x16xf32> to vector<1x16xf32>
    %592 = vector.extract_strided_slice %580 {offsets = [11, 0], sizes = [1, 16], strides = [1, 1]} : vector<16x16xf32> to vector<1x16xf32>
    %593 = vector.extract_strided_slice %580 {offsets = [12, 0], sizes = [1, 16], strides = [1, 1]} : vector<16x16xf32> to vector<1x16xf32>
    %594 = vector.extract_strided_slice %580 {offsets = [13, 0], sizes = [1, 16], strides = [1, 1]} : vector<16x16xf32> to vector<1x16xf32>
    %595 = vector.extract_strided_slice %580 {offsets = [14, 0], sizes = [1, 16], strides = [1, 1]} : vector<16x16xf32> to vector<1x16xf32>
    %596 = vector.extract_strided_slice %580 {offsets = [15, 0], sizes = [1, 16], strides = [1, 1]} : vector<16x16xf32> to vector<1x16xf32>
    %597 = tpu.concatenate %581, %582, %583, %584, %585, %586, %587, %588, %589, %590, %591, %592, %593, %594, %595, %596 in 1 : vector<1x16xf32>, vector<1x16xf32>, vector<1x16xf32>, vector<1x16xf32>, vector<1x16xf32>, vector<1x16xf32>, vector<1x16xf32>, vector<1x16xf32>, vector<1x16xf32>, vector<1x16xf32>, vector<1x16xf32>, vector<1x16xf32>, vector<1x16xf32>, vector<1x16xf32>, vector<1x16xf32>, vector<1x16xf32> -> vector<1x256xf32>
    %598 = vector.extract_strided_slice %539 {offsets = [0, 128], sizes = [16, 64], strides = [1, 1]} : vector<16x512xf32> to vector<16x64xf32>
    %c0_74 = arith.constant 0 : index
    %c0_75 = arith.constant 0 : index
    %599 = vector.load %arg5[%c0_74, %c0_75] : memref<16x3xf32, #tpu.memory_space<vmem>>, vector<16x1xf32>
    %600 = vector.broadcast %599 : vector<16x1xf32> to vector<16x64xf32>
    %601 = arith.addf %598, %600 : vector<16x64xf32>
    %cst_76 = arith.constant dense<0.000000e+00> : vector<16xf32>
    %602 = vector.multi_reduction <add>, %601, %cst_76 [1] : vector<16x64xf32> to vector<16xf32>
    %603 = vector.shape_cast %602 : vector<16xf32> to vector<16x1xf32>
    %cst_77 = arith.constant 1.562500e-02 : f32
    %604 = vector.broadcast %cst_77 : f32 to vector<16x1xf32>
    %605 = arith.mulf %603, %604 : vector<16x1xf32>
    %606 = arith.mulf %601, %601 : vector<16x64xf32>
    %cst_78 = arith.constant dense<0.000000e+00> : vector<16xf32>
    %607 = vector.multi_reduction <add>, %606, %cst_78 [1] : vector<16x64xf32> to vector<16xf32>
    %608 = vector.shape_cast %607 : vector<16xf32> to vector<16x1xf32>
    %cst_79 = arith.constant 1.562500e-02 : f32
    %609 = vector.broadcast %cst_79 : f32 to vector<16x1xf32>
    %610 = arith.mulf %608, %609 : vector<16x1xf32>
    %611 = arith.mulf %605, %605 : vector<16x1xf32>
    %612 = arith.subf %610, %611 : vector<16x1xf32>
    %cst_80 = arith.constant 0.000000e+00 : f32
    %613 = vector.broadcast %cst_80 : f32 to vector<16x1xf32>
    %614 = arith.maximumf %612, %613 : vector<16x1xf32>
    %615 = vector.broadcast %605 : vector<16x1xf32> to vector<16x64xf32>
    %616 = arith.subf %601, %615 : vector<16x64xf32>
    %cst_81 = arith.constant 9.99999974E-6 : f32
    %617 = vector.broadcast %cst_81 : f32 to vector<16x1xf32>
    %618 = arith.addf %614, %617 : vector<16x1xf32>
    %619 = math.rsqrt %618 : vector<16x1xf32>
    %620 = vector.broadcast %619 : vector<16x1xf32> to vector<16x64xf32>
    %621 = arith.mulf %616, %620 : vector<16x64xf32>
    %c0_82 = arith.constant 0 : index
    %c1_83 = arith.constant 1 : index
    %622 = vector.load %arg5[%c0_82, %c1_83] : memref<16x3xf32, #tpu.memory_space<vmem>>, vector<16x1xf32>
    %623 = vector.broadcast %622 : vector<16x1xf32> to vector<16x64xf32>
    %624 = arith.mulf %621, %623 : vector<16x64xf32>
    %c0_84 = arith.constant 0 : index
    %c2_85 = arith.constant 2 : index
    %625 = vector.load %arg5[%c0_84, %c2_85] : memref<16x3xf32, #tpu.memory_space<vmem>>, vector<16x1xf32>
    %626 = vector.broadcast %625 : vector<16x1xf32> to vector<16x64xf32>
    %627 = arith.addf %624, %626 : vector<16x64xf32>
    %cst_86 = arith.constant 0.000000e+00 : f32
    %628 = vector.broadcast %cst_86 : f32 to vector<16x64xf32>
    %629 = arith.maximumf %627, %628 : vector<16x64xf32>
    %cst_87 = arith.constant dense<0.000000e+00> : vector<16x64xf32>
    %630 = tpu.matmul %629, %540, %cst_87 {dimension_numbers = #tpu.dot_dimension_numbers<[1], [0], [0], [1], [0, 0, 1, 1], [], []>} : vector<16x64xf32>, vector<64x64xf32>, vector<16x64xf32> -> vector<16x64xf32>
    %631 = vector.extract_strided_slice %630 {offsets = [0, 0], sizes = [16, 16], strides = [1, 1]} : vector<16x64xf32> to vector<16x16xf32>
    %632 = vector.extract_strided_slice %630 {offsets = [0, 16], sizes = [16, 16], strides = [1, 1]} : vector<16x64xf32> to vector<16x16xf32>
    %633 = arith.maximumf %631, %632 : vector<16x16xf32>
    %634 = vector.extract_strided_slice %630 {offsets = [0, 32], sizes = [16, 16], strides = [1, 1]} : vector<16x64xf32> to vector<16x16xf32>
    %635 = vector.extract_strided_slice %630 {offsets = [0, 48], sizes = [16, 16], strides = [1, 1]} : vector<16x64xf32> to vector<16x16xf32>
    %636 = arith.maximumf %634, %635 : vector<16x16xf32>
    %637 = arith.maximumf %633, %636 : vector<16x16xf32>
    %638 = vector.extract_strided_slice %637 {offsets = [0, 0], sizes = [1, 16], strides = [1, 1]} : vector<16x16xf32> to vector<1x16xf32>
    %639 = vector.extract_strided_slice %637 {offsets = [1, 0], sizes = [1, 16], strides = [1, 1]} : vector<16x16xf32> to vector<1x16xf32>
    %640 = vector.extract_strided_slice %637 {offsets = [2, 0], sizes = [1, 16], strides = [1, 1]} : vector<16x16xf32> to vector<1x16xf32>
    %641 = vector.extract_strided_slice %637 {offsets = [3, 0], sizes = [1, 16], strides = [1, 1]} : vector<16x16xf32> to vector<1x16xf32>
    %642 = vector.extract_strided_slice %637 {offsets = [4, 0], sizes = [1, 16], strides = [1, 1]} : vector<16x16xf32> to vector<1x16xf32>
    %643 = vector.extract_strided_slice %637 {offsets = [5, 0], sizes = [1, 16], strides = [1, 1]} : vector<16x16xf32> to vector<1x16xf32>
    %644 = vector.extract_strided_slice %637 {offsets = [6, 0], sizes = [1, 16], strides = [1, 1]} : vector<16x16xf32> to vector<1x16xf32>
    %645 = vector.extract_strided_slice %637 {offsets = [7, 0], sizes = [1, 16], strides = [1, 1]} : vector<16x16xf32> to vector<1x16xf32>
    %646 = vector.extract_strided_slice %637 {offsets = [8, 0], sizes = [1, 16], strides = [1, 1]} : vector<16x16xf32> to vector<1x16xf32>
    %647 = vector.extract_strided_slice %637 {offsets = [9, 0], sizes = [1, 16], strides = [1, 1]} : vector<16x16xf32> to vector<1x16xf32>
    %648 = vector.extract_strided_slice %637 {offsets = [10, 0], sizes = [1, 16], strides = [1, 1]} : vector<16x16xf32> to vector<1x16xf32>
    %649 = vector.extract_strided_slice %637 {offsets = [11, 0], sizes = [1, 16], strides = [1, 1]} : vector<16x16xf32> to vector<1x16xf32>
    %650 = vector.extract_strided_slice %637 {offsets = [12, 0], sizes = [1, 16], strides = [1, 1]} : vector<16x16xf32> to vector<1x16xf32>
    %651 = vector.extract_strided_slice %637 {offsets = [13, 0], sizes = [1, 16], strides = [1, 1]} : vector<16x16xf32> to vector<1x16xf32>
    %652 = vector.extract_strided_slice %637 {offsets = [14, 0], sizes = [1, 16], strides = [1, 1]} : vector<16x16xf32> to vector<1x16xf32>
    %653 = vector.extract_strided_slice %637 {offsets = [15, 0], sizes = [1, 16], strides = [1, 1]} : vector<16x16xf32> to vector<1x16xf32>
    %654 = tpu.concatenate %638, %639, %640, %641, %642, %643, %644, %645, %646, %647, %648, %649, %650, %651, %652, %653 in 1 : vector<1x16xf32>, vector<1x16xf32>, vector<1x16xf32>, vector<1x16xf32>, vector<1x16xf32>, vector<1x16xf32>, vector<1x16xf32>, vector<1x16xf32>, vector<1x16xf32>, vector<1x16xf32>, vector<1x16xf32>, vector<1x16xf32>, vector<1x16xf32>, vector<1x16xf32>, vector<1x16xf32>, vector<1x16xf32> -> vector<1x256xf32>
    %655 = vector.extract_strided_slice %539 {offsets = [0, 256], sizes = [16, 64], strides = [1, 1]} : vector<16x512xf32> to vector<16x64xf32>
    %c0_88 = arith.constant 0 : index
    %c0_89 = arith.constant 0 : index
    %656 = vector.load %arg5[%c0_88, %c0_89] : memref<16x3xf32, #tpu.memory_space<vmem>>, vector<16x1xf32>
    %657 = vector.broadcast %656 : vector<16x1xf32> to vector<16x64xf32>
    %658 = arith.addf %655, %657 : vector<16x64xf32>
    %cst_90 = arith.constant dense<0.000000e+00> : vector<16xf32>
    %659 = vector.multi_reduction <add>, %658, %cst_90 [1] : vector<16x64xf32> to vector<16xf32>
    %660 = vector.shape_cast %659 : vector<16xf32> to vector<16x1xf32>
    %cst_91 = arith.constant 1.562500e-02 : f32
    %661 = vector.broadcast %cst_91 : f32 to vector<16x1xf32>
    %662 = arith.mulf %660, %661 : vector<16x1xf32>
    %663 = arith.mulf %658, %658 : vector<16x64xf32>
    %cst_92 = arith.constant dense<0.000000e+00> : vector<16xf32>
    %664 = vector.multi_reduction <add>, %663, %cst_92 [1] : vector<16x64xf32> to vector<16xf32>
    %665 = vector.shape_cast %664 : vector<16xf32> to vector<16x1xf32>
    %cst_93 = arith.constant 1.562500e-02 : f32
    %666 = vector.broadcast %cst_93 : f32 to vector<16x1xf32>
    %667 = arith.mulf %665, %666 : vector<16x1xf32>
    %668 = arith.mulf %662, %662 : vector<16x1xf32>
    %669 = arith.subf %667, %668 : vector<16x1xf32>
    %cst_94 = arith.constant 0.000000e+00 : f32
    %670 = vector.broadcast %cst_94 : f32 to vector<16x1xf32>
    %671 = arith.maximumf %669, %670 : vector<16x1xf32>
    %672 = vector.broadcast %662 : vector<16x1xf32> to vector<16x64xf32>
    %673 = arith.subf %658, %672 : vector<16x64xf32>
    %cst_95 = arith.constant 9.99999974E-6 : f32
    %674 = vector.broadcast %cst_95 : f32 to vector<16x1xf32>
    %675 = arith.addf %671, %674 : vector<16x1xf32>
    %676 = math.rsqrt %675 : vector<16x1xf32>
    %677 = vector.broadcast %676 : vector<16x1xf32> to vector<16x64xf32>
    %678 = arith.mulf %673, %677 : vector<16x64xf32>
    %c0_96 = arith.constant 0 : index
    %c1_97 = arith.constant 1 : index
    %679 = vector.load %arg5[%c0_96, %c1_97] : memref<16x3xf32, #tpu.memory_space<vmem>>, vector<16x1xf32>
    %680 = vector.broadcast %679 : vector<16x1xf32> to vector<16x64xf32>
    %681 = arith.mulf %678, %680 : vector<16x64xf32>
    %c0_98 = arith.constant 0 : index
    %c2_99 = arith.constant 2 : index
    %682 = vector.load %arg5[%c0_98, %c2_99] : memref<16x3xf32, #tpu.memory_space<vmem>>, vector<16x1xf32>
    %683 = vector.broadcast %682 : vector<16x1xf32> to vector<16x64xf32>
    %684 = arith.addf %681, %683 : vector<16x64xf32>
    %cst_100 = arith.constant 0.000000e+00 : f32
    %685 = vector.broadcast %cst_100 : f32 to vector<16x64xf32>
    %686 = arith.maximumf %684, %685 : vector<16x64xf32>
    %cst_101 = arith.constant dense<0.000000e+00> : vector<16x64xf32>
    %687 = tpu.matmul %686, %540, %cst_101 {dimension_numbers = #tpu.dot_dimension_numbers<[1], [0], [0], [1], [0, 0, 1, 1], [], []>} : vector<16x64xf32>, vector<64x64xf32>, vector<16x64xf32> -> vector<16x64xf32>
    %688 = vector.extract_strided_slice %687 {offsets = [0, 0], sizes = [16, 16], strides = [1, 1]} : vector<16x64xf32> to vector<16x16xf32>
    %689 = vector.extract_strided_slice %687 {offsets = [0, 16], sizes = [16, 16], strides = [1, 1]} : vector<16x64xf32> to vector<16x16xf32>
    %690 = arith.maximumf %688, %689 : vector<16x16xf32>
    %691 = vector.extract_strided_slice %687 {offsets = [0, 32], sizes = [16, 16], strides = [1, 1]} : vector<16x64xf32> to vector<16x16xf32>
    %692 = vector.extract_strided_slice %687 {offsets = [0, 48], sizes = [16, 16], strides = [1, 1]} : vector<16x64xf32> to vector<16x16xf32>
    %693 = arith.maximumf %691, %692 : vector<16x16xf32>
    %694 = arith.maximumf %690, %693 : vector<16x16xf32>
    %695 = vector.extract_strided_slice %694 {offsets = [0, 0], sizes = [1, 16], strides = [1, 1]} : vector<16x16xf32> to vector<1x16xf32>
    %696 = vector.extract_strided_slice %694 {offsets = [1, 0], sizes = [1, 16], strides = [1, 1]} : vector<16x16xf32> to vector<1x16xf32>
    %697 = vector.extract_strided_slice %694 {offsets = [2, 0], sizes = [1, 16], strides = [1, 1]} : vector<16x16xf32> to vector<1x16xf32>
    %698 = vector.extract_strided_slice %694 {offsets = [3, 0], sizes = [1, 16], strides = [1, 1]} : vector<16x16xf32> to vector<1x16xf32>
    %699 = vector.extract_strided_slice %694 {offsets = [4, 0], sizes = [1, 16], strides = [1, 1]} : vector<16x16xf32> to vector<1x16xf32>
    %700 = vector.extract_strided_slice %694 {offsets = [5, 0], sizes = [1, 16], strides = [1, 1]} : vector<16x16xf32> to vector<1x16xf32>
    %701 = vector.extract_strided_slice %694 {offsets = [6, 0], sizes = [1, 16], strides = [1, 1]} : vector<16x16xf32> to vector<1x16xf32>
    %702 = vector.extract_strided_slice %694 {offsets = [7, 0], sizes = [1, 16], strides = [1, 1]} : vector<16x16xf32> to vector<1x16xf32>
    %703 = vector.extract_strided_slice %694 {offsets = [8, 0], sizes = [1, 16], strides = [1, 1]} : vector<16x16xf32> to vector<1x16xf32>
    %704 = vector.extract_strided_slice %694 {offsets = [9, 0], sizes = [1, 16], strides = [1, 1]} : vector<16x16xf32> to vector<1x16xf32>
    %705 = vector.extract_strided_slice %694 {offsets = [10, 0], sizes = [1, 16], strides = [1, 1]} : vector<16x16xf32> to vector<1x16xf32>
    %706 = vector.extract_strided_slice %694 {offsets = [11, 0], sizes = [1, 16], strides = [1, 1]} : vector<16x16xf32> to vector<1x16xf32>
    %707 = vector.extract_strided_slice %694 {offsets = [12, 0], sizes = [1, 16], strides = [1, 1]} : vector<16x16xf32> to vector<1x16xf32>
    %708 = vector.extract_strided_slice %694 {offsets = [13, 0], sizes = [1, 16], strides = [1, 1]} : vector<16x16xf32> to vector<1x16xf32>
    %709 = vector.extract_strided_slice %694 {offsets = [14, 0], sizes = [1, 16], strides = [1, 1]} : vector<16x16xf32> to vector<1x16xf32>
    %710 = vector.extract_strided_slice %694 {offsets = [15, 0], sizes = [1, 16], strides = [1, 1]} : vector<16x16xf32> to vector<1x16xf32>
    %711 = tpu.concatenate %695, %696, %697, %698, %699, %700, %701, %702, %703, %704, %705, %706, %707, %708, %709, %710 in 1 : vector<1x16xf32>, vector<1x16xf32>, vector<1x16xf32>, vector<1x16xf32>, vector<1x16xf32>, vector<1x16xf32>, vector<1x16xf32>, vector<1x16xf32>, vector<1x16xf32>, vector<1x16xf32>, vector<1x16xf32>, vector<1x16xf32>, vector<1x16xf32>, vector<1x16xf32>, vector<1x16xf32>, vector<1x16xf32> -> vector<1x256xf32>
    %712 = vector.extract_strided_slice %539 {offsets = [0, 384], sizes = [16, 64], strides = [1, 1]} : vector<16x512xf32> to vector<16x64xf32>
    %c0_102 = arith.constant 0 : index
    %c0_103 = arith.constant 0 : index
    %713 = vector.load %arg5[%c0_102, %c0_103] : memref<16x3xf32, #tpu.memory_space<vmem>>, vector<16x1xf32>
    %714 = vector.broadcast %713 : vector<16x1xf32> to vector<16x64xf32>
    %715 = arith.addf %712, %714 : vector<16x64xf32>
    %cst_104 = arith.constant dense<0.000000e+00> : vector<16xf32>
    %716 = vector.multi_reduction <add>, %715, %cst_104 [1] : vector<16x64xf32> to vector<16xf32>
    %717 = vector.shape_cast %716 : vector<16xf32> to vector<16x1xf32>
    %cst_105 = arith.constant 1.562500e-02 : f32
    %718 = vector.broadcast %cst_105 : f32 to vector<16x1xf32>
    %719 = arith.mulf %717, %718 : vector<16x1xf32>
    %720 = arith.mulf %715, %715 : vector<16x64xf32>
    %cst_106 = arith.constant dense<0.000000e+00> : vector<16xf32>
    %721 = vector.multi_reduction <add>, %720, %cst_106 [1] : vector<16x64xf32> to vector<16xf32>
    %722 = vector.shape_cast %721 : vector<16xf32> to vector<16x1xf32>
    %cst_107 = arith.constant 1.562500e-02 : f32
    %723 = vector.broadcast %cst_107 : f32 to vector<16x1xf32>
    %724 = arith.mulf %722, %723 : vector<16x1xf32>
    %725 = arith.mulf %719, %719 : vector<16x1xf32>
    %726 = arith.subf %724, %725 : vector<16x1xf32>
    %cst_108 = arith.constant 0.000000e+00 : f32
    %727 = vector.broadcast %cst_108 : f32 to vector<16x1xf32>
    %728 = arith.maximumf %726, %727 : vector<16x1xf32>
    %729 = vector.broadcast %719 : vector<16x1xf32> to vector<16x64xf32>
    %730 = arith.subf %715, %729 : vector<16x64xf32>
    %cst_109 = arith.constant 9.99999974E-6 : f32
    %731 = vector.broadcast %cst_109 : f32 to vector<16x1xf32>
    %732 = arith.addf %728, %731 : vector<16x1xf32>
    %733 = math.rsqrt %732 : vector<16x1xf32>
    %734 = vector.broadcast %733 : vector<16x1xf32> to vector<16x64xf32>
    %735 = arith.mulf %730, %734 : vector<16x64xf32>
    %c0_110 = arith.constant 0 : index
    %c1_111 = arith.constant 1 : index
    %736 = vector.load %arg5[%c0_110, %c1_111] : memref<16x3xf32, #tpu.memory_space<vmem>>, vector<16x1xf32>
    %737 = vector.broadcast %736 : vector<16x1xf32> to vector<16x64xf32>
    %738 = arith.mulf %735, %737 : vector<16x64xf32>
    %c0_112 = arith.constant 0 : index
    %c2_113 = arith.constant 2 : index
    %739 = vector.load %arg5[%c0_112, %c2_113] : memref<16x3xf32, #tpu.memory_space<vmem>>, vector<16x1xf32>
    %740 = vector.broadcast %739 : vector<16x1xf32> to vector<16x64xf32>
    %741 = arith.addf %738, %740 : vector<16x64xf32>
    %cst_114 = arith.constant 0.000000e+00 : f32
    %742 = vector.broadcast %cst_114 : f32 to vector<16x64xf32>
    %743 = arith.maximumf %741, %742 : vector<16x64xf32>
    %cst_115 = arith.constant dense<0.000000e+00> : vector<16x64xf32>
    %744 = tpu.matmul %743, %540, %cst_115 {dimension_numbers = #tpu.dot_dimension_numbers<[1], [0], [0], [1], [0, 0, 1, 1], [], []>} : vector<16x64xf32>, vector<64x64xf32>, vector<16x64xf32> -> vector<16x64xf32>
    %745 = vector.extract_strided_slice %744 {offsets = [0, 0], sizes = [16, 16], strides = [1, 1]} : vector<16x64xf32> to vector<16x16xf32>
    %746 = vector.extract_strided_slice %744 {offsets = [0, 16], sizes = [16, 16], strides = [1, 1]} : vector<16x64xf32> to vector<16x16xf32>
    %747 = arith.maximumf %745, %746 : vector<16x16xf32>
    %748 = vector.extract_strided_slice %744 {offsets = [0, 32], sizes = [16, 16], strides = [1, 1]} : vector<16x64xf32> to vector<16x16xf32>
    %749 = vector.extract_strided_slice %744 {offsets = [0, 48], sizes = [16, 16], strides = [1, 1]} : vector<16x64xf32> to vector<16x16xf32>
    %750 = arith.maximumf %748, %749 : vector<16x16xf32>
    %751 = arith.maximumf %747, %750 : vector<16x16xf32>
    %752 = vector.extract_strided_slice %751 {offsets = [0, 0], sizes = [1, 16], strides = [1, 1]} : vector<16x16xf32> to vector<1x16xf32>
    %753 = vector.extract_strided_slice %751 {offsets = [1, 0], sizes = [1, 16], strides = [1, 1]} : vector<16x16xf32> to vector<1x16xf32>
    %754 = vector.extract_strided_slice %751 {offsets = [2, 0], sizes = [1, 16], strides = [1, 1]} : vector<16x16xf32> to vector<1x16xf32>
    %755 = vector.extract_strided_slice %751 {offsets = [3, 0], sizes = [1, 16], strides = [1, 1]} : vector<16x16xf32> to vector<1x16xf32>
    %756 = vector.extract_strided_slice %751 {offsets = [4, 0], sizes = [1, 16], strides = [1, 1]} : vector<16x16xf32> to vector<1x16xf32>
    %757 = vector.extract_strided_slice %751 {offsets = [5, 0], sizes = [1, 16], strides = [1, 1]} : vector<16x16xf32> to vector<1x16xf32>
    %758 = vector.extract_strided_slice %751 {offsets = [6, 0], sizes = [1, 16], strides = [1, 1]} : vector<16x16xf32> to vector<1x16xf32>
    %759 = vector.extract_strided_slice %751 {offsets = [7, 0], sizes = [1, 16], strides = [1, 1]} : vector<16x16xf32> to vector<1x16xf32>
    %760 = vector.extract_strided_slice %751 {offsets = [8, 0], sizes = [1, 16], strides = [1, 1]} : vector<16x16xf32> to vector<1x16xf32>
    %761 = vector.extract_strided_slice %751 {offsets = [9, 0], sizes = [1, 16], strides = [1, 1]} : vector<16x16xf32> to vector<1x16xf32>
    %762 = vector.extract_strided_slice %751 {offsets = [10, 0], sizes = [1, 16], strides = [1, 1]} : vector<16x16xf32> to vector<1x16xf32>
    %763 = vector.extract_strided_slice %751 {offsets = [11, 0], sizes = [1, 16], strides = [1, 1]} : vector<16x16xf32> to vector<1x16xf32>
    %764 = vector.extract_strided_slice %751 {offsets = [12, 0], sizes = [1, 16], strides = [1, 1]} : vector<16x16xf32> to vector<1x16xf32>
    %765 = vector.extract_strided_slice %751 {offsets = [13, 0], sizes = [1, 16], strides = [1, 1]} : vector<16x16xf32> to vector<1x16xf32>
    %766 = vector.extract_strided_slice %751 {offsets = [14, 0], sizes = [1, 16], strides = [1, 1]} : vector<16x16xf32> to vector<1x16xf32>
    %767 = vector.extract_strided_slice %751 {offsets = [15, 0], sizes = [1, 16], strides = [1, 1]} : vector<16x16xf32> to vector<1x16xf32>
    %768 = tpu.concatenate %752, %753, %754, %755, %756, %757, %758, %759, %760, %761, %762, %763, %764, %765, %766, %767 in 1 : vector<1x16xf32>, vector<1x16xf32>, vector<1x16xf32>, vector<1x16xf32>, vector<1x16xf32>, vector<1x16xf32>, vector<1x16xf32>, vector<1x16xf32>, vector<1x16xf32>, vector<1x16xf32>, vector<1x16xf32>, vector<1x16xf32>, vector<1x16xf32>, vector<1x16xf32>, vector<1x16xf32>, vector<1x16xf32> -> vector<1x256xf32>
    %769 = tpu.concatenate %597, %654, %711, %768 in 0 : vector<1x256xf32>, vector<1x256xf32>, vector<1x256xf32>, vector<1x256xf32> -> vector<4x256xf32>
    %c0_116 = arith.constant 0 : index
    %c0_117 = arith.constant 0 : index
    %770 = vector.load %arg7[%c0_116, %c0_117] : memref<256x120xf32, #tpu.memory_space<vmem>>, vector<256x120xf32>
    %cst_118 = arith.constant dense<0.000000e+00> : vector<4x120xf32>
    %771 = tpu.matmul %769, %770, %cst_118 {dimension_numbers = #tpu.dot_dimension_numbers<[1], [0], [0], [1], [0, 0, 1, 1], [], []>} : vector<4x256xf32>, vector<256x120xf32>, vector<4x120xf32> -> vector<4x120xf32>
    %c0_119 = arith.constant 0 : index
    %c0_120 = arith.constant 0 : index
    %772 = vector.load %arg8[%c0_119, %c0_120] : memref<3x120xf32, #tpu.memory_space<vmem>>, vector<1x120xf32>
    %773 = vector.broadcast %772 : vector<1x120xf32> to vector<4x120xf32>
    %774 = arith.addf %771, %773 : vector<4x120xf32>
    %c1_121 = arith.constant 1 : index
    %c0_122 = arith.constant 0 : index
    %775 = vector.load %arg8[%c1_121, %c0_122] : memref<3x120xf32, #tpu.memory_space<vmem>>, vector<1x120xf32>
    %c2_123 = arith.constant 2 : index
    %c0_124 = arith.constant 0 : index
    %776 = vector.load %arg8[%c2_123, %c0_124] : memref<3x120xf32, #tpu.memory_space<vmem>>, vector<1x120xf32>
    %cst_125 = arith.constant dense<0.000000e+00> : vector<4xf32>
    %777 = vector.multi_reduction <add>, %774, %cst_125 [1] : vector<4x120xf32> to vector<4xf32>
    %778 = vector.shape_cast %777 : vector<4xf32> to vector<4x1xf32>
    %cst_126 = arith.constant 1.200000e+02 : f32
    %779 = vector.broadcast %cst_126 : f32 to vector<4x1xf32>
    %780 = arith.divf %778, %779 : vector<4x1xf32>
    %781 = vector.broadcast %780 : vector<4x1xf32> to vector<4x120xf32>
    %782 = arith.subf %774, %781 : vector<4x120xf32>
    %783 = arith.mulf %782, %782 : vector<4x120xf32>
    %cst_127 = arith.constant dense<0.000000e+00> : vector<4xf32>
    %784 = vector.multi_reduction <add>, %783, %cst_127 [1] : vector<4x120xf32> to vector<4xf32>
    %785 = vector.shape_cast %784 : vector<4xf32> to vector<4x1xf32>
    %cst_128 = arith.constant 1.200000e+02 : f32
    %786 = vector.broadcast %cst_128 : f32 to vector<4x1xf32>
    %787 = arith.divf %785, %786 : vector<4x1xf32>
    %788 = vector.broadcast %780 : vector<4x1xf32> to vector<4x120xf32>
    %789 = arith.subf %774, %788 : vector<4x120xf32>
    %cst_129 = arith.constant 9.99999974E-6 : f32
    %790 = vector.broadcast %cst_129 : f32 to vector<4x1xf32>
    %791 = arith.addf %787, %790 : vector<4x1xf32>
    %792 = math.rsqrt %791 : vector<4x1xf32>
    %793 = vector.broadcast %792 : vector<4x1xf32> to vector<4x120xf32>
    %794 = arith.mulf %789, %793 : vector<4x120xf32>
    %795 = vector.broadcast %775 : vector<1x120xf32> to vector<4x120xf32>
    %796 = arith.mulf %794, %795 : vector<4x120xf32>
    %797 = vector.broadcast %776 : vector<1x120xf32> to vector<4x120xf32>
    %798 = arith.addf %796, %797 : vector<4x120xf32>
    %cst_130 = arith.constant 0.000000e+00 : f32
    %799 = vector.broadcast %cst_130 : f32 to vector<4x120xf32>
    %800 = arith.maximumf %798, %799 : vector<4x120xf32>
    %c0_131 = arith.constant 0 : index
    %c0_132 = arith.constant 0 : index
    %801 = vector.load %arg9[%c0_131, %c0_132] : memref<120x84xf32, #tpu.memory_space<vmem>>, vector<120x84xf32>
    %cst_133 = arith.constant dense<0.000000e+00> : vector<4x84xf32>
    %802 = tpu.matmul %800, %801, %cst_133 {dimension_numbers = #tpu.dot_dimension_numbers<[1], [0], [0], [1], [0, 0, 1, 1], [], []>} : vector<4x120xf32>, vector<120x84xf32>, vector<4x84xf32> -> vector<4x84xf32>
    %c0_134 = arith.constant 0 : index
    %c0_135 = arith.constant 0 : index
    %803 = vector.load %arg10[%c0_134, %c0_135] : memref<3x84xf32, #tpu.memory_space<vmem>>, vector<1x84xf32>
    %804 = vector.broadcast %803 : vector<1x84xf32> to vector<4x84xf32>
    %805 = arith.addf %802, %804 : vector<4x84xf32>
    %c1_136 = arith.constant 1 : index
    %c0_137 = arith.constant 0 : index
    %806 = vector.load %arg10[%c1_136, %c0_137] : memref<3x84xf32, #tpu.memory_space<vmem>>, vector<1x84xf32>
    %c2_138 = arith.constant 2 : index
    %c0_139 = arith.constant 0 : index
    %807 = vector.load %arg10[%c2_138, %c0_139] : memref<3x84xf32, #tpu.memory_space<vmem>>, vector<1x84xf32>
    %cst_140 = arith.constant dense<0.000000e+00> : vector<4xf32>
    %808 = vector.multi_reduction <add>, %805, %cst_140 [1] : vector<4x84xf32> to vector<4xf32>
    %809 = vector.shape_cast %808 : vector<4xf32> to vector<4x1xf32>
    %cst_141 = arith.constant 8.400000e+01 : f32
    %810 = vector.broadcast %cst_141 : f32 to vector<4x1xf32>
    %811 = arith.divf %809, %810 : vector<4x1xf32>
    %812 = vector.broadcast %811 : vector<4x1xf32> to vector<4x84xf32>
    %813 = arith.subf %805, %812 : vector<4x84xf32>
    %814 = arith.mulf %813, %813 : vector<4x84xf32>
    %cst_142 = arith.constant dense<0.000000e+00> : vector<4xf32>
    %815 = vector.multi_reduction <add>, %814, %cst_142 [1] : vector<4x84xf32> to vector<4xf32>
    %816 = vector.shape_cast %815 : vector<4xf32> to vector<4x1xf32>
    %cst_143 = arith.constant 8.400000e+01 : f32
    %817 = vector.broadcast %cst_143 : f32 to vector<4x1xf32>
    %818 = arith.divf %816, %817 : vector<4x1xf32>
    %819 = vector.broadcast %811 : vector<4x1xf32> to vector<4x84xf32>
    %820 = arith.subf %805, %819 : vector<4x84xf32>
    %cst_144 = arith.constant 9.99999974E-6 : f32
    %821 = vector.broadcast %cst_144 : f32 to vector<4x1xf32>
    %822 = arith.addf %818, %821 : vector<4x1xf32>
    %823 = math.rsqrt %822 : vector<4x1xf32>
    %824 = vector.broadcast %823 : vector<4x1xf32> to vector<4x84xf32>
    %825 = arith.mulf %820, %824 : vector<4x84xf32>
    %826 = vector.broadcast %806 : vector<1x84xf32> to vector<4x84xf32>
    %827 = arith.mulf %825, %826 : vector<4x84xf32>
    %828 = vector.broadcast %807 : vector<1x84xf32> to vector<4x84xf32>
    %829 = arith.addf %827, %828 : vector<4x84xf32>
    %cst_145 = arith.constant 0.000000e+00 : f32
    %830 = vector.broadcast %cst_145 : f32 to vector<4x84xf32>
    %831 = arith.maximumf %829, %830 : vector<4x84xf32>
    %c0_146 = arith.constant 0 : index
    %c0_147 = arith.constant 0 : index
    %832 = vector.load %arg11[%c0_146, %c0_147] : memref<84x10xf32, #tpu.memory_space<vmem>>, vector<84x10xf32>
    %cst_148 = arith.constant dense<0.000000e+00> : vector<4x10xf32>
    %833 = tpu.matmul %831, %832, %cst_148 {dimension_numbers = #tpu.dot_dimension_numbers<[1], [0], [0], [1], [0, 0, 1, 1], [], []>} : vector<4x84xf32>, vector<84x10xf32>, vector<4x10xf32> -> vector<4x10xf32>
    %c0_149 = arith.constant 0 : index
    %c0_150 = arith.constant 0 : index
    %834 = vector.load %arg12[%c0_149, %c0_150] : memref<1x10xf32, #tpu.memory_space<vmem>>, vector<1x10xf32>
    %835 = vector.broadcast %834 : vector<1x10xf32> to vector<4x10xf32>
    %836 = arith.addf %833, %835 : vector<4x10xf32>
    %c0_151 = arith.constant 0 : index
    %c0_152 = arith.constant 0 : index
    %c0_153 = arith.constant 0 : index
    %837 = vector.load %arg13[%c0_151, %c0_152, %c0_153] : memref<1x4x10xf32, #tpu.memory_space<vmem>>, vector<1x4x10xf32>
    %838 = vector.shape_cast %837 : vector<1x4x10xf32> to vector<4x10xf32>
    %839 = vector.shape_cast %836 : vector<4x10xf32> to vector<1x4x10xf32>
    tpu.vector_store %arg13[%c0_151, %c0_152, %c0_153], %839 {strides = array<i32>} : memref<1x4x10xf32, #tpu.memory_space<vmem>>, vector<1x4x10xf32>,
    return
  }
  func.func @transform_0(%arg0: i32) -> (i32, i32, i32) {
    %c0_i32 = arith.constant 0 : i32
    %c0_i32_0 = arith.constant 0 : i32
    %c0_i32_1 = arith.constant 0 : i32
    return %arg0, %c0_i32, %c0_i32_0 : i32, i32, i32
  }
  func.func @transform_1(%arg0: i32) -> (i32, i32) {
    %c0_i32 = arith.constant 0 : i32
    %c0_i32_0 = arith.constant 0 : i32
    %c0_i32_1 = arith.constant 0 : i32
    return %c0_i32, %c0_i32_0 : i32, i32
  }
  func.func @transform_2(%arg0: i32) -> (i32, i32) {
    %c0_i32 = arith.constant 0 : i32
    %c0_i32_0 = arith.constant 0 : i32
    %c0_i32_1 = arith.constant 0 : i32
    return %c0_i32, %c0_i32_0 : i32, i32
  }
  func.func @transform_3(%arg0: i32) -> (i32, i32) {
    %c0_i32 = arith.constant 0 : i32
    %c0_i32_0 = arith.constant 0 : i32
    %c0_i32_1 = arith.constant 0 : i32
    return %c0_i32, %c0_i32_0 : i32, i32
  }
  func.func @transform_4(%arg0: i32) -> (i32, i32) {
    %c0_i32 = arith.constant 0 : i32
    %c0_i32_0 = arith.constant 0 : i32
    %c0_i32_1 = arith.constant 0 : i32
    return %c0_i32, %c0_i32_0 : i32, i32
  }
  func.func @transform_5(%arg0: i32) -> (i32, i32) {
    %c0_i32 = arith.constant 0 : i32
    %c0_i32_0 = arith.constant 0 : i32
    %c0_i32_1 = arith.constant 0 : i32
    return %c0_i32, %c0_i32_0 : i32, i32
  }
  func.func @transform_6(%arg0: i32) -> (i32, i32) {
    %c0_i32 = arith.constant 0 : i32
    %c0_i32_0 = arith.constant 0 : i32
    %c0_i32_1 = arith.constant 0 : i32
    return %c0_i32, %c0_i32_0 : i32, i32
  }
  func.func @transform_7(%arg0: i32) -> (i32, i32) {
    %c0_i32 = arith.constant 0 : i32
    %c0_i32_0 = arith.constant 0 : i32
    %c0_i32_1 = arith.constant 0 : i32
    return %c0_i32, %c0_i32_0 : i32, i32
  }
  func.func @transform_8(%arg0: i32) -> (i32, i32) {
    %c0_i32 = arith.constant 0 : i32
    %c0_i32_0 = arith.constant 0 : i32
    %c0_i32_1 = arith.constant 0 : i32
    return %c0_i32, %c0_i32_0 : i32, i32
  }
  func.func @transform_9(%arg0: i32) -> (i32, i32) {
    %c0_i32 = arith.constant 0 : i32
    %c0_i32_0 = arith.constant 0 : i32
    %c0_i32_1 = arith.constant 0 : i32
    return %c0_i32, %c0_i32_0 : i32, i32
  }
  func.func @transform_10(%arg0: i32) -> (i32, i32) {
    %c0_i32 = arith.constant 0 : i32
    %c0_i32_0 = arith.constant 0 : i32
    %c0_i32_1 = arith.constant 0 : i32
    return %c0_i32, %c0_i32_0 : i32, i32
  }
  func.func @transform_11(%arg0: i32) -> (i32, i32) {
    %c0_i32 = arith.constant 0 : i32
    %c0_i32_0 = arith.constant 0 : i32
    %c0_i32_1 = arith.constant 0 : i32
    return %c0_i32, %c0_i32_0 : i32, i32
  }
  func.func @transform_12(%arg0: i32) -> (i32, i32, i32) {
    %c0_i32 = arith.constant 0 : i32
    %c0_i32_0 = arith.constant 0 : i32
    %c0_i32_1 = arith.constant 0 : i32
    return %arg0, %c0_i32, %c0_i32_0 : i32, i32, i32
  }
}

</mosaic_0001>

<llo_original>
// kernel: forward.1
$region0: #{forward.1}
  #allocation0 [shape = 'u32[]', space=smem, size = 0x4, offset = 0x4, fixed_abs, tag = 'smem constant byte address 0x4 - core index']
  #allocation1 [shape = 'u32[72,128]{1,0:T(1,128)}', space=vmem, size = 0x9000, scoped, tag = 'internal scratch']
  %s0 = inlined_call_operand.vmem [shape: f32[2,25,2560], index: 0, kind: input, shape index: {}]
  %s1 = inlined_call_operand.vmem [shape: f32[6,25], index: 1, kind: input, shape index: {}]
  %s2 = inlined_call_operand.vmem [shape: f32[6,3], index: 2, kind: input, shape index: {}]
  %s3 = inlined_call_operand.vmem [shape: f32[16,150], index: 3, kind: input, shape index: {}]
  %s4 = inlined_call_operand.vmem [shape: f32[16,3], index: 4, kind: input, shape index: {}]
  %s5 = inlined_call_operand.vmem [shape: f32[64,64], index: 5, kind: input, shape index: {}]
  %s6 = inlined_call_operand.vmem [shape: f32[256,120], index: 6, kind: input, shape index: {}]
  %s7 = inlined_call_operand.vmem [shape: f32[3,120], index: 7, kind: input, shape index: {}]
  %s8 = inlined_call_operand.vmem [shape: f32[120,84], index: 8, kind: input, shape index: {}]
  %s9 = inlined_call_operand.vmem [shape: f32[3,84], index: 9, kind: input, shape index: {}]
  %s10 = inlined_call_operand.vmem [shape: f32[84,10], index: 10, kind: input, shape index: {}]
  %s11 = inlined_call_operand.vmem [shape: f32[1,10], index: 11, kind: input, shape index: {}]
  %s12 = inlined_call_operand.hbm [shape: f32[2,4,10], index: 12, kind: output, shape index: {}]
  %s13 = sld [smem:[#allocation0]]
  $region81: #{forward.1} parent=0
    _
  %s15 = ssub.s32 1, %s13
  %s16 = scalar_select 0, %s15, %s13
  $region1: #{forward.1} parent=0
    #allocation2 [shape = 'u8[4096]{0}', space=vmem, size = 0x1000, scoped, tag = 'output window, operand 0']
    #allocation3 [shape = 's32[2]{0}', space=sflag, size = 0x8, scoped, tag = 'scoped memory for forward.1']
    %17 = vsyncpa [#allocation3], 0
    %s18 = scalar_lea.sflag [#allocation3], 1
    %19 = vsyncpa %s18, 0
    loop: start=0, step=1, limit=4
    $region2: #{forward.1} parent=1 // loop_pre_header
      _
    $region3: #{forward.1} parent=1 // loop_header
      %s21 = sphi 0, %s25
      %p22 = scmp.ge.s32.totalorder %s21, 4
      %s31 = sphi 0, %s33
      %s34 = sphi 0, %s31
      %s35 = sphi 0, %s34
      %s51 = sphi 0, %s35
      %s55 = sphi 0, %s55
      %s57 = sphi 0, %s55
      %s58 = sphi 0, %s57
      %s72 = sphi 0, %s58
      %s76 = sphi 0, %s76
      %s78 = sphi 0, %s76
      %s79 = sphi 0, %s78
      %s93 = sphi 0, %s79
      %s97 = sphi 0, %s97
      %s99 = sphi 0, %s97
      %s100 = sphi 0, %s99
      %s114 = sphi 0, %s100
      %s118 = sphi 0, %s118
      %s120 = sphi 0, %s118
      %s121 = sphi 0, %s120
      %s135 = sphi 0, %s121
      %s139 = sphi 0, %s139
      %s141 = sphi 0, %s139
      %s142 = sphi 0, %s141
      %s156 = sphi 0, %s142
      %s160 = sphi 0, %s160
      %s162 = sphi 0, %s160
      %s163 = sphi 0, %s162
      %s177 = sphi 0, %s163
      %s181 = sphi 0, %s181
      %s183 = sphi 0, %s181
      %s184 = sphi 0, %s183
      %s198 = sphi 0, %s184
      %s202 = sphi 0, %s202
      %s204 = sphi 0, %s202
      %s205 = sphi 0, %s204
      %s219 = sphi 0, %s205
      %s223 = sphi 0, %s223
      %s225 = sphi 0, %s223
      %s226 = sphi 0, %s225
      %s240 = sphi 0, %s226
      %s244 = sphi 0, %s244
      %s246 = sphi 0, %s244
      %s247 = sphi 0, %s246
      %s261 = sphi 0, %s247
      %s265 = sphi 0, %s265
      %s267 = sphi 0, %s265
      %s268 = sphi 0, %s267
      %s282 = sphi 0, %s268
      %s288 = sphi 0, %s290
      %s291 = sphi 0, %s288
      %s292 = sphi 0, %s291
      %s308 = sphi 0, %s292
    $region4: #{forward.1} parent=1 // loop_header_branch
      %24 = sbr.rel (%p22) target = $region8
    $region5: #{forward.1} parent=1 // loop_body
      %s26 = ssub.s32 %s21, 1
      %s27 = ssub.s32 %s21, 2
      %s28 = sadd.s32 %s21, 1
      %s29 = ssub.s32 %s21, %s28
      %p30 = scmp.eq.s32.totalorder %s29, 0
      %s32 = sadd.s32 %s31, 1
      %s33 = scalar_select %p30, %s31, %s32
      %p36 = pneg %p30
      %p37 = scmp.eq.s32.totalorder %s21, 1
      %p38 = por %p36, %p37
      %p39 = scmp.ne.s32.totalorder %s31, %s34
      %p40 = scmp.eq.s32.totalorder %s21, 0
      %p41 = por %p39, %p40
      %p42 = scmp.ne.s32.totalorder %s31, %s34
      %p43 = scmp.eq.s32.totalorder %s26, 1
      %p44 = por %p42, %p43
      %p45 = scmp.ne.s32.totalorder %s34, %s35
      %p46 = scmp.eq.s32.totalorder %s26, 0
      %p47 = por %p45, %p46
      %p48 = scmp.ne.s32.totalorder %s34, %s35
      %p49 = scmp.eq.s32.totalorder %s27, 1
      %p50 = por %p48, %p49
      %p52 = scmp.ne.s32.totalorder %s35, %s51
      %p53 = scmp.eq.s32.totalorder %s27, 0
      %p54 = por %p52, %p53
      %s56 = sadd.s32 %s55, 1
      %p59 = scmp.eq.s32.totalorder %s21, 1
      %p60 = scmp.ne.s32.totalorder %s55, %s57
      %p61 = scmp.eq.s32.totalorder %s21, 0
      %p62 = por %p60, %p61
      %p63 = scmp.ne.s32.totalorder %s55, %s57
      %p64 = scmp.eq.s32.totalorder %s26, 1
      %p65 = por %p63, %p64
      %p66 = scmp.ne.s32.totalorder %s57, %s58
      %p67 = scmp.eq.s32.totalorder %s26, 0
      %p68 = por %p66, %p67
      %p69 = scmp.ne.s32.totalorder %s57, %s58
      %p70 = scmp.eq.s32.totalorder %s27, 1
      %p71 = por %p69, %p70
      %p73 = scmp.ne.s32.totalorder %s58, %s72
      %p74 = scmp.eq.s32.totalorder %s27, 0
      %p75 = por %p73, %p74
      %s77 = sadd.s32 %s76, 1
      %p80 = scmp.eq.s32.totalorder %s21, 1
      %p81 = scmp.ne.s32.totalorder %s76, %s78
      %p82 = scmp.eq.s32.totalorder %s21, 0
      %p83 = por %p81, %p82
      %p84 = scmp.ne.s32.totalorder %s76, %s78
      %p85 = scmp.eq.s32.totalorder %s26, 1
      %p86 = por %p84, %p85
      %p87 = scmp.ne.s32.totalorder %s78, %s79
      %p88 = scmp.eq.s32.totalorder %s26, 0
      %p89 = por %p87, %p88
      %p90 = scmp.ne.s32.totalorder %s78, %s79
      %p91 = scmp.eq.s32.totalorder %s27, 1
      %p92 = por %p90, %p91
      %p94 = scmp.ne.s32.totalorder %s79, %s93
      %p95 = scmp.eq.s32.totalorder %s27, 0
      %p96 = por %p94, %p95
      %s98 = sadd.s32 %s97, 1
      %p101 = scmp.eq.s32.totalorder %s21, 1
      %p102 = scmp.ne.s32.totalorder %s97, %s99
      %p103 = scmp.eq.s32.totalorder %s21, 0
      %p104 = por %p102, %p103
      %p105 = scmp.ne.s32.totalorder %s97, %s99
      %p106 = scmp.eq.s32.totalorder %s26, 1
      %p107 = por %p105, %p106
      %p108 = scmp.ne.s32.totalorder %s99, %s100
      %p109 = scmp.eq.s32.totalorder %s26, 0
      %p110 = por %p108, %p109
      %p111 = scmp.ne.s32.totalorder %s99, %s100
      %p112 = scmp.eq.s32.totalorder %s27, 1
      %p113 = por %p111, %p112
      %p115 = scmp.ne.s32.totalorder %s100, %s114
      %p116 = scmp.eq.s32.totalorder %s27, 0
      %p117 = por %p115, %p116
      %s119 = sadd.s32 %s118, 1
      %p122 = scmp.eq.s32.totalorder %s21, 1
      %p123 = scmp.ne.s32.totalorder %s118, %s120
      %p124 = scmp.eq.s32.totalorder %s21, 0
      %p125 = por %p123, %p124
      %p126 = scmp.ne.s32.totalorder %s118, %s120
      %p127 = scmp.eq.s32.totalorder %s26, 1
      %p128 = por %p126, %p127
      %p129 = scmp.ne.s32.totalorder %s120, %s121
      %p130 = scmp.eq.s32.totalorder %s26, 0
      %p131 = por %p129, %p130
      %p132 = scmp.ne.s32.totalorder %s120, %s121
      %p133 = scmp.eq.s32.totalorder %s27, 1
      %p134 = por %p132, %p133
      %p136 = scmp.ne.s32.totalorder %s121, %s135
      %p137 = scmp.eq.s32.totalorder %s27, 0
      %p138 = por %p136, %p137
      %s140 = sadd.s32 %s139, 1
      %p143 = scmp.eq.s32.totalorder %s21, 1
      %p144 = scmp.ne.s32.totalorder %s139, %s141
      %p145 = scmp.eq.s32.totalorder %s21, 0
      %p146 = por %p144, %p145
      %p147 = scmp.ne.s32.totalorder %s139, %s141
      %p148 = scmp.eq.s32.totalorder %s26, 1
      %p149 = por %p147, %p148
      %p150 = scmp.ne.s32.totalorder %s141, %s142
      %p151 = scmp.eq.s32.totalorder %s26, 0
      %p152 = por %p150, %p151
      %p153 = scmp.ne.s32.totalorder %s141, %s142
      %p154 = scmp.eq.s32.totalorder %s27, 1
      %p155 = por %p153, %p154
      %p157 = scmp.ne.s32.totalorder %s142, %s156
      %p158 = scmp.eq.s32.totalorder %s27, 0
      %p159 = por %p157, %p158
      %s161 = sadd.s32 %s160, 1
      %p164 = scmp.eq.s32.totalorder %s21, 1
      %p165 = scmp.ne.s32.totalorder %s160, %s162
      %p166 = scmp.eq.s32.totalorder %s21, 0
      %p167 = por %p165, %p166
      %p168 = scmp.ne.s32.totalorder %s160, %s162
      %p169 = scmp.eq.s32.totalorder %s26, 1
      %p170 = por %p168, %p169
      %p171 = scmp.ne.s32.totalorder %s162, %s163
      %p172 = scmp.eq.s32.totalorder %s26, 0
      %p173 = por %p171, %p172
      %p174 = scmp.ne.s32.totalorder %s162, %s163
      %p175 = scmp.eq.s32.totalorder %s27, 1
      %p176 = por %p174, %p175
      %p178 = scmp.ne.s32.totalorder %s163, %s177
      %p179 = scmp.eq.s32.totalorder %s27, 0
      %p180 = por %p178, %p179
      %s182 = sadd.s32 %s181, 1
      %p185 = scmp.eq.s32.totalorder %s21, 1
      %p186 = scmp.ne.s32.totalorder %s181, %s183
      %p187 = scmp.eq.s32.totalorder %s21, 0
      %p188 = por %p186, %p187
      %p189 = scmp.ne.s32.totalorder %s181, %s183
      %p190 = scmp.eq.s32.totalorder %s26, 1
      %p191 = por %p189, %p190
      %p192 = scmp.ne.s32.totalorder %s183, %s184
      %p193 = scmp.eq.s32.totalorder %s26, 0
      %p194 = por %p192, %p193
      %p195 = scmp.ne.s32.totalorder %s183, %s184
      %p196 = scmp.eq.s32.totalorder %s27, 1
      %p197 = por %p195, %p196
      %p199 = scmp.ne.s32.totalorder %s184, %s198
      %p200 = scmp.eq.s32.totalorder %s27, 0
      %p201 = por %p199, %p200
      %s203 = sadd.s32 %s202, 1
      %p206 = scmp.eq.s32.totalorder %s21, 1
      %p207 = scmp.ne.s32.totalorder %s202, %s204
      %p208 = scmp.eq.s32.totalorder %s21, 0
      %p209 = por %p207, %p208
      %p210 = scmp.ne.s32.totalorder %s202, %s204
      %p211 = scmp.eq.s32.totalorder %s26, 1
      %p212 = por %p210, %p211
      %p213 = scmp.ne.s32.totalorder %s204, %s205
      %p214 = scmp.eq.s32.totalorder %s26, 0
      %p215 = por %p213, %p214
      %p216 = scmp.ne.s32.totalorder %s204, %s205
      %p217 = scmp.eq.s32.totalorder %s27, 1
      %p218 = por %p216, %p217
      %p220 = scmp.ne.s32.totalorder %s205, %s219
      %p221 = scmp.eq.s32.totalorder %s27, 0
      %p222 = por %p220, %p221
      %s224 = sadd.s32 %s223, 1
      %p227 = scmp.eq.s32.totalorder %s21, 1
      %p228 = scmp.ne.s32.totalorder %s223, %s225
      %p229 = scmp.eq.s32.totalorder %s21, 0
      %p230 = por %p228, %p229
      %p231 = scmp.ne.s32.totalorder %s223, %s225
      %p232 = scmp.eq.s32.totalorder %s26, 1
      %p233 = por %p231, %p232
      %p234 = scmp.ne.s32.totalorder %s225, %s226
      %p235 = scmp.eq.s32.totalorder %s26, 0
      %p236 = por %p234, %p235
      %p237 = scmp.ne.s32.totalorder %s225, %s226
      %p238 = scmp.eq.s32.totalorder %s27, 1
      %p239 = por %p237, %p238
      %p241 = scmp.ne.s32.totalorder %s226, %s240
      %p242 = scmp.eq.s32.totalorder %s27, 0
      %p243 = por %p241, %p242
      %s245 = sadd.s32 %s244, 1
      %p248 = scmp.eq.s32.totalorder %s21, 1
      %p249 = scmp.ne.s32.totalorder %s244, %s246
      %p250 = scmp.eq.s32.totalorder %s21, 0
      %p251 = por %p249, %p250
      %p252 = scmp.ne.s32.totalorder %s244, %s246
      %p253 = scmp.eq.s32.totalorder %s26, 1
      %p254 = por %p252, %p253
      %p255 = scmp.ne.s32.totalorder %s246, %s247
      %p256 = scmp.eq.s32.totalorder %s26, 0
      %p257 = por %p255, %p256
      %p258 = scmp.ne.s32.totalorder %s246, %s247
      %p259 = scmp.eq.s32.totalorder %s27, 1
      %p260 = por %p258, %p259
      %p262 = scmp.ne.s32.totalorder %s247, %s261
      %p263 = scmp.eq.s32.totalorder %s27, 0
      %p264 = por %p262, %p263
      %s266 = sadd.s32 %s265, 1
      %p269 = scmp.eq.s32.totalorder %s21, 1
      %p270 = scmp.ne.s32.totalorder %s265, %s267
      %p271 = scmp.eq.s32.totalorder %s21, 0
      %p272 = por %p270, %p271
      %p273 = scmp.ne.s32.totalorder %s265, %s267
      %p274 = scmp.eq.s32.totalorder %s26, 1
      %p275 = por %p273, %p274
      %p276 = scmp.ne.s32.totalorder %s267, %s268
      %p277 = scmp.eq.s32.totalorder %s26, 0
      %p278 = por %p276, %p277
      %p279 = scmp.ne.s32.totalorder %s267, %s268
      %p280 = scmp.eq.s32.totalorder %s27, 1
      %p281 = por %p279, %p280
      %p283 = scmp.ne.s32.totalorder %s268, %s282
      %p284 = scmp.eq.s32.totalorder %s27, 0
      %p285 = por %p283, %p284
      %s286 = ssub.s32 %s21, %s28
      %p287 = scmp.eq.s32.totalorder %s286, 0
      %s289 = sadd.s32 %s288, 1
      %s290 = scalar_select %p287, %s288, %s289
      %p293 = pneg %p287
      %p294 = scmp.eq.s32.totalorder %s21, 1
      %p295 = por %p293, %p294
      %p296 = scmp.ne.s32.totalorder %s288, %s291
      %p297 = scmp.eq.s32.totalorder %s21, 0
      %p298 = por %p296, %p297
      %p299 = scmp.ne.s32.totalorder %s288, %s291
      %p300 = scmp.eq.s32.totalorder %s26, 1
      %p301 = por %p299, %p300
      %p302 = scmp.ne.s32.totalorder %s291, %s292
      %p303 = scmp.eq.s32.totalorder %s26, 0
      %p304 = por %p302, %p303
      %p305 = scmp.ne.s32.totalorder %s291, %s292
      %p306 = scmp.eq.s32.totalorder %s27, 1
      %p307 = por %p305, %p306
      %p309 = scmp.ne.s32.totalorder %s292, %s308
      %p310 = scmp.eq.s32.totalorder %s27, 0
      %p311 = por %p309, %p310
      %p312 = scmp.le.s32.totalorder 1, %s21
      %p313 = scmp.lt.s32.totalorder %s21, 3
      %p314 = pnand %p312, %p313
      %p315 = pneg %p314
      // Predicated region
      $region9: #{forward.1} parent=5 // pred_check
        _
      $region10: #{forward.1} parent=5 // pred_check_branch
        %317 = sbr.rel (%p314) target = $region12
      $region11: #{forward.1} parent=5 // pred_region
        %s318 = ssub.s32 %s21, 1
        // Predicated region
        $region13: #{forward.1} parent=11 // pred_check
          %p319 = pneg %p68
        $region14: #{forward.1} parent=11 // pred_check_branch
          %321 = sbr.rel (%p319) target = $region16
        $region15: #{forward.1} parent=11 // pred_region
          _
        $region16: #{forward.1} parent=11 // pred_fallthru
          _
        // Predicated region
        $region17: #{forward.1} parent=11 // pred_check
          %p322 = pneg %p89
        $region18: #{forward.1} parent=11 // pred_check_branch
          %324 = sbr.rel (%p322) target = $region20
        $region19: #{forward.1} parent=11 // pred_region
          _
        $region20: #{forward.1} parent=11 // pred_fallthru
          _
        // Predicated region
        $region21: #{forward.1} parent=11 // pred_check
          %p325 = pneg %p110
        $region22: #{forward.1} parent=11 // pred_check_branch
          %327 = sbr.rel (%p325) target = $region24
        $region23: #{forward.1} parent=11 // pred_region
          _
        $region24: #{forward.1} parent=11 // pred_fallthru
          _
        // Predicated region
        $region25: #{forward.1} parent=11 // pred_check
          %p328 = pneg %p131
        $region26: #{forward.1} parent=11 // pred_check_branch
          %330 = sbr.rel (%p328) target = $region28
        $region27: #{forward.1} parent=11 // pred_region
          _
        $region28: #{forward.1} parent=11 // pred_fallthru
          _
        // Predicated region
        $region29: #{forward.1} parent=11 // pred_check
          %p331 = pneg %p152
        $region30: #{forward.1} parent=11 // pred_check_branch
          %333 = sbr.rel (%p331) target = $region32
        $region31: #{forward.1} parent=11 // pred_region
          _
        $region32: #{forward.1} parent=11 // pred_fallthru
          _
        // Predicated region
        $region33: #{forward.1} parent=11 // pred_check
          %p334 = pneg %p173
        $region34: #{forward.1} parent=11 // pred_check_branch
          %336 = sbr.rel (%p334) target = $region36
        $region35: #{forward.1} parent=11 // pred_region
          _
        $region36: #{forward.1} parent=11 // pred_fallthru
          _
        // Predicated region
        $region37: #{forward.1} parent=11 // pred_check
          %p337 = pneg %p194
        $region38: #{forward.1} parent=11 // pred_check_branch
          %339 = sbr.rel (%p337) target = $region40
        $region39: #{forward.1} parent=11 // pred_region
          _
        $region40: #{forward.1} parent=11 // pred_fallthru
          _
        // Predicated region
        $region41: #{forward.1} parent=11 // pred_check
          %p340 = pneg %p215
        $region42: #{forward.1} parent=11 // pred_check_branch
          %342 = sbr.rel (%p340) target = $region44
        $region43: #{forward.1} parent=11 // pred_region
          _
        $region44: #{forward.1} parent=11 // pred_fallthru
          _
        // Predicated region
        $region45: #{forward.1} parent=11 // pred_check
          %p343 = pneg %p236
        $region46: #{forward.1} parent=11 // pred_check_branch
          %345 = sbr.rel (%p343) target = $region48
        $region47: #{forward.1} parent=11 // pred_region
          _
        $region48: #{forward.1} parent=11 // pred_fallthru
          _
        // Predicated region
        $region49: #{forward.1} parent=11 // pred_check
          %p346 = pneg %p257
        $region50: #{forward.1} parent=11 // pred_check_branch
          %348 = sbr.rel (%p346) target = $region52
        $region51: #{forward.1} parent=11 // pred_region
          _
        $region52: #{forward.1} parent=11 // pred_fallthru
          _
        // Predicated region
        $region53: #{forward.1} parent=11 // pred_check
          %p349 = pneg %p278
        $region54: #{forward.1} parent=11 // pred_check_branch
          %351 = sbr.rel (%p349) target = $region56
        $region55: #{forward.1} parent=11 // pred_region
          _
        $region56: #{forward.1} parent=11 // pred_fallthru
          _
      $region12: #{forward.1} parent=5 // pred_fallthru
        _
      %p352 = scmp.lt.s32.totalorder %s21, 2
      // Predicated region
      $region57: #{forward.1} parent=5 // pred_check
        %p353 = pneg %p352
      $region58: #{forward.1} parent=5 // pred_check_branch
        %355 = sbr.rel (%p353) target = $region60
      $region59: #{forward.1} parent=5 // pred_region
        // Predicated region
        $region61: #{forward.1} parent=59 // pred_check
          %p356 = pneg %p41
        $region62: #{forward.1} parent=59 // pred_check_branch
          %358 = sbr.rel (%p356) target = $region64
        $region63: #{forward.1} parent=59 // pred_region
          %p359 = scmp.lt.s32.totalorder %s21, 1
          %s360 = scalar_select %p359, %s21, 1
          %s361 = smul.addr %s360, 80
          %s362 = smul.addr %s361, 8
          %s363 = scalar_lea.vmem %s0, %s362
        $region64: #{forward.1} parent=59 // pred_fallthru
          _
      $region60: #{forward.1} parent=5 // pred_fallthru
        _
      %p364 = scmp.le.s32.totalorder 1, %s21
      %p365 = scmp.lt.s32.totalorder %s21, 3
      %p366 = pnand %p364, %p365
      %p367 = pneg %p366
      // Predicated region
      $region65: #{forward.1} parent=5 // pred_check
        _
      $region66: #{forward.1} parent=5 // pred_check_branch
        %369 = sbr.rel (%p366) target = $region68
      $region67: #{forward.1} parent=5 // pred_region
        %s370 = ssub.s32 %s21, 1
        %p371 = scmp.lt.s32.totalorder %s26, 1
        %s372 = scalar_select %p371, %s26, 1
        %s373 = smul.addr %s372, 80
        %s374 = smul.addr %s373, 8
        %s375 = scalar_lea.vmem %s0, %s374
        %p376 = pneg %p47
        %p377 = pneg %p44
        %p378 = pneg %p68
        %p379 = pneg %p65
        %p380 = pneg %p89
        %p381 = pneg %p86
        %p382 = pneg %p110
        %p383 = pneg %p107
        %p384 = pneg %p131
        %p385 = pneg %p128
        %p386 = pneg %p152
        %p387 = pneg %p149
        %p388 = pneg %p173
        %p389 = pneg %p170
        %p390 = pneg %p194
        %p391 = pneg %p191
        %p392 = pneg %p215
        %p393 = pneg %p212
        %p394 = pneg %p236
        %p395 = pneg %p233
        %p396 = pneg %p257
        %p397 = pneg %p254
        %p398 = pneg %p278
        %p399 = pneg %p275
        %p400 = pneg %p304
        %p401 = pneg %p301
        %s402 = sand.u32 %s291, 1
        %s403 = scalar_lea.sflag [#allocation3], %s402
        %s404 = sand.u32 %s291, 1
        %s405 = smul.addr %s404, 4
        %s406 = scalar_lea.vmem [#allocation2], %s405
        %p407 = scmp.lt.s32.totalorder %s26, 1
        %s408 = scalar_select %p407, %s26, 1
        %s409 = smul.addr %s408, 80
        %s410 = smul.addr %s409, 8
        %s411 = scalar_lea.vmem %s0, %s410
        %v412 = vld [vmem:[%s411] sm:$0xff]
        %v413 = vld [vmem:[%s411 + $0x8] sm:$0xff]
        %v414 = vld [vmem:[%s411 + $0x10] sm:$0xff]
        %v415 = vld [vmem:[%s411 + $0x18] sm:$0xff]
        %v416 = vld [vmem:[%s411 + $0x20] sm:$0xff]
        %v417 = vld [vmem:[%s411 + $0x28] sm:$0xff]
        %v418 = vld [vmem:[%s411 + $0x30] sm:$0xff]
        %v419 = vld [vmem:[%s411 + $0x38] sm:$0xff]
        %v420 = vld [vmem:[%s411 + $0x40] sm:$0xff]
        %v421 = vld [vmem:[%s411 + $0x48] sm:$0xff]
        %v422 = vld [vmem:[%s411 + $0x50] sm:$0xff]
        %v423 = vld [vmem:[%s411 + $0x58] sm:$0xff]
        %v424 = vld [vmem:[%s411 + $0x60] sm:$0xff]
        %v425 = vld [vmem:[%s411 + $0x68] sm:$0xff]
        %v426 = vld [vmem:[%s411 + $0x70] sm:$0xff]
        %v427 = vld [vmem:[%s411 + $0x78] sm:$0xff]
        %v428 = vld [vmem:[%s411 + $0x80] sm:$0xff]
        %v429 = vld [vmem:[%s411 + $0x88] sm:$0xff]
        %v430 = vld [vmem:[%s411 + $0x90] sm:$0xff]
        %v431 = vld [vmem:[%s411 + $0x98] sm:$0xff]
        %v432 = vld [vmem:[%s411 + $0xa0] sm:$0xff]
        %v433 = vld [vmem:[%s411 + $0xa8] sm:$0xff]
        %v434 = vld [vmem:[%s411 + $0xb0] sm:$0xff]
        %v435 = vld [vmem:[%s411 + $0xb8] sm:$0xff]
        %v436 = vld [vmem:[%s411 + $0xc0] sm:$0xff]
        %v437 = vld [vmem:[%s411 + $0xc8] sm:$0xff]
        %v438 = vld [vmem:[%s411 + $0xd0] sm:$0xff]
        %v439 = vld [vmem:[%s411 + $0xd8] sm:$0xff]
        %v440 = vld [vmem:[%s411 + $0xe0] sm:$0xff]
        %v441 = vld [vmem:[%s411 + $0xe8] sm:$0xff]
        %v442 = vld [vmem:[%s411 + $0xf0] sm:$0xff]
        %v443 = vld [vmem:[%s411 + $0xf8] sm:$0xff]
        %v444 = vld [vmem:[%s411 + $0x100] sm:$0xff]
        %v445 = vld [vmem:[%s411 + $0x108] sm:$0xff]
        %v446 = vld [vmem:[%s411 + $0x110] sm:$0xff]
        %v447 = vld [vmem:[%s411 + $0x118] sm:$0xff]
        %v448 = vld [vmem:[%s411 + $0x120] sm:$0xff]
        %v449 = vld [vmem:[%s411 + $0x128] sm:$0xff]
        %v450 = vld [vmem:[%s411 + $0x130] sm:$0xff]
        %v451 = vld [vmem:[%s411 + $0x138] sm:$0xff]
        %v452 = vld [vmem:[%s411 + $0x140] sm:$0xff]
        %v453 = vld [vmem:[%s411 + $0x148] sm:$0xff]
        %v454 = vld [vmem:[%s411 + $0x150] sm:$0xff]
        %v455 = vld [vmem:[%s411 + $0x158] sm:$0xff]
        %v456 = vld [vmem:[%s411 + $0x160] sm:$0xff]
        %v457 = vld [vmem:[%s411 + $0x168] sm:$0xff]
        %v458 = vld [vmem:[%s411 + $0x170] sm:$0xff]
        %v459 = vld [vmem:[%s411 + $0x178] sm:$0xff]
        %v460 = vld [vmem:[%s411 + $0x180] sm:$0xff]
        %v461 = vld [vmem:[%s411 + $0x188] sm:$0xff]
        %v462 = vld [vmem:[%s411 + $0x190] sm:$0xff]
        %v463 = vld [vmem:[%s411 + $0x198] sm:$0xff]
        %v464 = vld [vmem:[%s411 + $0x1a0] sm:$0xff]
        %v465 = vld [vmem:[%s411 + $0x1a8] sm:$0xff]
        %v466 = vld [vmem:[%s411 + $0x1b0] sm:$0xff]
        %v467 = vld [vmem:[%s411 + $0x1b8] sm:$0xff]
        %v468 = vld [vmem:[%s411 + $0x1c0] sm:$0xff]
        %v469 = vld [vmem:[%s411 + $0x1c8] sm:$0xff]
        %v470 = vld [vmem:[%s411 + $0x1d0] sm:$0xff]
        %v471 = vld [vmem:[%s411 + $0x1d8] sm:$0xff]
        %v472 = vld [vmem:[%s411 + $0x1e0] sm:$0x1]
        %v473 = vld [vmem:[%s411 + $0x1e8] sm:$0x1]
        %v474 = vld [vmem:[%s411 + $0x1f0] sm:$0x1]
        %v475 = vld [vmem:[%s411 + $0x1f8] sm:$0x1]
        %v476 = vld [vmem:[%s411 + $0x200] sm:$0x1]
        %v477 = vld [vmem:[%s411 + $0x208] sm:$0x1]
        %v478 = vld [vmem:[%s411 + $0x210] sm:$0x1]
        %v479 = vld [vmem:[%s411 + $0x218] sm:$0x1]
        %v480 = vld [vmem:[%s411 + $0x220] sm:$0x1]
        %v481 = vld [vmem:[%s411 + $0x228] sm:$0x1]
        %v482 = vld [vmem:[%s411 + $0x230] sm:$0x1]
        %v483 = vld [vmem:[%s411 + $0x238] sm:$0x1]
        %v484 = vld [vmem:[%s411 + $0x240] sm:$0x1]
        %v485 = vld [vmem:[%s411 + $0x248] sm:$0x1]
        %v486 = vld [vmem:[%s411 + $0x250] sm:$0x1]
        %v487 = vld [vmem:[%s411 + $0x258] sm:$0x1]
        %v488 = vld [vmem:[%s411 + $0x260] sm:$0x1]
        %v489 = vld [vmem:[%s411 + $0x268] sm:$0x1]
        %v490 = vld [vmem:[%s411 + $0x270] sm:$0x1]
        %v491 = vld [vmem:[%s411 + $0x278] sm:$0x1]
        %v492 = vld [vmem:[%s1] sm:$0x3f]
        %vm493 = vcmask 203776
        %v495 = vsel %vm493, %v492, 0
        %vm497 = vcmask 1040384
        %v499 = vsel %vm497, %v472, 0
        %v502 = vsel %vm497, %v473, 0
        %v505 = vsel %vm497, %v474, 0
        %v508 = vsel %vm497, %v475, 0
        %v511 = vsel %vm497, %v476, 0
        %v514 = vsel %vm497, %v477, 0
        %v517 = vsel %vm497, %v478, 0
        %v520 = vsel %vm497, %v479, 0
        %v523 = vsel %vm497, %v480, 0
        %v526 = vsel %vm497, %v481, 0
        %v529 = vsel %vm497, %v482, 0
        %v532 = vsel %vm497, %v483, 0
        %v535 = vsel %vm497, %v484, 0
        %v538 = vsel %vm497, %v485, 0
        %v541 = vsel %vm497, %v486, 0
        %v544 = vsel %vm497, %v487, 0
        %v547 = vsel %vm497, %v488, 0
        %v550 = vsel %vm497, %v489, 0
        %v553 = vsel %vm497, %v490, 0
        %v556 = vsel %vm497, %v491, 0
        %558 = vmatpush.msra.mxu0 0.0
        %559 = vmatpush.msra.mxu0 0.0
        %560 = vmatpush.msra.mxu0 0.0
        %561 = vmatpush.msra.mxu0 0.0
        %562 = vmatpush.msra.mxu0 0.0
        %563 = vmatpush.msra.mxu0 0.0
        %564 = vmatpush.msra.mxu0 0.0
        %565 = vmatpush.msra.mxu0 0.0
        %566 = vmatpush.msra.mxu0 0.0
        %567 = vmatpush.msra.mxu0 0.0
        %568 = vmatpush.msra.mxu0 0.0
        %569 = vmatpush.msra.mxu0 0.0
        %570 = vmatpush.msra.mxu0 %v499
        %571 = vmatpush.msra.mxu0 %v452
        %572 = vmatpush.msra.mxu0 %v432
        %573 = vmatpush.msra.mxu0 %v412
        %574 = vmatmul.f32.gmra.mxu0 %v495
        %v575 = vpop.f32.mrf.mxu0
        %v576 = vadd.f32 0.0, %v575
        %577 = vdwg.mxu0
        %578 = vmatpush.msra.mxu0 0.0
        %579 = vmatpush.msra.mxu0 0.0
        %580 = vmatpush.msra.mxu0 0.0
        %581 = vmatpush.msra.mxu0 0.0
        %582 = vmatpush.msra.mxu0 0.0
        %583 = vmatpush.msra.mxu0 0.0
        %584 = vmatpush.msra.mxu0 0.0
        %585 = vmatpush.msra.mxu0 0.0
        %586 = vmatpush.msra.mxu0 0.0
        %587 = vmatpush.msra.mxu0 0.0
        %588 = vmatpush.msra.mxu0 0.0
        %589 = vmatpush.msra.mxu0 0.0
        %590 = vmatpush.msra.mxu0 %v502
        %591 = vmatpush.msra.mxu0 %v453
        %592 = vmatpush.msra.mxu0 %v433
        %593 = vmatpush.msra.mxu0 %v413
        %594 = vmatmul.f32.gmra.mxu0 %v495
        %v595 = vpop.f32.mrf.mxu0
        %v596 = vadd.f32 0.0, %v595
        %597 = vdwg.mxu0
        %598 = vmatpush.msra.mxu0 0.0
        %599 = vmatpush.msra.mxu0 0.0
        %600 = vmatpush.msra.mxu0 0.0
        %601 = vmatpush.msra.mxu0 0.0
        %602 = vmatpush.msra.mxu0 0.0
        %603 = vmatpush.msra.mxu0 0.0
        %604 = vmatpush.msra.mxu0 0.0
        %605 = vmatpush.msra.mxu0 0.0
        %606 = vmatpush.msra.mxu0 0.0
        %607 = vmatpush.msra.mxu0 0.0
        %608 = vmatpush.msra.mxu0 0.0
        %609 = vmatpush.msra.mxu0 0.0
        %610 = vmatpush.msra.mxu0 %v505
        %611 = vmatpush.msra.mxu0 %v454
        %612 = vmatpush.msra.mxu0 %v434
        %613 = vmatpush.msra.mxu0 %v414
        %614 = vmatmul.f32.gmra.mxu0 %v495
        %v615 = vpop.f32.mrf.mxu0
        %v616 = vadd.f32 0.0, %v615
        %617 = vdwg.mxu0
        %618 = vmatpush.msra.mxu0 0.0
        %619 = vmatpush.msra.mxu0 0.0
        %620 = vmatpush.msra.mxu0 0.0
        %621 = vmatpush.msra.mxu0 0.0
        %622 = vmatpush.msra.mxu0 0.0
        %623 = vmatpush.msra.mxu0 0.0
        %624 = vmatpush.msra.mxu0 0.0
        %625 = vmatpush.msra.mxu0 0.0
        %626 = vmatpush.msra.mxu0 0.0
        %627 = vmatpush.msra.mxu0 0.0
        %628 = vmatpush.msra.mxu0 0.0
        %629 = vmatpush.msra.mxu0 0.0
        %630 = vmatpush.msra.mxu0 %v508
        %631 = vmatpush.msra.mxu0 %v455
        %632 = vmatpush.msra.mxu0 %v435
        %633 = vmatpush.msra.mxu0 %v415
        %634 = vmatmul.f32.gmra.mxu0 %v495
        %v635 = vpop.f32.mrf.mxu0
        %v636 = vadd.f32 0.0, %v635
        %637 = vdwg.mxu0
        %638 = vmatpush.msra.mxu0 0.0
        %639 = vmatpush.msra.mxu0 0.0
        %640 = vmatpush.msra.mxu0 0.0
        %641 = vmatpush.msra.mxu0 0.0
        %642 = vmatpush.msra.mxu0 0.0
        %643 = vmatpush.msra.mxu0 0.0
        %644 = vmatpush.msra.mxu0 0.0
        %645 = vmatpush.msra.mxu0 0.0
        %646 = vmatpush.msra.mxu0 0.0
        %647 = vmatpush.msra.mxu0 0.0
        %648 = vmatpush.msra.mxu0 0.0
        %649 = vmatpush.msra.mxu0 0.0
        %650 = vmatpush.msra.mxu0 %v511
        %651 = vmatpush.msra.mxu0 %v456
        %652 = vmatpush.msra.mxu0 %v436
        %653 = vmatpush.msra.mxu0 %v416
        %654 = vmatmul.f32.gmra.mxu0 %v495
        %v655 = vpop.f32.mrf.mxu0
        %v656 = vadd.f32 0.0, %v655
        %657 = vdwg.mxu0
        %658 = vmatpush.msra.mxu0 0.0
        %659 = vmatpush.msra.mxu0 0.0
        %660 = vmatpush.msra.mxu0 0.0
        %661 = vmatpush.msra.mxu0 0.0
        %662 = vmatpush.msra.mxu0 0.0
        %663 = vmatpush.msra.mxu0 0.0
        %664 = vmatpush.msra.mxu0 0.0
        %665 = vmatpush.msra.mxu0 0.0
        %666 = vmatpush.msra.mxu0 0.0
        %667 = vmatpush.msra.mxu0 0.0
        %668 = vmatpush.msra.mxu0 0.0
        %669 = vmatpush.msra.mxu0 0.0
        %670 = vmatpush.msra.mxu0 %v514
        %671 = vmatpush.msra.mxu0 %v457
        %672 = vmatpush.msra.mxu0 %v437
        %673 = vmatpush.msra.mxu0 %v417
        %674 = vmatmul.f32.gmra.mxu0 %v495
        %v675 = vpop.f32.mrf.mxu0
        %v676 = vadd.f32 0.0, %v675
        %677 = vdwg.mxu0
        %678 = vmatpush.msra.mxu0 0.0
        %679 = vmatpush.msra.mxu0 0.0
        %680 = vmatpush.msra.mxu0 0.0
        %681 = vmatpush.msra.mxu0 0.0
        %682 = vmatpush.msra.mxu0 0.0
        %683 = vmatpush.msra.mxu0 0.0
        %684 = vmatpush.msra.mxu0 0.0
        %685 = vmatpush.msra.mxu0 0.0
        %686 = vmatpush.msra.mxu0 0.0
        %687 = vmatpush.msra.mxu0 0.0
        %688 = vmatpush.msra.mxu0 0.0
        %689 = vmatpush.msra.mxu0 0.0
        %690 = vmatpush.msra.mxu0 %v517
        %691 = vmatpush.msra.mxu0 %v458
        %692 = vmatpush.msra.mxu0 %v438
        %693 = vmatpush.msra.mxu0 %v418
        %694 = vmatmul.f32.gmra.mxu0 %v495
        %v695 = vpop.f32.mrf.mxu0
        %v696 = vadd.f32 0.0, %v695
        %697 = vdwg.mxu0
        %698 = vmatpush.msra.mxu0 0.0
        %699 = vmatpush.msra.mxu0 0.0
        %700 = vmatpush.msra.mxu0 0.0
        %701 = vmatpush.msra.mxu0 0.0
        %702 = vmatpush.msra.mxu0 0.0
        %703 = vmatpush.msra.mxu0 0.0
        %704 = vmatpush.msra.mxu0 0.0
        %705 = vmatpush.msra.mxu0 0.0
        %706 = vmatpush.msra.mxu0 0.0
        %707 = vmatpush.msra.mxu0 0.0
        %708 = vmatpush.msra.mxu0 0.0
        %709 = vmatpush.msra.mxu0 0.0
        %710 = vmatpush.msra.mxu0 %v520
        %711 = vmatpush.msra.mxu0 %v459
        %712 = vmatpush.msra.mxu0 %v439
        %713 = vmatpush.msra.mxu0 %v419
        %714 = vmatmul.f32.gmra.mxu0 %v495
        %v715 = vpop.f32.mrf.mxu0
        %v716 = vadd.f32 0.0, %v715
        %717 = vdwg.mxu0
        %718 = vmatpush.msra.mxu0 0.0
        %719 = vmatpush.msra.mxu0 0.0
        %720 = vmatpush.msra.mxu0 0.0
        %721 = vmatpush.msra.mxu0 0.0
        %722 = vmatpush.msra.mxu0 0.0
        %723 = vmatpush.msra.mxu0 0.0
        %724 = vmatpush.msra.mxu0 0.0
        %725 = vmatpush.msra.mxu0 0.0
        %726 = vmatpush.msra.mxu0 0.0
        %727 = vmatpush.msra.mxu0 0.0
        %728 = vmatpush.msra.mxu0 0.0
        %729 = vmatpush.msra.mxu0 0.0
        %730 = vmatpush.msra.mxu0 %v523
        %731 = vmatpush.msra.mxu0 %v460
        %732 = vmatpush.msra.mxu0 %v440
        %733 = vmatpush.msra.mxu0 %v420
        %734 = vmatmul.f32.gmra.mxu0 %v495
        %v735 = vpop.f32.mrf.mxu0
        %v736 = vadd.f32 0.0, %v735
        %737 = vdwg.mxu0
        %738 = vmatpush.msra.mxu0 0.0
        %739 = vmatpush.msra.mxu0 0.0
        %740 = vmatpush.msra.mxu0 0.0
        %741 = vmatpush.msra.mxu0 0.0
        %742 = vmatpush.msra.mxu0 0.0
        %743 = vmatpush.msra.mxu0 0.0
        %744 = vmatpush.msra.mxu0 0.0
        %745 = vmatpush.msra.mxu0 0.0
        %746 = vmatpush.msra.mxu0 0.0
        %747 = vmatpush.msra.mxu0 0.0
        %748 = vmatpush.msra.mxu0 0.0
        %749 = vmatpush.msra.mxu0 0.0
        %750 = vmatpush.msra.mxu0 %v526
        %751 = vmatpush.msra.mxu0 %v461
        %752 = vmatpush.msra.mxu0 %v441
        %753 = vmatpush.msra.mxu0 %v421
        %754 = vmatmul.f32.gmra.mxu0 %v495
        %v755 = vpop.f32.mrf.mxu0
        %v756 = vadd.f32 0.0, %v755
        %757 = vdwg.mxu0
        %758 = vmatpush.msra.mxu0 0.0
        %759 = vmatpush.msra.mxu0 0.0
        %760 = vmatpush.msra.mxu0 0.0
        %761 = vmatpush.msra.mxu0 0.0
        %762 = vmatpush.msra.mxu0 0.0
        %763 = vmatpush.msra.mxu0 0.0
        %764 = vmatpush.msra.mxu0 0.0
        %765 = vmatpush.msra.mxu0 0.0
        %766 = vmatpush.msra.mxu0 0.0
        %767 = vmatpush.msra.mxu0 0.0
        %768 = vmatpush.msra.mxu0 0.0
        %769 = vmatpush.msra.mxu0 0.0
        %770 = vmatpush.msra.mxu0 %v529
        %771 = vmatpush.msra.mxu0 %v462
        %772 = vmatpush.msra.mxu0 %v442
        %773 = vmatpush.msra.mxu0 %v422
        %774 = vmatmul.f32.gmra.mxu0 %v495
        %v775 = vpop.f32.mrf.mxu0
        %v776 = vadd.f32 0.0, %v775
        %777 = vdwg.mxu0
        %778 = vmatpush.msra.mxu0 0.0
        %779 = vmatpush.msra.mxu0 0.0
        %780 = vmatpush.msra.mxu0 0.0
        %781 = vmatpush.msra.mxu0 0.0
        %782 = vmatpush.msra.mxu0 0.0
        %783 = vmatpush.msra.mxu0 0.0
        %784 = vmatpush.msra.mxu0 0.0
        %785 = vmatpush.msra.mxu0 0.0
        %786 = vmatpush.msra.mxu0 0.0
        %787 = vmatpush.msra.mxu0 0.0
        %788 = vmatpush.msra.mxu0 0.0
        %789 = vmatpush.msra.mxu0 0.0
        %790 = vmatpush.msra.mxu0 %v532
        %791 = vmatpush.msra.mxu0 %v463
        %792 = vmatpush.msra.mxu0 %v443
        %793 = vmatpush.msra.mxu0 %v423
        %794 = vmatmul.f32.gmra.mxu0 %v495
        %v795 = vpop.f32.mrf.mxu0
        %v796 = vadd.f32 0.0, %v795
        %797 = vdwg.mxu0
        %798 = vmatpush.msra.mxu0 0.0
        %799 = vmatpush.msra.mxu0 0.0
        %800 = vmatpush.msra.mxu0 0.0
        %801 = vmatpush.msra.mxu0 0.0
        %802 = vmatpush.msra.mxu0 0.0
        %803 = vmatpush.msra.mxu0 0.0
        %804 = vmatpush.msra.mxu0 0.0
        %805 = vmatpush.msra.mxu0 0.0
        %806 = vmatpush.msra.mxu0 0.0
        %807 = vmatpush.msra.mxu0 0.0
        %808 = vmatpush.msra.mxu0 0.0
        %809 = vmatpush.msra.mxu0 0.0
        %810 = vmatpush.msra.mxu0 %v535
        %811 = vmatpush.msra.mxu0 %v464
        %812 = vmatpush.msra.mxu0 %v444
        %813 = vmatpush.msra.mxu0 %v424
        %814 = vmatmul.f32.gmra.mxu0 %v495
        %v815 = vpop.f32.mrf.mxu0
        %v816 = vadd.f32 0.0, %v815
        %817 = vdwg.mxu0
        %818 = vmatpush.msra.mxu0 0.0
        %819 = vmatpush.msra.mxu0 0.0
        %820 = vmatpush.msra.mxu0 0.0
        %821 = vmatpush.msra.mxu0 0.0
        %822 = vmatpush.msra.mxu0 0.0
        %823 = vmatpush.msra.mxu0 0.0
        %824 = vmatpush.msra.mxu0 0.0
        %825 = vmatpush.msra.mxu0 0.0
        %826 = vmatpush.msra.mxu0 0.0
        %827 = vmatpush.msra.mxu0 0.0
        %828 = vmatpush.msra.mxu0 0.0
        %829 = vmatpush.msra.mxu0 0.0
        %830 = vmatpush.msra.mxu0 %v538
        %831 = vmatpush.msra.mxu0 %v465
        %832 = vmatpush.msra.mxu0 %v445
        %833 = vmatpush.msra.mxu0 %v425
        %834 = vmatmul.f32.gmra.mxu0 %v495
        %v835 = vpop.f32.mrf.mxu0
        %v836 = vadd.f32 0.0, %v835
        %837 = vdwg.mxu0
        %838 = vmatpush.msra.mxu0 0.0
        %839 = vmatpush.msra.mxu0 0.0
        %840 = vmatpush.msra.mxu0 0.0
        %841 = vmatpush.msra.mxu0 0.0
        %842 = vmatpush.msra.mxu0 0.0
        %843 = vmatpush.msra.mxu0 0.0
        %844 = vmatpush.msra.mxu0 0.0
        %845 = vmatpush.msra.mxu0 0.0
        %846 = vmatpush.msra.mxu0 0.0
        %847 = vmatpush.msra.mxu0 0.0
        %848 = vmatpush.msra.mxu0 0.0
        %849 = vmatpush.msra.mxu0 0.0
        %850 = vmatpush.msra.mxu0 %v541
        %851 = vmatpush.msra.mxu0 %v466
        %852 = vmatpush.msra.mxu0 %v446
        %853 = vmatpush.msra.mxu0 %v426
        %854 = vmatmul.f32.gmra.mxu0 %v495
        %v855 = vpop.f32.mrf.mxu0
        %v856 = vadd.f32 0.0, %v855
        %857 = vdwg.mxu0
        %858 = vmatpush.msra.mxu0 0.0
        %859 = vmatpush.msra.mxu0 0.0
        %860 = vmatpush.msra.mxu0 0.0
        %861 = vmatpush.msra.mxu0 0.0
        %862 = vmatpush.msra.mxu0 0.0
        %863 = vmatpush.msra.mxu0 0.0
        %864 = vmatpush.msra.mxu0 0.0
        %865 = vmatpush.msra.mxu0 0.0
        %866 = vmatpush.msra.mxu0 0.0
        %867 = vmatpush.msra.mxu0 0.0
        %868 = vmatpush.msra.mxu0 0.0
        %869 = vmatpush.msra.mxu0 0.0
        %870 = vmatpush.msra.mxu0 %v544
        %871 = vmatpush.msra.mxu0 %v467
        %872 = vmatpush.msra.mxu0 %v447
        %873 = vmatpush.msra.mxu0 %v427
        %874 = vmatmul.f32.gmra.mxu0 %v495
        %v875 = vpop.f32.mrf.mxu0
        %v876 = vadd.f32 0.0, %v875
        %877 = vdwg.mxu0
        %878 = vmatpush.msra.mxu0 0.0
        %879 = vmatpush.msra.mxu0 0.0
        %880 = vmatpush.msra.mxu0 0.0
        %881 = vmatpush.msra.mxu0 0.0
        %882 = vmatpush.msra.mxu0 0.0
        %883 = vmatpush.msra.mxu0 0.0
        %884 = vmatpush.msra.mxu0 0.0
        %885 = vmatpush.msra.mxu0 0.0
        %886 = vmatpush.msra.mxu0 0.0
        %887 = vmatpush.msra.mxu0 0.0
        %888 = vmatpush.msra.mxu0 0.0
        %889 = vmatpush.msra.mxu0 0.0
        %890 = vmatpush.msra.mxu0 %v547
        %891 = vmatpush.msra.mxu0 %v468
        %892 = vmatpush.msra.mxu0 %v448
        %893 = vmatpush.msra.mxu0 %v428
        %894 = vmatmul.f32.gmra.mxu0 %v495
        %v895 = vpop.f32.mrf.mxu0
        %v896 = vadd.f32 0.0, %v895
        %897 = vdwg.mxu0
        %898 = vmatpush.msra.mxu0 0.0
        %899 = vmatpush.msra.mxu0 0.0
        %900 = vmatpush.msra.mxu0 0.0
        %901 = vmatpush.msra.mxu0 0.0
        %902 = vmatpush.msra.mxu0 0.0
        %903 = vmatpush.msra.mxu0 0.0
        %904 = vmatpush.msra.mxu0 0.0
        %905 = vmatpush.msra.mxu0 0.0
        %906 = vmatpush.msra.mxu0 0.0
        %907 = vmatpush.msra.mxu0 0.0
        %908 = vmatpush.msra.mxu0 0.0
        %909 = vmatpush.msra.mxu0 0.0
        %910 = vmatpush.msra.mxu0 %v550
        %911 = vmatpush.msra.mxu0 %v469
        %912 = vmatpush.msra.mxu0 %v449
        %913 = vmatpush.msra.mxu0 %v429
        %914 = vmatmul.f32.gmra.mxu0 %v495
        %v915 = vpop.f32.mrf.mxu0
        %v916 = vadd.f32 0.0, %v915
        %917 = vdwg.mxu0
        %918 = vmatpush.msra.mxu0 0.0
        %919 = vmatpush.msra.mxu0 0.0
        %920 = vmatpush.msra.mxu0 0.0
        %921 = vmatpush.msra.mxu0 0.0
        %922 = vmatpush.msra.mxu0 0.0
        %923 = vmatpush.msra.mxu0 0.0
        %924 = vmatpush.msra.mxu0 0.0
        %925 = vmatpush.msra.mxu0 0.0
        %926 = vmatpush.msra.mxu0 0.0
        %927 = vmatpush.msra.mxu0 0.0
        %928 = vmatpush.msra.mxu0 0.0
        %929 = vmatpush.msra.mxu0 0.0
        %930 = vmatpush.msra.mxu0 %v553
        %931 = vmatpush.msra.mxu0 %v470
        %932 = vmatpush.msra.mxu0 %v450
        %933 = vmatpush.msra.mxu0 %v430
        %934 = vmatmul.f32.gmra.mxu0 %v495
        %v935 = vpop.f32.mrf.mxu0
        %v936 = vadd.f32 0.0, %v935
        %937 = vdwg.mxu0
        %938 = vmatpush.msra.mxu0 0.0
        %939 = vmatpush.msra.mxu0 0.0
        %940 = vmatpush.msra.mxu0 0.0
        %941 = vmatpush.msra.mxu0 0.0
        %942 = vmatpush.msra.mxu0 0.0
        %943 = vmatpush.msra.mxu0 0.0
        %944 = vmatpush.msra.mxu0 0.0
        %945 = vmatpush.msra.mxu0 0.0
        %946 = vmatpush.msra.mxu0 0.0
        %947 = vmatpush.msra.mxu0 0.0
        %948 = vmatpush.msra.mxu0 0.0
        %949 = vmatpush.msra.mxu0 0.0
        %950 = vmatpush.msra.mxu0 %v556
        %951 = vmatpush.msra.mxu0 %v471
        %952 = vmatpush.msra.mxu0 %v451
        %953 = vmatpush.msra.mxu0 %v431
        %954 = vmatmul.f32.gmra.mxu0 %v495
        %v955 = vpop.f32.mrf.mxu0
        %v956 = vadd.f32 0.0, %v955
        %957 = vdwg.mxu0
        %v958 = vld [vmem:[%s2] sm:$0x3f]
        %960 = vset.pattern.permute.xlu0 0
        %961 = vperm.xlu0 %960, %v958
        %v962 = vpop.permute.xlu0 %961
        %v964 = vadd.f32 %v576, %v962
        %v965 = vadd.f32 %v596, %v962
        %v966 = vadd.f32 %v616, %v962
        %v967 = vadd.f32 %v636, %v962
        %v968 = vadd.f32 %v656, %v962
        %vm969 = vcmask 1045504
        %v970 = vsel %vm969, %v964, 0.0
        %v971 = vsel %vm969, %v965, 0.0
        %v972 = vadd.f32 %v970, %v971
        %v973 = vsel %vm969, %v966, 0.0
        %v974 = vadd.f32 %v972, %v973
        %v975 = vsel %vm969, %v967, 0.0
        %v976 = vadd.f32 %v974, %v975
        %vm977 = vcmask 521216
        %v978 = vsel %vm977, %v968, 0.0
        %v979 = vadd.f32 %v976, %v978
        %980 = vadd.xlane.f32.xlu0 %v979
        %v981 = vpop.xlane.xlu0 %980
        %v982 = vmul.f32 %v981, 0.0017361111
        %v983 = vmul.f32 %v964, %v964
        %v984 = vmul.f32 %v965, %v965
        %v985 = vmul.f32 %v966, %v966
        %v986 = vmul.f32 %v967, %v967
        %v987 = vmul.f32 %v968, %v968
        %v988 = vsel %vm969, %v983, 0.0
        %v989 = vsel %vm969, %v984, 0.0
        %v990 = vadd.f32 %v988, %v989
        %v991 = vsel %vm969, %v985, 0.0
        %v992 = vadd.f32 %v990, %v991
        %v993 = vsel %vm969, %v986, 0.0
        %v994 = vadd.f32 %v992, %v993
        %v995 = vsel %vm977, %v987, 0.0
        %v996 = vadd.f32 %v994, %v995
        %997 = vadd.xlane.f32.xlu0 %v996
        %v998 = vpop.xlane.xlu0 %997
        %v999 = vmul.f32 %v998, 0.0017361111
        %v1000 = vmul.f32 %v982, %v982
        %v1001 = vsub.f32 %v999, %v1000
        %v1002 = vmax.f32 %v1001, 0.0
        %v1003 = vsub.f32 %v964, %v982
        %v1004 = vsub.f32 %v965, %v982
        %v1005 = vsub.f32 %v966, %v982
        %v1006 = vsub.f32 %v967, %v982
        %v1007 = vsub.f32 %v968, %v982
        %v1008 = vadd.f32 %v1002, 1e-05
        %v1009 = vrsqrt.pop %v1008
        %v1010 = vmul.f32 %v1009, %v1008
        %v1011 = vmul.f32 %v1010, %v1009
        %v1012 = vmul.f32 0.5, %v1011
        %v1013 = vsub.f32 1.5, %v1012
        %v1014 = vmul.f32 %v1009, %v1013
        %vm1015 = vweird.f32 %v1008
        %vm1016 = vweird.f32 %v1009
        %vm1017 = vmor %vm1015, %vm1016
        %v1018 = vsel %vm1017, %v1009, %v1014
        %v1019 = vmul.f32 %v1003, %v1018
        %v1020 = vmul.f32 %v1004, %v1018
        %v1021 = vmul.f32 %v1005, %v1018
        %v1022 = vmul.f32 %v1006, %v1018
        %v1023 = vmul.f32 %v1007, %v1018
        %1024 = vset.pattern.permute.xlu0 1
        %1025 = vperm.xlu0 %1024, %v958
        %v1026 = vpop.permute.xlu0 %1025
        %v1028 = vmul.f32 %v1019, %v1026
        %v1029 = vmul.f32 %v1020, %v1026
        %v1030 = vmul.f32 %v1021, %v1026
        %v1031 = vmul.f32 %v1022, %v1026
        %v1032 = vmul.f32 %v1023, %v1026
        %1033 = vset.pattern.permute.xlu0 2
        %1034 = vperm.xlu0 %1033, %v958
        %v1035 = vpop.permute.xlu0 %1034
        %v1037 = vadd.f32 %v1028, %v1035
        %v1038 = vadd.f32 %v1029, %v1035
        %v1039 = vadd.f32 %v1030, %v1035
        %v1040 = vadd.f32 %v1031, %v1035
        %v1041 = vadd.f32 %v1032, %v1035
        %v1042 = vmax.f32 %v1037, 0.0
        %v1043 = vmax.f32 %v1038, 0.0
        %v1044 = vmax.f32 %v1039, 0.0
        %v1045 = vmax.f32 %v1040, 0.0
        %v1046 = vmax.f32 %v1041, 0.0
        %1049 = vrot.lane.b32.xlu0 %v1043, 112
        %v1050 = vpop.permute.xlu0 %1049
        %1051 = vrot.lane.b32.xlu0 %v1044, 112
        %v1052 = vpop.permute.xlu0 %1051
        %vm1053 = vcmask 916480
        %v1054 = vsel %vm1053, %v1050, %v1052
        %v1057 = vmax.f32 %v1042, %v1054
        %v1058 = vmax.f32 %v1043, %v1052
        %1061 = vrot.lane.b32.xlu0 %v1045, 112
        %v1062 = vpop.permute.xlu0 %1061
        %1063 = vrot.lane.b32.xlu0 %v1046, 112
        %v1064 = vpop.permute.xlu0 %1063
        %v1065 = vsel %vm1053, %v1062, %v1064
        %v1068 = vmax.f32 %v1044, %v1065
        %v1069 = vmax.f32 %v1045, %v1064
        %1072 = vrot.lane.b32.xlu0 %v1068, 96
        %v1073 = vpop.permute.xlu0 %1072
        %1074 = vrot.lane.b32.xlu0 %v1069, 96
        %v1075 = vpop.permute.xlu0 %1074
        %vm1076 = vcmask 785408
        %v1077 = vsel %vm1076, %v1073, %v1075
        %v1080 = vmax.f32 %v1057, %v1077
        %v1081 = vmax.f32 %v1058, %v1075
        %1083 = vrot.lane.b32.xlu0 %v1080, 124
        %v1084 = vpop.permute.xlu0 %1083
        %1086 = vrot.lane.b32.xlu0 %v1080, 120
        %v1087 = vpop.permute.xlu0 %1086
        %1089 = vrot.lane.b32.xlu0 %v1080, 116
        %v1090 = vpop.permute.xlu0 %1089
        %1092 = vrot.lane.b32.xlu0 %v1080, 112
        %v1093 = vpop.permute.xlu0 %1092
        %1095 = vrot.lane.b32.xlu0 %v1080, 108
        %v1096 = vpop.permute.xlu0 %1095
        %1098 = vrot.lane.b32.xlu0 %v1080, 104
        %v1099 = vpop.permute.xlu0 %1098
        %1101 = vrot.lane.b32.xlu0 %v1080, 100
        %v1102 = vpop.permute.xlu0 %1101
        %1104 = vrot.lane.b32.xlu0 %v1080, 96
        %v1105 = vpop.permute.xlu0 %1104
        %1107 = vrot.lane.b32.xlu0 %v1080, 92
        %v1108 = vpop.permute.xlu0 %1107
        %1110 = vrot.lane.b32.xlu0 %v1080, 88
        %v1111 = vpop.permute.xlu0 %1110
        %1114 = vrot.lane.b32.xlu0 %v1081, 84
        %v1115 = vpop.permute.xlu0 %1114
        %vm1117 = vcmask 64512
        %v1118 = vsel %vm1117, %v1080, %v1084
        %vm1119 = vcmask 130048
        %v1120 = vsel %vm1119, %v1118, %v1087
        %vm1121 = vcmask 195584
        %v1122 = vsel %vm1121, %v1120, %v1090
        %vm1123 = vcmask 261120
        %v1124 = vsel %vm1123, %v1122, %v1093
        %vm1125 = vcmask 326656
        %v1126 = vsel %vm1125, %v1124, %v1096
        %vm1127 = vcmask 392192
        %v1128 = vsel %vm1127, %v1126, %v1099
        %vm1129 = vcmask 457728
        %v1130 = vsel %vm1129, %v1128, %v1102
        %vm1131 = vcmask 523264
        %v1132 = vsel %vm1131, %v1130, %v1105
        %vm1133 = vcmask 588800
        %v1134 = vsel %vm1133, %v1132, %v1108
        %vm1135 = vcmask 654336
        %v1136 = vsel %vm1135, %v1134, %v1111
        %vm1137 = vcmask 719872
        %v1138 = vsel %vm1137, %v1136, %v1115
        %1139 = vrot.lane.b32.xlu0 %v1080, 127
        %v1140 = vpop.permute.xlu0 %1139
        %1142 = vrot.lane.b32.xlu0 %v1080, 123
        %v1143 = vpop.permute.xlu0 %1142
        %1145 = vrot.lane.b32.xlu0 %v1080, 119
        %v1146 = vpop.permute.xlu0 %1145
        %1148 = vrot.lane.b32.xlu0 %v1080, 115
        %v1149 = vpop.permute.xlu0 %1148
        %1151 = vrot.lane.b32.xlu0 %v1080, 111
        %v1152 = vpop.permute.xlu0 %1151
        %1154 = vrot.lane.b32.xlu0 %v1080, 107
        %v1155 = vpop.permute.xlu0 %1154
        %1157 = vrot.lane.b32.xlu0 %v1080, 103
        %v1158 = vpop.permute.xlu0 %1157
        %1160 = vrot.lane.b32.xlu0 %v1080, 99
        %v1161 = vpop.permute.xlu0 %1160
        %1163 = vrot.lane.b32.xlu0 %v1080, 95
        %v1164 = vpop.permute.xlu0 %1163
        %1166 = vrot.lane.b32.xlu0 %v1080, 91
        %v1167 = vpop.permute.xlu0 %1166
        %1169 = vrot.lane.b32.xlu0 %v1080, 87
        %v1170 = vpop.permute.xlu0 %1169
        %1171 = vrot.lane.b32.xlu0 %v1081, 87
        %v1172 = vpop.permute.xlu0 %1171
        %vm1173 = vcmask 711680
        %v1174 = vsel %vm1173, %v1170, %v1172
        %1176 = vrot.lane.b32.xlu0 %v1081, 83
        %v1177 = vpop.permute.xlu0 %1176
        %v1179 = vsel %vm1117, %v1140, %v1143
        %v1180 = vsel %vm1119, %v1179, %v1146
        %v1181 = vsel %vm1121, %v1180, %v1149
        %v1182 = vsel %vm1123, %v1181, %v1152
        %v1183 = vsel %vm1125, %v1182, %v1155
        %v1184 = vsel %vm1127, %v1183, %v1158
        %v1185 = vsel %vm1129, %v1184, %v1161
        %v1186 = vsel %vm1131, %v1185, %v1164
        %v1187 = vsel %vm1133, %v1186, %v1167
        %v1188 = vsel %vm1135, %v1187, %v1174
        %v1189 = vsel %vm1137, %v1188, %v1177
        %1190 = vrot.lane.b32.xlu0 %v1080, 126
        %v1191 = vpop.permute.xlu0 %1190
        %1193 = vrot.lane.b32.xlu0 %v1080, 122
        %v1194 = vpop.permute.xlu0 %1193
        %1196 = vrot.lane.b32.xlu0 %v1080, 118
        %v1197 = vpop.permute.xlu0 %1196
        %1199 = vrot.lane.b32.xlu0 %v1080, 114
        %v1200 = vpop.permute.xlu0 %1199
        %1202 = vrot.lane.b32.xlu0 %v1080, 110
        %v1203 = vpop.permute.xlu0 %1202
        %1205 = vrot.lane.b32.xlu0 %v1080, 106
        %v1206 = vpop.permute.xlu0 %1205
        %1208 = vrot.lane.b32.xlu0 %v1080, 102
        %v1209 = vpop.permute.xlu0 %1208
        %1211 = vrot.lane.b32.xlu0 %v1080, 98
        %v1212 = vpop.permute.xlu0 %1211
        %1214 = vrot.lane.b32.xlu0 %v1080, 94
        %v1215 = vpop.permute.xlu0 %1214
        %1217 = vrot.lane.b32.xlu0 %v1080, 90
        %v1218 = vpop.permute.xlu0 %1217
        %1220 = vrot.lane.b32.xlu0 %v1080, 86
        %v1221 = vpop.permute.xlu0 %1220
        %1222 = vrot.lane.b32.xlu0 %v1081, 86
        %v1223 = vpop.permute.xlu0 %1222
        %vm1224 = vcmask 703488
        %v1225 = vsel %vm1224, %v1221, %v1223
        %1227 = vrot.lane.b32.xlu0 %v1081, 82
        %v1228 = vpop.permute.xlu0 %1227
        %v1230 = vsel %vm1117, %v1191, %v1194
        %v1231 = vsel %vm1119, %v1230, %v1197
        %v1232 = vsel %vm1121, %v1231, %v1200
        %v1233 = vsel %vm1123, %v1232, %v1203
        %v1234 = vsel %vm1125, %v1233, %v1206
        %v1235 = vsel %vm1127, %v1234, %v1209
        %v1236 = vsel %vm1129, %v1235, %v1212
        %v1237 = vsel %vm1131, %v1236, %v1215
        %v1238 = vsel %vm1133, %v1237, %v1218
        %v1239 = vsel %vm1135, %v1238, %v1225
        %v1240 = vsel %vm1137, %v1239, %v1228
        %1241 = vrot.lane.b32.xlu0 %v1080, 125
        %v1242 = vpop.permute.xlu0 %1241
        %1244 = vrot.lane.b32.xlu0 %v1080, 121
        %v1245 = vpop.permute.xlu0 %1244
        %1247 = vrot.lane.b32.xlu0 %v1080, 117
        %v1248 = vpop.permute.xlu0 %1247
        %1250 = vrot.lane.b32.xlu0 %v1080, 113
        %v1251 = vpop.permute.xlu0 %1250
        %1253 = vrot.lane.b32.xlu0 %v1080, 109
        %v1254 = vpop.permute.xlu0 %1253
        %1256 = vrot.lane.b32.xlu0 %v1080, 105
        %v1257 = vpop.permute.xlu0 %1256
        %1259 = vrot.lane.b32.xlu0 %v1080, 101
        %v1260 = vpop.permute.xlu0 %1259
        %1262 = vrot.lane.b32.xlu0 %v1080, 97
        %v1263 = vpop.permute.xlu0 %1262
        %1265 = vrot.lane.b32.xlu0 %v1080, 93
        %v1266 = vpop.permute.xlu0 %1265
        %1268 = vrot.lane.b32.xlu0 %v1080, 89
        %v1269 = vpop.permute.xlu0 %1268
        %1271 = vrot.lane.b32.xlu0 %v1080, 85
        %v1272 = vpop.permute.xlu0 %1271
        %1273 = vrot.lane.b32.xlu0 %v1081, 85
        %v1274 = vpop.permute.xlu0 %1273
        %vm1275 = vcmask 695296
        %v1276 = vsel %vm1275, %v1272, %v1274
        %1278 = vrot.lane.b32.xlu0 %v1081, 81
        %v1279 = vpop.permute.xlu0 %1278
        %v1281 = vsel %vm1117, %v1242, %v1245
        %v1282 = vsel %vm1119, %v1281, %v1248
        %v1283 = vsel %vm1121, %v1282, %v1251
        %v1284 = vsel %vm1123, %v1283, %v1254
        %v1285 = vsel %vm1125, %v1284, %v1257
        %v1286 = vsel %vm1127, %v1285, %v1260
        %v1287 = vsel %vm1129, %v1286, %v1263
        %v1288 = vsel %vm1131, %v1287, %v1266
        %v1289 = vsel %vm1133, %v1288, %v1269
        %v1290 = vsel %vm1135, %v1289, %v1276
        %v1291 = vsel %vm1137, %v1290, %v1279
        %1292 = vrot.lane.b32.xlu0 %v1080, 84
        %v1293 = vpop.permute.xlu0 %1292
        %vm1294 = vcmask 687104
        %v1295 = vsel %vm1294, %v1293, %v1115
        %1297 = vrot.lane.b32.xlu0 %v1081, 80
        %v1298 = vpop.permute.xlu0 %1297
        %v1300 = vsel %vm1117, %v1084, %v1087
        %v1301 = vsel %vm1119, %v1300, %v1090
        %v1302 = vsel %vm1121, %v1301, %v1093
        %v1303 = vsel %vm1123, %v1302, %v1096
        %v1304 = vsel %vm1125, %v1303, %v1099
        %v1305 = vsel %vm1127, %v1304, %v1102
        %v1306 = vsel %vm1129, %v1305, %v1105
        %v1307 = vsel %vm1131, %v1306, %v1108
        %v1308 = vsel %vm1133, %v1307, %v1111
        %v1309 = vsel %vm1135, %v1308, %v1295
        %v1310 = vsel %vm1137, %v1309, %v1298
        %v1312 = vrot.slane %v1189, 2
        %v1315 = vrot.slane %v1240, 4
        %v1318 = vrot.slane %v1291, 6
        %v1321 = vrot.slane %v1138, 2
        %1322 = vrot.lane.b32.xlu0 %v1321, 120
        %v1323 = vpop.permute.xlu0 %1322
        %v1325 = vrot.slane %v1189, 4
        %1326 = vrot.lane.b32.xlu0 %v1325, 120
        %v1327 = vpop.permute.xlu0 %1326
        %v1329 = vrot.slane %v1240, 6
        %1330 = vrot.lane.b32.xlu0 %v1329, 120
        %v1331 = vpop.permute.xlu0 %1330
        %1333 = vrot.lane.b32.xlu0 %v1291, 120
        %v1334 = vpop.permute.xlu0 %1333
        %v1337 = vrot.slane %v1310, 2
        %1338 = vrot.lane.b32.xlu0 %v1337, 120
        %v1339 = vpop.permute.xlu0 %1338
        %v1341 = vrot.slane %v1138, 4
        %1342 = vrot.lane.b32.xlu0 %v1341, 112
        %v1343 = vpop.permute.xlu0 %1342
        %v1345 = vrot.slane %v1189, 6
        %1346 = vrot.lane.b32.xlu0 %v1345, 112
        %v1347 = vpop.permute.xlu0 %1346
        %1349 = vrot.lane.b32.xlu0 %v1240, 112
        %v1350 = vpop.permute.xlu0 %1349
        %v1352 = vrot.slane %v1291, 2
        %1353 = vrot.lane.b32.xlu0 %v1352, 112
        %v1354 = vpop.permute.xlu0 %1353
        %v1356 = vrot.slane %v1310, 4
        %1357 = vrot.lane.b32.xlu0 %v1356, 112
        %v1358 = vpop.permute.xlu0 %1357
        %v1360 = vrot.slane %v1138, 6
        %1361 = vrot.lane.b32.xlu0 %v1360, 104
        %v1362 = vpop.permute.xlu0 %1361
        %v1364 = vsel %vm969, %v1138, %v1312
        %vm1365 = vcmask 1043456
        %v1366 = vsel %vm1365, %v1312, %v1315
        %vm1367 = vcmask 1041408
        %v1368 = vsel %vm1367, %v1315, %v1318
        %v1369 = vsel %vm969, %v1310, %v1323
        %v1370 = vsel %vm1365, %v1323, %v1327
        %v1371 = vsel %vm1367, %v1327, %v1331
        %v1372 = vsel %vm969, %v1334, %v1339
        %v1373 = vsel %vm1365, %v1339, %v1343
        %v1374 = vsel %vm1367, %v1343, %v1347
        %v1375 = vsel %vm969, %v1350, %v1354
        %v1376 = vsel %vm1365, %v1354, %v1358
        %v1377 = vsel %vm1367, %v1358, %v1362
        %v1378 = vrot.slane %v1240, 2
        %v1380 = vrot.slane %v1291, 4
        %v1382 = vrot.slane %v1310, 6
        %1384 = vrot.lane.b32.xlu0 %v1138, 120
        %v1385 = vpop.permute.xlu0 %1384
        %1387 = vrot.lane.b32.xlu0 %v1312, 120
        %v1388 = vpop.permute.xlu0 %1387
        %1390 = vrot.lane.b32.xlu0 %v1315, 120
        %v1391 = vpop.permute.xlu0 %1390
        %1393 = vrot.lane.b32.xlu0 %v1318, 120
        %v1394 = vpop.permute.xlu0 %1393
        %1396 = vrot.lane.b32.xlu0 %v1310, 120
        %v1397 = vpop.permute.xlu0 %1396
        %v1398 = vsel %vm969, %v1189, %v1378
        %v1399 = vsel %vm1365, %v1378, %v1380
        %v1400 = vsel %vm1367, %v1380, %v1382
        %v1401 = vsel %vm969, %v1385, %v1388
        %v1402 = vsel %vm1365, %v1388, %v1391
        %v1403 = vsel %vm1367, %v1391, %v1394
        %1410 = vrot.lane.b32.xlu0 %v1398, 104
        %v1411 = vpop.permute.xlu0 %1410
        %1412 = vrot.lane.b32.xlu0 %v1399, 104
        %v1413 = vpop.permute.xlu0 %1412
        %1414 = vrot.lane.b32.xlu0 %v1400, 104
        %v1415 = vpop.permute.xlu0 %1414
        %1416 = vrot.lane.b32.xlu0 %v1401, 104
        %v1417 = vpop.permute.xlu0 %1416
        %1418 = vrot.lane.b32.xlu0 %v1402, 104
        %v1419 = vpop.permute.xlu0 %1418
        %1420 = vrot.lane.b32.xlu0 %v1403, 104
        %v1421 = vpop.permute.xlu0 %1420
        %1422 = vrot.lane.b32.xlu0 %v1397, 104
        %v1423 = vpop.permute.xlu0 %1422
        %v1431 = vsel %vm1131, %v1364, 0.0
        %v1432 = vsel %vm1131, %v1366, 0.0
        %v1433 = vsel %vm1131, %v1368, 0.0
        %v1434 = vsel %vm1131, %v1369, 0.0
        %v1435 = vsel %vm1131, %v1370, 0.0
        %v1436 = vsel %vm1131, %v1371, 0.0
        %v1437 = vsel %vm1131, %v1372, 0.0
        %v1438 = vsel %vm1131, %v1373, 0.0
        %v1439 = vsel %vm1131, %v1374, 0.0
        %v1440 = vsel %vm1131, %v1375, 0.0
        %v1441 = vsel %vm1131, %v1376, 0.0
        %v1442 = vsel %vm1131, %v1377, 0.0
        %v1443 = vsel %vm1131, %v1411, 0.0
        %v1444 = vsel %vm1131, %v1413, 0.0
        %v1445 = vsel %vm1131, %v1415, 0.0
        %v1446 = vsel %vm1131, %v1417, 0.0
        %v1447 = vsel %vm1131, %v1419, 0.0
        %v1448 = vsel %vm1131, %v1421, 0.0
        %v1449 = vsel %vm1131, %v1423, 0.0
        %v1450 = vadd.f32 %v676, %v962
        %v1451 = vadd.f32 %v696, %v962
        %v1452 = vadd.f32 %v716, %v962
        %v1453 = vadd.f32 %v736, %v962
        %v1454 = vadd.f32 %v756, %v962
        %v1455 = vsel %vm969, %v1450, 0.0
        %v1456 = vsel %vm969, %v1451, 0.0
        %v1457 = vadd.f32 %v1455, %v1456
        %v1458 = vsel %vm969, %v1452, 0.0
        %v1459 = vadd.f32 %v1457, %v1458
        %v1460 = vsel %vm969, %v1453, 0.0
        %v1461 = vadd.f32 %v1459, %v1460
        %v1462 = vsel %vm977, %v1454, 0.0
        %v1463 = vadd.f32 %v1461, %v1462
        %1464 = vadd.xlane.f32.xlu0 %v1463
        %v1465 = vpop.xlane.xlu0 %1464
        %v1466 = vmul.f32 %v1465, 0.0017361111
        %v1467 = vmul.f32 %v1450, %v1450
        %v1468 = vmul.f32 %v1451, %v1451
        %v1469 = vmul.f32 %v1452, %v1452
        %v1470 = vmul.f32 %v1453, %v1453
        %v1471 = vmul.f32 %v1454, %v1454
        %v1472 = vsel %vm969, %v1467, 0.0
        %v1473 = vsel %vm969, %v1468, 0.0
        %v1474 = vadd.f32 %v1472, %v1473
        %v1475 = vsel %vm969, %v1469, 0.0
        %v1476 = vadd.f32 %v1474, %v1475
        %v1477 = vsel %vm969, %v1470, 0.0
        %v1478 = vadd.f32 %v1476, %v1477
        %v1479 = vsel %vm977, %v1471, 0.0
        %v1480 = vadd.f32 %v1478, %v1479
        %1481 = vadd.xlane.f32.xlu0 %v1480
        %v1482 = vpop.xlane.xlu0 %1481
        %v1483 = vmul.f32 %v1482, 0.0017361111
        %v1484 = vmul.f32 %v1466, %v1466
        %v1485 = vsub.f32 %v1483, %v1484
        %v1486 = vmax.f32 %v1485, 0.0
        %v1487 = vsub.f32 %v1450, %v1466
        %v1488 = vsub.f32 %v1451, %v1466
        %v1489 = vsub.f32 %v1452, %v1466
        %v1490 = vsub.f32 %v1453, %v1466
        %v1491 = vsub.f32 %v1454, %v1466
        %v1492 = vadd.f32 %v1486, 1e-05
        %v1493 = vrsqrt.pop %v1492
        %v1494 = vmul.f32 %v1493, %v1492
        %v1495 = vmul.f32 %v1494, %v1493
        %v1496 = vmul.f32 0.5, %v1495
        %v1497 = vsub.f32 1.5, %v1496
        %v1498 = vmul.f32 %v1493, %v1497
        %vm1499 = vweird.f32 %v1492
        %vm1500 = vweird.f32 %v1493
        %vm1501 = vmor %vm1499, %vm1500
        %v1502 = vsel %vm1501, %v1493, %v1498
        %v1503 = vmul.f32 %v1487, %v1502
        %v1504 = vmul.f32 %v1488, %v1502
        %v1505 = vmul.f32 %v1489, %v1502
        %v1506 = vmul.f32 %v1490, %v1502
        %v1507 = vmul.f32 %v1491, %v1502
        %v1508 = vmul.f32 %v1503, %v1026
        %v1509 = vmul.f32 %v1504, %v1026
        %v1510 = vmul.f32 %v1505, %v1026
        %v1511 = vmul.f32 %v1506, %v1026
        %v1512 = vmul.f32 %v1507, %v1026
        %v1513 = vadd.f32 %v1508, %v1035
        %v1514 = vadd.f32 %v1509, %v1035
        %v1515 = vadd.f32 %v1510, %v1035
        %v1516 = vadd.f32 %v1511, %v1035
        %v1517 = vadd.f32 %v1512, %v1035
        %v1518 = vmax.f32 %v1513, 0.0
        %v1519 = vmax.f32 %v1514, 0.0
        %v1520 = vmax.f32 %v1515, 0.0
        %v1521 = vmax.f32 %v1516, 0.0
        %v1522 = vmax.f32 %v1517, 0.0
        %1525 = vrot.lane.b32.xlu0 %v1519, 112
        %v1526 = vpop.permute.xlu0 %1525
        %1527 = vrot.lane.b32.xlu0 %v1520, 112
        %v1528 = vpop.permute.xlu0 %1527
        %v1529 = vsel %vm1053, %v1526, %v1528
        %v1532 = vmax.f32 %v1518, %v1529
        %v1533 = vmax.f32 %v1519, %v1528
        %1536 = vrot.lane.b32.xlu0 %v1521, 112
        %v1537 = vpop.permute.xlu0 %1536
        %1538 = vrot.lane.b32.xlu0 %v1522, 112
        %v1539 = vpop.permute.xlu0 %1538
        %v1540 = vsel %vm1053, %v1537, %v1539
        %v1543 = vmax.f32 %v1520, %v1540
        %v1544 = vmax.f32 %v1521, %v1539
        %1547 = vrot.lane.b32.xlu0 %v1543, 96
        %v1548 = vpop.permute.xlu0 %1547
        %1549 = vrot.lane.b32.xlu0 %v1544, 96
        %v1550 = vpop.permute.xlu0 %1549
        %v1551 = vsel %vm1076, %v1548, %v1550
        %v1554 = vmax.f32 %v1532, %v1551
        %v1555 = vmax.f32 %v1533, %v1550
        %1557 = vrot.lane.b32.xlu0 %v1554, 124
        %v1558 = vpop.permute.xlu0 %1557
        %1560 = vrot.lane.b32.xlu0 %v1554, 120
        %v1561 = vpop.permute.xlu0 %1560
        %1563 = vrot.lane.b32.xlu0 %v1554, 116
        %v1564 = vpop.permute.xlu0 %1563
        %1566 = vrot.lane.b32.xlu0 %v1554, 112
        %v1567 = vpop.permute.xlu0 %1566
        %1569 = vrot.lane.b32.xlu0 %v1554, 108
        %v1570 = vpop.permute.xlu0 %1569
        %1572 = vrot.lane.b32.xlu0 %v1554, 104
        %v1573 = vpop.permute.xlu0 %1572
        %1575 = vrot.lane.b32.xlu0 %v1554, 100
        %v1576 = vpop.permute.xlu0 %1575
        %1578 = vrot.lane.b32.xlu0 %v1554, 96
        %v1579 = vpop.permute.xlu0 %1578
        %1581 = vrot.lane.b32.xlu0 %v1554, 92
        %v1582 = vpop.permute.xlu0 %1581
        %1584 = vrot.lane.b32.xlu0 %v1554, 88
        %v1585 = vpop.permute.xlu0 %1584
        %1588 = vrot.lane.b32.xlu0 %v1555, 84
        %v1589 = vpop.permute.xlu0 %1588
        %v1591 = vsel %vm1117, %v1554, %v1558
        %v1592 = vsel %vm1119, %v1591, %v1561
        %v1593 = vsel %vm1121, %v1592, %v1564
        %v1594 = vsel %vm1123, %v1593, %v1567
        %v1595 = vsel %vm1125, %v1594, %v1570
        %v1596 = vsel %vm1127, %v1595, %v1573
        %v1597 = vsel %vm1129, %v1596, %v1576
        %v1598 = vsel %vm1131, %v1597, %v1579
        %v1599 = vsel %vm1133, %v1598, %v1582
        %v1600 = vsel %vm1135, %v1599, %v1585
        %v1601 = vsel %vm1137, %v1600, %v1589
        %1602 = vrot.lane.b32.xlu0 %v1554, 127
        %v1603 = vpop.permute.xlu0 %1602
        %1605 = vrot.lane.b32.xlu0 %v1554, 123
        %v1606 = vpop.permute.xlu0 %1605
        %1608 = vrot.lane.b32.xlu0 %v1554, 119
        %v1609 = vpop.permute.xlu0 %1608
        %1611 = vrot.lane.b32.xlu0 %v1554, 115
        %v1612 = vpop.permute.xlu0 %1611
        %1614 = vrot.lane.b32.xlu0 %v1554, 111
        %v1615 = vpop.permute.xlu0 %1614
        %1617 = vrot.lane.b32.xlu0 %v1554, 107
        %v1618 = vpop.permute.xlu0 %1617
        %1620 = vrot.lane.b32.xlu0 %v1554, 103
        %v1621 = vpop.permute.xlu0 %1620
        %1623 = vrot.lane.b32.xlu0 %v1554, 99
        %v1624 = vpop.permute.xlu0 %1623
        %1626 = vrot.lane.b32.xlu0 %v1554, 95
        %v1627 = vpop.permute.xlu0 %1626
        %1629 = vrot.lane.b32.xlu0 %v1554, 91
        %v1630 = vpop.permute.xlu0 %1629
        %1632 = vrot.lane.b32.xlu0 %v1554, 87
        %v1633 = vpop.permute.xlu0 %1632
        %1634 = vrot.lane.b32.xlu0 %v1555, 87
        %v1635 = vpop.permute.xlu0 %1634
        %v1636 = vsel %vm1173, %v1633, %v1635
        %1638 = vrot.lane.b32.xlu0 %v1555, 83
        %v1639 = vpop.permute.xlu0 %1638
        %v1641 = vsel %vm1117, %v1603, %v1606
        %v1642 = vsel %vm1119, %v1641, %v1609
        %v1643 = vsel %vm1121, %v1642, %v1612
        %v1644 = vsel %vm1123, %v1643, %v1615
        %v1645 = vsel %vm1125, %v1644, %v1618
        %v1646 = vsel %vm1127, %v1645, %v1621
        %v1647 = vsel %vm1129, %v1646, %v1624
        %v1648 = vsel %vm1131, %v1647, %v1627
        %v1649 = vsel %vm1133, %v1648, %v1630
        %v1650 = vsel %vm1135, %v1649, %v1636
        %v1651 = vsel %vm1137, %v1650, %v1639
        %1652 = vrot.lane.b32.xlu0 %v1554, 126
        %v1653 = vpop.permute.xlu0 %1652
        %1655 = vrot.lane.b32.xlu0 %v1554, 122
        %v1656 = vpop.permute.xlu0 %1655
        %1658 = vrot.lane.b32.xlu0 %v1554, 118
        %v1659 = vpop.permute.xlu0 %1658
        %1661 = vrot.lane.b32.xlu0 %v1554, 114
        %v1662 = vpop.permute.xlu0 %1661
        %1664 = vrot.lane.b32.xlu0 %v1554, 110
        %v1665 = vpop.permute.xlu0 %1664
        %1667 = vrot.lane.b32.xlu0 %v1554, 106
        %v1668 = vpop.permute.xlu0 %1667
        %1670 = vrot.lane.b32.xlu0 %v1554, 102
        %v1671 = vpop.permute.xlu0 %1670
        %1673 = vrot.lane.b32.xlu0 %v1554, 98
        %v1674 = vpop.permute.xlu0 %1673
        %1676 = vrot.lane.b32.xlu0 %v1554, 94
        %v1677 = vpop.permute.xlu0 %1676
        %1679 = vrot.lane.b32.xlu0 %v1554, 90
        %v1680 = vpop.permute.xlu0 %1679
        %1682 = vrot.lane.b32.xlu0 %v1554, 86
        %v1683 = vpop.permute.xlu0 %1682
        %1684 = vrot.lane.b32.xlu0 %v1555, 86
        %v1685 = vpop.permute.xlu0 %1684
        %v1686 = vsel %vm1224, %v1683, %v1685
        %1688 = vrot.lane.b32.xlu0 %v1555, 82
        %v1689 = vpop.permute.xlu0 %1688
        %v1691 = vsel %vm1117, %v1653, %v1656
        %v1692 = vsel %vm1119, %v1691, %v1659
        %v1693 = vsel %vm1121, %v1692, %v1662
        %v1694 = vsel %vm1123, %v1693, %v1665
        %v1695 = vsel %vm1125, %v1694, %v1668
        %v1696 = vsel %vm1127, %v1695, %v1671
        %v1697 = vsel %vm1129, %v1696, %v1674
        %v1698 = vsel %vm1131, %v1697, %v1677
        %v1699 = vsel %vm1133, %v1698, %v1680
        %v1700 = vsel %vm1135, %v1699, %v1686
        %v1701 = vsel %vm1137, %v1700, %v1689
        %1702 = vrot.lane.b32.xlu0 %v1554, 125
        %v1703 = vpop.permute.xlu0 %1702
        %1705 = vrot.lane.b32.xlu0 %v1554, 121
        %v1706 = vpop.permute.xlu0 %1705
        %1708 = vrot.lane.b32.xlu0 %v1554, 117
        %v1709 = vpop.permute.xlu0 %1708
        %1711 = vrot.lane.b32.xlu0 %v1554, 113
        %v1712 = vpop.permute.xlu0 %1711
        %1714 = vrot.lane.b32.xlu0 %v1554, 109
        %v1715 = vpop.permute.xlu0 %1714
        %1717 = vrot.lane.b32.xlu0 %v1554, 105
        %v1718 = vpop.permute.xlu0 %1717
        %1720 = vrot.lane.b32.xlu0 %v1554, 101
        %v1721 = vpop.permute.xlu0 %1720
        %1723 = vrot.lane.b32.xlu0 %v1554, 97
        %v1724 = vpop.permute.xlu0 %1723
        %1726 = vrot.lane.b32.xlu0 %v1554, 93
        %v1727 = vpop.permute.xlu0 %1726
        %1729 = vrot.lane.b32.xlu0 %v1554, 89
        %v1730 = vpop.permute.xlu0 %1729
        %1732 = vrot.lane.b32.xlu0 %v1554, 85
        %v1733 = vpop.permute.xlu0 %1732
        %1734 = vrot.lane.b32.xlu0 %v1555, 85
        %v1735 = vpop.permute.xlu0 %1734
        %v1736 = vsel %vm1275, %v1733, %v1735
        %1738 = vrot.lane.b32.xlu0 %v1555, 81
        %v1739 = vpop.permute.xlu0 %1738
        %v1741 = vsel %vm1117, %v1703, %v1706
        %v1742 = vsel %vm1119, %v1741, %v1709
        %v1743 = vsel %vm1121, %v1742, %v1712
        %v1744 = vsel %vm1123, %v1743, %v1715
        %v1745 = vsel %vm1125, %v1744, %v1718
        %v1746 = vsel %vm1127, %v1745, %v1721
        %v1747 = vsel %vm1129, %v1746, %v1724
        %v1748 = vsel %vm1131, %v1747, %v1727
        %v1749 = vsel %vm1133, %v1748, %v1730
        %v1750 = vsel %vm1135, %v1749, %v1736
        %v1751 = vsel %vm1137, %v1750, %v1739
        %1752 = vrot.lane.b32.xlu0 %v1554, 84
        %v1753 = vpop.permute.xlu0 %1752
        %v1754 = vsel %vm1294, %v1753, %v1589
        %1756 = vrot.lane.b32.xlu0 %v1555, 80
        %v1757 = vpop.permute.xlu0 %1756
        %v1759 = vsel %vm1117, %v1558, %v1561
        %v1760 = vsel %vm1119, %v1759, %v1564
        %v1761 = vsel %vm1121, %v1760, %v1567
        %v1762 = vsel %vm1123, %v1761, %v1570
        %v1763 = vsel %vm1125, %v1762, %v1573
        %v1764 = vsel %vm1127, %v1763, %v1576
        %v1765 = vsel %vm1129, %v1764, %v1579
        %v1766 = vsel %vm1131, %v1765, %v1582
        %v1767 = vsel %vm1133, %v1766, %v1585
        %v1768 = vsel %vm1135, %v1767, %v1754
        %v1769 = vsel %vm1137, %v1768, %v1757
        %v1771 = vrot.slane %v1651, 2
        %v1774 = vrot.slane %v1701, 4
        %v1777 = vrot.slane %v1751, 6
        %v1780 = vrot.slane %v1601, 2
        %1781 = vrot.lane.b32.xlu0 %v1780, 120
        %v1782 = vpop.permute.xlu0 %1781
        %v1784 = vrot.slane %v1651, 4
        %1785 = vrot.lane.b32.xlu0 %v1784, 120
        %v1786 = vpop.permute.xlu0 %1785
        %v1788 = vrot.slane %v1701, 6
        %1789 = vrot.lane.b32.xlu0 %v1788, 120
        %v1790 = vpop.permute.xlu0 %1789
        %1792 = vrot.lane.b32.xlu0 %v1751, 120
        %v1793 = vpop.permute.xlu0 %1792
        %v1796 = vrot.slane %v1769, 2
        %1797 = vrot.lane.b32.xlu0 %v1796, 120
        %v1798 = vpop.permute.xlu0 %1797
        %v1800 = vrot.slane %v1601, 4
        %1801 = vrot.lane.b32.xlu0 %v1800, 112
        %v1802 = vpop.permute.xlu0 %1801
        %v1804 = vrot.slane %v1651, 6
        %1805 = vrot.lane.b32.xlu0 %v1804, 112
        %v1806 = vpop.permute.xlu0 %1805
        %1808 = vrot.lane.b32.xlu0 %v1701, 112
        %v1809 = vpop.permute.xlu0 %1808
        %v1811 = vrot.slane %v1751, 2
        %1812 = vrot.lane.b32.xlu0 %v1811, 112
        %v1813 = vpop.permute.xlu0 %1812
        %v1815 = vrot.slane %v1769, 4
        %1816 = vrot.lane.b32.xlu0 %v1815, 112
        %v1817 = vpop.permute.xlu0 %1816
        %v1819 = vrot.slane %v1601, 6
        %1820 = vrot.lane.b32.xlu0 %v1819, 104
        %v1821 = vpop.permute.xlu0 %1820
        %v1823 = vsel %vm969, %v1601, %v1771
        %v1824 = vsel %vm1365, %v1771, %v1774
        %v1825 = vsel %vm1367, %v1774, %v1777
        %v1826 = vsel %vm969, %v1769, %v1782
        %v1827 = vsel %vm1365, %v1782, %v1786
        %v1828 = vsel %vm1367, %v1786, %v1790
        %v1829 = vsel %vm969, %v1793, %v1798
        %v1830 = vsel %vm1365, %v1798, %v1802
        %v1831 = vsel %vm1367, %v1802, %v1806
        %v1832 = vsel %vm969, %v1809, %v1813
        %v1833 = vsel %vm1365, %v1813, %v1817
        %v1834 = vsel %vm1367, %v1817, %v1821
        %v1835 = vrot.slane %v1701, 2
        %v1837 = vrot.slane %v1751, 4
        %v1839 = vrot.slane %v1769, 6
        %1841 = vrot.lane.b32.xlu0 %v1601, 120
        %v1842 = vpop.permute.xlu0 %1841
        %1844 = vrot.lane.b32.xlu0 %v1771, 120
        %v1845 = vpop.permute.xlu0 %1844
        %1847 = vrot.lane.b32.xlu0 %v1774, 120
        %v1848 = vpop.permute.xlu0 %1847
        %1850 = vrot.lane.b32.xlu0 %v1777, 120
        %v1851 = vpop.permute.xlu0 %1850
        %1853 = vrot.lane.b32.xlu0 %v1769, 120
        %v1854 = vpop.permute.xlu0 %1853
        %v1855 = vsel %vm969, %v1651, %v1835
        %v1856 = vsel %vm1365, %v1835, %v1837
        %v1857 = vsel %vm1367, %v1837, %v1839
        %v1858 = vsel %vm969, %v1842, %v1845
        %v1859 = vsel %vm1365, %v1845, %v1848
        %v1860 = vsel %vm1367, %v1848, %v1851
        %1867 = vrot.lane.b32.xlu0 %v1855, 104
        %v1868 = vpop.permute.xlu0 %1867
        %1869 = vrot.lane.b32.xlu0 %v1856, 104
        %v1870 = vpop.permute.xlu0 %1869
        %1871 = vrot.lane.b32.xlu0 %v1857, 104
        %v1872 = vpop.permute.xlu0 %1871
        %1873 = vrot.lane.b32.xlu0 %v1858, 104
        %v1874 = vpop.permute.xlu0 %1873
        %1875 = vrot.lane.b32.xlu0 %v1859, 104
        %v1876 = vpop.permute.xlu0 %1875
        %1877 = vrot.lane.b32.xlu0 %v1860, 104
        %v1878 = vpop.permute.xlu0 %1877
        %1879 = vrot.lane.b32.xlu0 %v1854, 104
        %v1880 = vpop.permute.xlu0 %1879
        %v1888 = vsel %vm1131, %v1823, 0.0
        %v1889 = vsel %vm1131, %v1824, 0.0
        %v1890 = vsel %vm1131, %v1825, 0.0
        %v1891 = vsel %vm1131, %v1826, 0.0
        %v1892 = vsel %vm1131, %v1827, 0.0
        %v1893 = vsel %vm1131, %v1828, 0.0
        %v1894 = vsel %vm1131, %v1829, 0.0
        %v1895 = vsel %vm1131, %v1830, 0.0
        %v1896 = vsel %vm1131, %v1831, 0.0
        %v1897 = vsel %vm1131, %v1832, 0.0
        %v1898 = vsel %vm1131, %v1833, 0.0
        %v1899 = vsel %vm1131, %v1834, 0.0
        %v1900 = vsel %vm1131, %v1868, 0.0
        %v1901 = vsel %vm1131, %v1870, 0.0
        %v1902 = vsel %vm1131, %v1872, 0.0
        %v1903 = vsel %vm1131, %v1874, 0.0
        %v1904 = vsel %vm1131, %v1876, 0.0
        %v1905 = vsel %vm1131, %v1878, 0.0
        %v1906 = vsel %vm1131, %v1880, 0.0
        %v1907 = vadd.f32 %v776, %v962
        %v1908 = vadd.f32 %v796, %v962
        %v1909 = vadd.f32 %v816, %v962
        %v1910 = vadd.f32 %v836, %v962
        %v1911 = vadd.f32 %v856, %v962
        %v1912 = vsel %vm969, %v1907, 0.0
        %v1913 = vsel %vm969, %v1908, 0.0
        %v1914 = vadd.f32 %v1912, %v1913
        %v1915 = vsel %vm969, %v1909, 0.0
        %v1916 = vadd.f32 %v1914, %v1915
        %v1917 = vsel %vm969, %v1910, 0.0
        %v1918 = vadd.f32 %v1916, %v1917
        %v1919 = vsel %vm977, %v1911, 0.0
        %v1920 = vadd.f32 %v1918, %v1919
        %1921 = vadd.xlane.f32.xlu0 %v1920
        %v1922 = vpop.xlane.xlu0 %1921
        %v1923 = vmul.f32 %v1922, 0.0017361111
        %v1924 = vmul.f32 %v1907, %v1907
        %v1925 = vmul.f32 %v1908, %v1908
        %v1926 = vmul.f32 %v1909, %v1909
        %v1927 = vmul.f32 %v1910, %v1910
        %v1928 = vmul.f32 %v1911, %v1911
        %v1929 = vsel %vm969, %v1924, 0.0
        %v1930 = vsel %vm969, %v1925, 0.0
        %v1931 = vadd.f32 %v1929, %v1930
        %v1932 = vsel %vm969, %v1926, 0.0
        %v1933 = vadd.f32 %v1931, %v1932
        %v1934 = vsel %vm969, %v1927, 0.0
        %v1935 = vadd.f32 %v1933, %v1934
        %v1936 = vsel %vm977, %v1928, 0.0
        %v1937 = vadd.f32 %v1935, %v1936
        %1938 = vadd.xlane.f32.xlu0 %v1937
        %v1939 = vpop.xlane.xlu0 %1938
        %v1940 = vmul.f32 %v1939, 0.0017361111
        %v1941 = vmul.f32 %v1923, %v1923
        %v1942 = vsub.f32 %v1940, %v1941
        %v1943 = vmax.f32 %v1942, 0.0
        %v1944 = vsub.f32 %v1907, %v1923
        %v1945 = vsub.f32 %v1908, %v1923
        %v1946 = vsub.f32 %v1909, %v1923
        %v1947 = vsub.f32 %v1910, %v1923
        %v1948 = vsub.f32 %v1911, %v1923
        %v1949 = vadd.f32 %v1943, 1e-05
        %v1950 = vrsqrt.pop %v1949
        %v1951 = vmul.f32 %v1950, %v1949
        %v1952 = vmul.f32 %v1951, %v1950
        %v1953 = vmul.f32 0.5, %v1952
        %v1954 = vsub.f32 1.5, %v1953
        %v1955 = vmul.f32 %v1950, %v1954
        %vm1956 = vweird.f32 %v1949
        %vm1957 = vweird.f32 %v1950
        %vm1958 = vmor %vm1956, %vm1957
        %v1959 = vsel %vm1958, %v1950, %v1955
        %v1960 = vmul.f32 %v1944, %v1959
        %v1961 = vmul.f32 %v1945, %v1959
        %v1962 = vmul.f32 %v1946, %v1959
        %v1963 = vmul.f32 %v1947, %v1959
        %v1964 = vmul.f32 %v1948, %v1959
        %v1965 = vmul.f32 %v1960, %v1026
        %v1966 = vmul.f32 %v1961, %v1026
        %v1967 = vmul.f32 %v1962, %v1026
        %v1968 = vmul.f32 %v1963, %v1026
        %v1969 = vmul.f32 %v1964, %v1026
        %v1970 = vadd.f32 %v1965, %v1035
        %v1971 = vadd.f32 %v1966, %v1035
        %v1972 = vadd.f32 %v1967, %v1035
        %v1973 = vadd.f32 %v1968, %v1035
        %v1974 = vadd.f32 %v1969, %v1035
        %v1975 = vmax.f32 %v1970, 0.0
        %v1976 = vmax.f32 %v1971, 0.0
        %v1977 = vmax.f32 %v1972, 0.0
        %v1978 = vmax.f32 %v1973, 0.0
        %v1979 = vmax.f32 %v1974, 0.0
        %1982 = vrot.lane.b32.xlu0 %v1976, 112
        %v1983 = vpop.permute.xlu0 %1982
        %1984 = vrot.lane.b32.xlu0 %v1977, 112
        %v1985 = vpop.permute.xlu0 %1984
        %v1986 = vsel %vm1053, %v1983, %v1985
        %v1989 = vmax.f32 %v1975, %v1986
        %v1990 = vmax.f32 %v1976, %v1985
        %1993 = vrot.lane.b32.xlu0 %v1978, 112
        %v1994 = vpop.permute.xlu0 %1993
        %1995 = vrot.lane.b32.xlu0 %v1979, 112
        %v1996 = vpop.permute.xlu0 %1995
        %v1997 = vsel %vm1053, %v1994, %v1996
        %v2000 = vmax.f32 %v1977, %v1997
        %v2001 = vmax.f32 %v1978, %v1996
        %2004 = vrot.lane.b32.xlu0 %v2000, 96
        %v2005 = vpop.permute.xlu0 %2004
        %2006 = vrot.lane.b32.xlu0 %v2001, 96
        %v2007 = vpop.permute.xlu0 %2006
        %v2008 = vsel %vm1076, %v2005, %v2007
        %v2011 = vmax.f32 %v1989, %v2008
        %v2012 = vmax.f32 %v1990, %v2007
        %2014 = vrot.lane.b32.xlu0 %v2011, 124
        %v2015 = vpop.permute.xlu0 %2014
        %2017 = vrot.lane.b32.xlu0 %v2011, 120
        %v2018 = vpop.permute.xlu0 %2017
        %2020 = vrot.lane.b32.xlu0 %v2011, 116
        %v2021 = vpop.permute.xlu0 %2020
        %2023 = vrot.lane.b32.xlu0 %v2011, 112
        %v2024 = vpop.permute.xlu0 %2023
        %2026 = vrot.lane.b32.xlu0 %v2011, 108
        %v2027 = vpop.permute.xlu0 %2026
        %2029 = vrot.lane.b32.xlu0 %v2011, 104
        %v2030 = vpop.permute.xlu0 %2029
        %2032 = vrot.lane.b32.xlu0 %v2011, 100
        %v2033 = vpop.permute.xlu0 %2032
        %2035 = vrot.lane.b32.xlu0 %v2011, 96
        %v2036 = vpop.permute.xlu0 %2035
        %2038 = vrot.lane.b32.xlu0 %v2011, 92
        %v2039 = vpop.permute.xlu0 %2038
        %2041 = vrot.lane.b32.xlu0 %v2011, 88
        %v2042 = vpop.permute.xlu0 %2041
        %2045 = vrot.lane.b32.xlu0 %v2012, 84
        %v2046 = vpop.permute.xlu0 %2045
        %v2048 = vsel %vm1117, %v2011, %v2015
        %v2049 = vsel %vm1119, %v2048, %v2018
        %v2050 = vsel %vm1121, %v2049, %v2021
        %v2051 = vsel %vm1123, %v2050, %v2024
        %v2052 = vsel %vm1125, %v2051, %v2027
        %v2053 = vsel %vm1127, %v2052, %v2030
        %v2054 = vsel %vm1129, %v2053, %v2033
        %v2055 = vsel %vm1131, %v2054, %v2036
        %v2056 = vsel %vm1133, %v2055, %v2039
        %v2057 = vsel %vm1135, %v2056, %v2042
        %v2058 = vsel %vm1137, %v2057, %v2046
        %2059 = vrot.lane.b32.xlu0 %v2011, 127
        %v2060 = vpop.permute.xlu0 %2059
        %2062 = vrot.lane.b32.xlu0 %v2011, 123
        %v2063 = vpop.permute.xlu0 %2062
        %2065 = vrot.lane.b32.xlu0 %v2011, 119
        %v2066 = vpop.permute.xlu0 %2065
        %2068 = vrot.lane.b32.xlu0 %v2011, 115
        %v2069 = vpop.permute.xlu0 %2068
        %2071 = vrot.lane.b32.xlu0 %v2011, 111
        %v2072 = vpop.permute.xlu0 %2071
        %2074 = vrot.lane.b32.xlu0 %v2011, 107
        %v2075 = vpop.permute.xlu0 %2074
        %2077 = vrot.lane.b32.xlu0 %v2011, 103
        %v2078 = vpop.permute.xlu0 %2077
        %2080 = vrot.lane.b32.xlu0 %v2011, 99
        %v2081 = vpop.permute.xlu0 %2080
        %2083 = vrot.lane.b32.xlu0 %v2011, 95
        %v2084 = vpop.permute.xlu0 %2083
        %2086 = vrot.lane.b32.xlu0 %v2011, 91
        %v2087 = vpop.permute.xlu0 %2086
        %2089 = vrot.lane.b32.xlu0 %v2011, 87
        %v2090 = vpop.permute.xlu0 %2089
        %2091 = vrot.lane.b32.xlu0 %v2012, 87
        %v2092 = vpop.permute.xlu0 %2091
        %v2093 = vsel %vm1173, %v2090, %v2092
        %2095 = vrot.lane.b32.xlu0 %v2012, 83
        %v2096 = vpop.permute.xlu0 %2095
        %v2098 = vsel %vm1117, %v2060, %v2063
        %v2099 = vsel %vm1119, %v2098, %v2066
        %v2100 = vsel %vm1121, %v2099, %v2069
        %v2101 = vsel %vm1123, %v2100, %v2072
        %v2102 = vsel %vm1125, %v2101, %v2075
        %v2103 = vsel %vm1127, %v2102, %v2078
        %v2104 = vsel %vm1129, %v2103, %v2081
        %v2105 = vsel %vm1131, %v2104, %v2084
        %v2106 = vsel %vm1133, %v2105, %v2087
        %v2107 = vsel %vm1135, %v2106, %v2093
        %v2108 = vsel %vm1137, %v2107, %v2096
        %2109 = vrot.lane.b32.xlu0 %v2011, 126
        %v2110 = vpop.permute.xlu0 %2109
        %2112 = vrot.lane.b32.xlu0 %v2011, 122
        %v2113 = vpop.permute.xlu0 %2112
        %2115 = vrot.lane.b32.xlu0 %v2011, 118
        %v2116 = vpop.permute.xlu0 %2115
        %2118 = vrot.lane.b32.xlu0 %v2011, 114
        %v2119 = vpop.permute.xlu0 %2118
        %2121 = vrot.lane.b32.xlu0 %v2011, 110
        %v2122 = vpop.permute.xlu0 %2121
        %2124 = vrot.lane.b32.xlu0 %v2011, 106
        %v2125 = vpop.permute.xlu0 %2124
        %2127 = vrot.lane.b32.xlu0 %v2011, 102
        %v2128 = vpop.permute.xlu0 %2127
        %2130 = vrot.lane.b32.xlu0 %v2011, 98
        %v2131 = vpop.permute.xlu0 %2130
        %2133 = vrot.lane.b32.xlu0 %v2011, 94
        %v2134 = vpop.permute.xlu0 %2133
        %2136 = vrot.lane.b32.xlu0 %v2011, 90
        %v2137 = vpop.permute.xlu0 %2136
        %2139 = vrot.lane.b32.xlu0 %v2011, 86
        %v2140 = vpop.permute.xlu0 %2139
        %2141 = vrot.lane.b32.xlu0 %v2012, 86
        %v2142 = vpop.permute.xlu0 %2141
        %v2143 = vsel %vm1224, %v2140, %v2142
        %2145 = vrot.lane.b32.xlu0 %v2012, 82
        %v2146 = vpop.permute.xlu0 %2145
        %v2148 = vsel %vm1117, %v2110, %v2113
        %v2149 = vsel %vm1119, %v2148, %v2116
        %v2150 = vsel %vm1121, %v2149, %v2119
        %v2151 = vsel %vm1123, %v2150, %v2122
        %v2152 = vsel %vm1125, %v2151, %v2125
        %v2153 = vsel %vm1127, %v2152, %v2128
        %v2154 = vsel %vm1129, %v2153, %v2131
        %v2155 = vsel %vm1131, %v2154, %v2134
        %v2156 = vsel %vm1133, %v2155, %v2137
        %v2157 = vsel %vm1135, %v2156, %v2143
        %v2158 = vsel %vm1137, %v2157, %v2146
        %2159 = vrot.lane.b32.xlu0 %v2011, 125
        %v2160 = vpop.permute.xlu0 %2159
        %2162 = vrot.lane.b32.xlu0 %v2011, 121
        %v2163 = vpop.permute.xlu0 %2162
        %2165 = vrot.lane.b32.xlu0 %v2011, 117
        %v2166 = vpop.permute.xlu0 %2165
        %2168 = vrot.lane.b32.xlu0 %v2011, 113
        %v2169 = vpop.permute.xlu0 %2168
        %2171 = vrot.lane.b32.xlu0 %v2011, 109
        %v2172 = vpop.permute.xlu0 %2171
        %2174 = vrot.lane.b32.xlu0 %v2011, 105
        %v2175 = vpop.permute.xlu0 %2174
        %2177 = vrot.lane.b32.xlu0 %v2011, 101
        %v2178 = vpop.permute.xlu0 %2177
        %2180 = vrot.lane.b32.xlu0 %v2011, 97
        %v2181 = vpop.permute.xlu0 %2180
        %2183 = vrot.lane.b32.xlu0 %v2011, 93
        %v2184 = vpop.permute.xlu0 %2183
        %2186 = vrot.lane.b32.xlu0 %v2011, 89
        %v2187 = vpop.permute.xlu0 %2186
        %2189 = vrot.lane.b32.xlu0 %v2011, 85
        %v2190 = vpop.permute.xlu0 %2189
        %2191 = vrot.lane.b32.xlu0 %v2012, 85
        %v2192 = vpop.permute.xlu0 %2191
        %v2193 = vsel %vm1275, %v2190, %v2192
        %2195 = vrot.lane.b32.xlu0 %v2012, 81
        %v2196 = vpop.permute.xlu0 %2195
        %v2198 = vsel %vm1117, %v2160, %v2163
        %v2199 = vsel %vm1119, %v2198, %v2166
        %v2200 = vsel %vm1121, %v2199, %v2169
        %v2201 = vsel %vm1123, %v2200, %v2172
        %v2202 = vsel %vm1125, %v2201, %v2175
        %v2203 = vsel %vm1127, %v2202, %v2178
        %v2204 = vsel %vm1129, %v2203, %v2181
        %v2205 = vsel %vm1131, %v2204, %v2184
        %v2206 = vsel %vm1133, %v2205, %v2187
        %v2207 = vsel %vm1135, %v2206, %v2193
        %v2208 = vsel %vm1137, %v2207, %v2196
        %2209 = vrot.lane.b32.xlu0 %v2011, 84
        %v2210 = vpop.permute.xlu0 %2209
        %v2211 = vsel %vm1294, %v2210, %v2046
        %2213 = vrot.lane.b32.xlu0 %v2012, 80
        %v2214 = vpop.permute.xlu0 %2213
        %v2216 = vsel %vm1117, %v2015, %v2018
        %v2217 = vsel %vm1119, %v2216, %v2021
        %v2218 = vsel %vm1121, %v2217, %v2024
        %v2219 = vsel %vm1123, %v2218, %v2027
        %v2220 = vsel %vm1125, %v2219, %v2030
        %v2221 = vsel %vm1127, %v2220, %v2033
        %v2222 = vsel %vm1129, %v2221, %v2036
        %v2223 = vsel %vm1131, %v2222, %v2039
        %v2224 = vsel %vm1133, %v2223, %v2042
        %v2225 = vsel %vm1135, %v2224, %v2211
        %v2226 = vsel %vm1137, %v2225, %v2214
        %v2228 = vrot.slane %v2108, 2
        %v2231 = vrot.slane %v2158, 4
        %v2234 = vrot.slane %v2208, 6
        %v2237 = vrot.slane %v2058, 2
        %2238 = vrot.lane.b32.xlu0 %v2237, 120
        %v2239 = vpop.permute.xlu0 %2238
        %v2241 = vrot.slane %v2108, 4
        %2242 = vrot.lane.b32.xlu0 %v2241, 120
        %v2243 = vpop.permute.xlu0 %2242
        %v2245 = vrot.slane %v2158, 6
        %2246 = vrot.lane.b32.xlu0 %v2245, 120
        %v2247 = vpop.permute.xlu0 %2246
        %2249 = vrot.lane.b32.xlu0 %v2208, 120
        %v2250 = vpop.permute.xlu0 %2249
        %v2253 = vrot.slane %v2226, 2
        %2254 = vrot.lane.b32.xlu0 %v2253, 120
        %v2255 = vpop.permute.xlu0 %2254
        %v2257 = vrot.slane %v2058, 4
        %2258 = vrot.lane.b32.xlu0 %v2257, 112
        %v2259 = vpop.permute.xlu0 %2258
        %v2261 = vrot.slane %v2108, 6
        %2262 = vrot.lane.b32.xlu0 %v2261, 112
        %v2263 = vpop.permute.xlu0 %2262
        %2265 = vrot.lane.b32.xlu0 %v2158, 112
        %v2266 = vpop.permute.xlu0 %2265
        %v2268 = vrot.slane %v2208, 2
        %2269 = vrot.lane.b32.xlu0 %v2268, 112
        %v2270 = vpop.permute.xlu0 %2269
        %v2272 = vrot.slane %v2226, 4
        %2273 = vrot.lane.b32.xlu0 %v2272, 112
        %v2274 = vpop.permute.xlu0 %2273
        %v2276 = vrot.slane %v2058, 6
        %2277 = vrot.lane.b32.xlu0 %v2276, 104
        %v2278 = vpop.permute.xlu0 %2277
        %v2280 = vsel %vm969, %v2058, %v2228
        %v2281 = vsel %vm1365, %v2228, %v2231
        %v2282 = vsel %vm1367, %v2231, %v2234
        %v2283 = vsel %vm969, %v2226, %v2239
        %v2284 = vsel %vm1365, %v2239, %v2243
        %v2285 = vsel %vm1367, %v2243, %v2247
        %v2286 = vsel %vm969, %v2250, %v2255
        %v2287 = vsel %vm1365, %v2255, %v2259
        %v2288 = vsel %vm1367, %v2259, %v2263
        %v2289 = vsel %vm969, %v2266, %v2270
        %v2290 = vsel %vm1365, %v2270, %v2274
        %v2291 = vsel %vm1367, %v2274, %v2278
        %v2292 = vrot.slane %v2158, 2
        %v2294 = vrot.slane %v2208, 4
        %v2296 = vrot.slane %v2226, 6
        %2298 = vrot.lane.b32.xlu0 %v2058, 120
        %v2299 = vpop.permute.xlu0 %2298
        %2301 = vrot.lane.b32.xlu0 %v2228, 120
        %v2302 = vpop.permute.xlu0 %2301
        %2304 = vrot.lane.b32.xlu0 %v2231, 120
        %v2305 = vpop.permute.xlu0 %2304
        %2307 = vrot.lane.b32.xlu0 %v2234, 120
        %v2308 = vpop.permute.xlu0 %2307
        %2310 = vrot.lane.b32.xlu0 %v2226, 120
        %v2311 = vpop.permute.xlu0 %2310
        %v2312 = vsel %vm969, %v2108, %v2292
        %v2313 = vsel %vm1365, %v2292, %v2294
        %v2314 = vsel %vm1367, %v2294, %v2296
        %v2315 = vsel %vm969, %v2299, %v2302
        %v2316 = vsel %vm1365, %v2302, %v2305
        %v2317 = vsel %vm1367, %v2305, %v2308
        %2324 = vrot.lane.b32.xlu0 %v2312, 104
        %v2325 = vpop.permute.xlu0 %2324
        %2326 = vrot.lane.b32.xlu0 %v2313, 104
        %v2327 = vpop.permute.xlu0 %2326
        %2328 = vrot.lane.b32.xlu0 %v2314, 104
        %v2329 = vpop.permute.xlu0 %2328
        %2330 = vrot.lane.b32.xlu0 %v2315, 104
        %v2331 = vpop.permute.xlu0 %2330
        %2332 = vrot.lane.b32.xlu0 %v2316, 104
        %v2333 = vpop.permute.xlu0 %2332
        %2334 = vrot.lane.b32.xlu0 %v2317, 104
        %v2335 = vpop.permute.xlu0 %2334
        %2336 = vrot.lane.b32.xlu0 %v2311, 104
        %v2337 = vpop.permute.xlu0 %2336
        %v2345 = vsel %vm1131, %v2280, 0.0
        %v2346 = vsel %vm1131, %v2281, 0.0
        %v2347 = vsel %vm1131, %v2282, 0.0
        %v2348 = vsel %vm1131, %v2283, 0.0
        %v2349 = vsel %vm1131, %v2284, 0.0
        %v2350 = vsel %vm1131, %v2285, 0.0
        %v2351 = vsel %vm1131, %v2286, 0.0
        %v2352 = vsel %vm1131, %v2287, 0.0
        %v2353 = vsel %vm1131, %v2288, 0.0
        %v2354 = vsel %vm1131, %v2289, 0.0
        %v2355 = vsel %vm1131, %v2290, 0.0
        %v2356 = vsel %vm1131, %v2291, 0.0
        %v2357 = vsel %vm1131, %v2325, 0.0
        %v2358 = vsel %vm1131, %v2327, 0.0
        %v2359 = vsel %vm1131, %v2329, 0.0
        %v2360 = vsel %vm1131, %v2331, 0.0
        %v2361 = vsel %vm1131, %v2333, 0.0
        %v2362 = vsel %vm1131, %v2335, 0.0
        %v2363 = vsel %vm1131, %v2337, 0.0
        %v2364 = vadd.f32 %v876, %v962
        %v2365 = vadd.f32 %v896, %v962
        %v2366 = vadd.f32 %v916, %v962
        %v2367 = vadd.f32 %v936, %v962
        %v2368 = vadd.f32 %v956, %v962
        %v2369 = vsel %vm969, %v2364, 0.0
        %v2370 = vsel %vm969, %v2365, 0.0
        %v2371 = vadd.f32 %v2369, %v2370
        %v2372 = vsel %vm969, %v2366, 0.0
        %v2373 = vadd.f32 %v2371, %v2372
        %v2374 = vsel %vm969, %v2367, 0.0
        %v2375 = vadd.f32 %v2373, %v2374
        %v2376 = vsel %vm977, %v2368, 0.0
        %v2377 = vadd.f32 %v2375, %v2376
        %2378 = vadd.xlane.f32.xlu0 %v2377
        %v2379 = vpop.xlane.xlu0 %2378
        %v2380 = vmul.f32 %v2379, 0.0017361111
        %v2381 = vmul.f32 %v2364, %v2364
        %v2382 = vmul.f32 %v2365, %v2365
        %v2383 = vmul.f32 %v2366, %v2366
        %v2384 = vmul.f32 %v2367, %v2367
        %v2385 = vmul.f32 %v2368, %v2368
        %v2386 = vsel %vm969, %v2381, 0.0
        %v2387 = vsel %vm969, %v2382, 0.0
        %v2388 = vadd.f32 %v2386, %v2387
        %v2389 = vsel %vm969, %v2383, 0.0
        %v2390 = vadd.f32 %v2388, %v2389
        %v2391 = vsel %vm969, %v2384, 0.0
        %v2392 = vadd.f32 %v2390, %v2391
        %v2393 = vsel %vm977, %v2385, 0.0
        %v2394 = vadd.f32 %v2392, %v2393
        %2395 = vadd.xlane.f32.xlu0 %v2394
        %v2396 = vpop.xlane.xlu0 %2395
        %v2397 = vmul.f32 %v2396, 0.0017361111
        %v2398 = vmul.f32 %v2380, %v2380
        %v2399 = vsub.f32 %v2397, %v2398
        %v2400 = vmax.f32 %v2399, 0.0
        %v2401 = vsub.f32 %v2364, %v2380
        %v2402 = vsub.f32 %v2365, %v2380
        %v2403 = vsub.f32 %v2366, %v2380
        %v2404 = vsub.f32 %v2367, %v2380
        %v2405 = vsub.f32 %v2368, %v2380
        %v2406 = vadd.f32 %v2400, 1e-05
        %v2407 = vrsqrt.pop %v2406
        %v2408 = vmul.f32 %v2407, %v2406
        %v2409 = vmul.f32 %v2408, %v2407
        %v2410 = vmul.f32 0.5, %v2409
        %v2411 = vsub.f32 1.5, %v2410
        %v2412 = vmul.f32 %v2407, %v2411
        %vm2413 = vweird.f32 %v2406
        %vm2414 = vweird.f32 %v2407
        %vm2415 = vmor %vm2413, %vm2414
        %v2416 = vsel %vm2415, %v2407, %v2412
        %v2417 = vmul.f32 %v2401, %v2416
        %v2418 = vmul.f32 %v2402, %v2416
        %v2419 = vmul.f32 %v2403, %v2416
        %v2420 = vmul.f32 %v2404, %v2416
        %v2421 = vmul.f32 %v2405, %v2416
        %v2422 = vmul.f32 %v2417, %v1026
        %v2423 = vmul.f32 %v2418, %v1026
        %v2424 = vmul.f32 %v2419, %v1026
        %v2425 = vmul.f32 %v2420, %v1026
        %v2426 = vmul.f32 %v2421, %v1026
        %v2427 = vadd.f32 %v2422, %v1035
        %v2428 = vadd.f32 %v2423, %v1035
        %v2429 = vadd.f32 %v2424, %v1035
        %v2430 = vadd.f32 %v2425, %v1035
        %v2431 = vadd.f32 %v2426, %v1035
        %v2432 = vmax.f32 %v2427, 0.0
        %v2433 = vmax.f32 %v2428, 0.0
        %v2434 = vmax.f32 %v2429, 0.0
        %v2435 = vmax.f32 %v2430, 0.0
        %v2436 = vmax.f32 %v2431, 0.0
        %2439 = vrot.lane.b32.xlu0 %v2433, 112
        %v2440 = vpop.permute.xlu0 %2439
        %2441 = vrot.lane.b32.xlu0 %v2434, 112
        %v2442 = vpop.permute.xlu0 %2441
        %v2443 = vsel %vm1053, %v2440, %v2442
        %v2446 = vmax.f32 %v2432, %v2443
        %v2447 = vmax.f32 %v2433, %v2442
        %2450 = vrot.lane.b32.xlu0 %v2435, 112
        %v2451 = vpop.permute.xlu0 %2450
        %2452 = vrot.lane.b32.xlu0 %v2436, 112
        %v2453 = vpop.permute.xlu0 %2452
        %v2454 = vsel %vm1053, %v2451, %v2453
        %v2457 = vmax.f32 %v2434, %v2454
        %v2458 = vmax.f32 %v2435, %v2453
        %2461 = vrot.lane.b32.xlu0 %v2457, 96
        %v2462 = vpop.permute.xlu0 %2461
        %2463 = vrot.lane.b32.xlu0 %v2458, 96
        %v2464 = vpop.permute.xlu0 %2463
        %v2465 = vsel %vm1076, %v2462, %v2464
        %v2468 = vmax.f32 %v2446, %v2465
        %v2469 = vmax.f32 %v2447, %v2464
        %2471 = vrot.lane.b32.xlu0 %v2468, 124
        %v2472 = vpop.permute.xlu0 %2471
        %2474 = vrot.lane.b32.xlu0 %v2468, 120
        %v2475 = vpop.permute.xlu0 %2474
        %2477 = vrot.lane.b32.xlu0 %v2468, 116
        %v2478 = vpop.permute.xlu0 %2477
        %2480 = vrot.lane.b32.xlu0 %v2468, 112
        %v2481 = vpop.permute.xlu0 %2480
        %2483 = vrot.lane.b32.xlu0 %v2468, 108
        %v2484 = vpop.permute.xlu0 %2483
        %2486 = vrot.lane.b32.xlu0 %v2468, 104
        %v2487 = vpop.permute.xlu0 %2486
        %2489 = vrot.lane.b32.xlu0 %v2468, 100
        %v2490 = vpop.permute.xlu0 %2489
        %2492 = vrot.lane.b32.xlu0 %v2468, 96
        %v2493 = vpop.permute.xlu0 %2492
        %2495 = vrot.lane.b32.xlu0 %v2468, 92
        %v2496 = vpop.permute.xlu0 %2495
        %2498 = vrot.lane.b32.xlu0 %v2468, 88
        %v2499 = vpop.permute.xlu0 %2498
        %2502 = vrot.lane.b32.xlu0 %v2469, 84
        %v2503 = vpop.permute.xlu0 %2502
        %v2505 = vsel %vm1117, %v2468, %v2472
        %v2506 = vsel %vm1119, %v2505, %v2475
        %v2507 = vsel %vm1121, %v2506, %v2478
        %v2508 = vsel %vm1123, %v2507, %v2481
        %v2509 = vsel %vm1125, %v2508, %v2484
        %v2510 = vsel %vm1127, %v2509, %v2487
        %v2511 = vsel %vm1129, %v2510, %v2490
        %v2512 = vsel %vm1131, %v2511, %v2493
        %v2513 = vsel %vm1133, %v2512, %v2496
        %v2514 = vsel %vm1135, %v2513, %v2499
        %v2515 = vsel %vm1137, %v2514, %v2503
        %2516 = vrot.lane.b32.xlu0 %v2468, 127
        %v2517 = vpop.permute.xlu0 %2516
        %2519 = vrot.lane.b32.xlu0 %v2468, 123
        %v2520 = vpop.permute.xlu0 %2519
        %2522 = vrot.lane.b32.xlu0 %v2468, 119
        %v2523 = vpop.permute.xlu0 %2522
        %2525 = vrot.lane.b32.xlu0 %v2468, 115
        %v2526 = vpop.permute.xlu0 %2525
        %2528 = vrot.lane.b32.xlu0 %v2468, 111
        %v2529 = vpop.permute.xlu0 %2528
        %2531 = vrot.lane.b32.xlu0 %v2468, 107
        %v2532 = vpop.permute.xlu0 %2531
        %2534 = vrot.lane.b32.xlu0 %v2468, 103
        %v2535 = vpop.permute.xlu0 %2534
        %2537 = vrot.lane.b32.xlu0 %v2468, 99
        %v2538 = vpop.permute.xlu0 %2537
        %2540 = vrot.lane.b32.xlu0 %v2468, 95
        %v2541 = vpop.permute.xlu0 %2540
        %2543 = vrot.lane.b32.xlu0 %v2468, 91
        %v2544 = vpop.permute.xlu0 %2543
        %2546 = vrot.lane.b32.xlu0 %v2468, 87
        %v2547 = vpop.permute.xlu0 %2546
        %2548 = vrot.lane.b32.xlu0 %v2469, 87
        %v2549 = vpop.permute.xlu0 %2548
        %v2550 = vsel %vm1173, %v2547, %v2549
        %2552 = vrot.lane.b32.xlu0 %v2469, 83
        %v2553 = vpop.permute.xlu0 %2552
        %v2555 = vsel %vm1117, %v2517, %v2520
        %v2556 = vsel %vm1119, %v2555, %v2523
        %v2557 = vsel %vm1121, %v2556, %v2526
        %v2558 = vsel %vm1123, %v2557, %v2529
        %v2559 = vsel %vm1125, %v2558, %v2532
        %v2560 = vsel %vm1127, %v2559, %v2535
        %v2561 = vsel %vm1129, %v2560, %v2538
        %v2562 = vsel %vm1131, %v2561, %v2541
        %v2563 = vsel %vm1133, %v2562, %v2544
        %v2564 = vsel %vm1135, %v2563, %v2550
        %v2565 = vsel %vm1137, %v2564, %v2553
        %2566 = vrot.lane.b32.xlu0 %v2468, 126
        %v2567 = vpop.permute.xlu0 %2566
        %2569 = vrot.lane.b32.xlu0 %v2468, 122
        %v2570 = vpop.permute.xlu0 %2569
        %2572 = vrot.lane.b32.xlu0 %v2468, 118
        %v2573 = vpop.permute.xlu0 %2572
        %2575 = vrot.lane.b32.xlu0 %v2468, 114
        %v2576 = vpop.permute.xlu0 %2575
        %2578 = vrot.lane.b32.xlu0 %v2468, 110
        %v2579 = vpop.permute.xlu0 %2578
        %2581 = vrot.lane.b32.xlu0 %v2468, 106
        %v2582 = vpop.permute.xlu0 %2581
        %2584 = vrot.lane.b32.xlu0 %v2468, 102
        %v2585 = vpop.permute.xlu0 %2584
        %2587 = vrot.lane.b32.xlu0 %v2468, 98
        %v2588 = vpop.permute.xlu0 %2587
        %2590 = vrot.lane.b32.xlu0 %v2468, 94
        %v2591 = vpop.permute.xlu0 %2590
        %2593 = vrot.lane.b32.xlu0 %v2468, 90
        %v2594 = vpop.permute.xlu0 %2593
        %2596 = vrot.lane.b32.xlu0 %v2468, 86
        %v2597 = vpop.permute.xlu0 %2596
        %2598 = vrot.lane.b32.xlu0 %v2469, 86
        %v2599 = vpop.permute.xlu0 %2598
        %v2600 = vsel %vm1224, %v2597, %v2599
        %2602 = vrot.lane.b32.xlu0 %v2469, 82
        %v2603 = vpop.permute.xlu0 %2602
        %v2605 = vsel %vm1117, %v2567, %v2570
        %v2606 = vsel %vm1119, %v2605, %v2573
        %v2607 = vsel %vm1121, %v2606, %v2576
        %v2608 = vsel %vm1123, %v2607, %v2579
        %v2609 = vsel %vm1125, %v2608, %v2582
        %v2610 = vsel %vm1127, %v2609, %v2585
        %v2611 = vsel %vm1129, %v2610, %v2588
        %v2612 = vsel %vm1131, %v2611, %v2591
        %v2613 = vsel %vm1133, %v2612, %v2594
        %v2614 = vsel %vm1135, %v2613, %v2600
        %v2615 = vsel %vm1137, %v2614, %v2603
        %2616 = vrot.lane.b32.xlu0 %v2468, 125
        %v2617 = vpop.permute.xlu0 %2616
        %2619 = vrot.lane.b32.xlu0 %v2468, 121
        %v2620 = vpop.permute.xlu0 %2619
        %2622 = vrot.lane.b32.xlu0 %v2468, 117
        %v2623 = vpop.permute.xlu0 %2622
        %2625 = vrot.lane.b32.xlu0 %v2468, 113
        %v2626 = vpop.permute.xlu0 %2625
        %2628 = vrot.lane.b32.xlu0 %v2468, 109
        %v2629 = vpop.permute.xlu0 %2628
        %2631 = vrot.lane.b32.xlu0 %v2468, 105
        %v2632 = vpop.permute.xlu0 %2631
        %2634 = vrot.lane.b32.xlu0 %v2468, 101
        %v2635 = vpop.permute.xlu0 %2634
        %2637 = vrot.lane.b32.xlu0 %v2468, 97
        %v2638 = vpop.permute.xlu0 %2637
        %2640 = vrot.lane.b32.xlu0 %v2468, 93
        %v2641 = vpop.permute.xlu0 %2640
        %2643 = vrot.lane.b32.xlu0 %v2468, 89
        %v2644 = vpop.permute.xlu0 %2643
        %2646 = vrot.lane.b32.xlu0 %v2468, 85
        %v2647 = vpop.permute.xlu0 %2646
        %2648 = vrot.lane.b32.xlu0 %v2469, 85
        %v2649 = vpop.permute.xlu0 %2648
        %v2650 = vsel %vm1275, %v2647, %v2649
        %2652 = vrot.lane.b32.xlu0 %v2469, 81
        %v2653 = vpop.permute.xlu0 %2652
        %v2655 = vsel %vm1117, %v2617, %v2620
        %v2656 = vsel %vm1119, %v2655, %v2623
        %v2657 = vsel %vm1121, %v2656, %v2626
        %v2658 = vsel %vm1123, %v2657, %v2629
        %v2659 = vsel %vm1125, %v2658, %v2632
        %v2660 = vsel %vm1127, %v2659, %v2635
        %v2661 = vsel %vm1129, %v2660, %v2638
        %v2662 = vsel %vm1131, %v2661, %v2641
        %v2663 = vsel %vm1133, %v2662, %v2644
        %v2664 = vsel %vm1135, %v2663, %v2650
        %v2665 = vsel %vm1137, %v2664, %v2653
        %2666 = vrot.lane.b32.xlu0 %v2468, 84
        %v2667 = vpop.permute.xlu0 %2666
        %v2668 = vsel %vm1294, %v2667, %v2503
        %2670 = vrot.lane.b32.xlu0 %v2469, 80
        %v2671 = vpop.permute.xlu0 %2670
        %v2673 = vsel %vm1117, %v2472, %v2475
        %v2674 = vsel %vm1119, %v2673, %v2478
        %v2675 = vsel %vm1121, %v2674, %v2481
        %v2676 = vsel %vm1123, %v2675, %v2484
        %v2677 = vsel %vm1125, %v2676, %v2487
        %v2678 = vsel %vm1127, %v2677, %v2490
        %v2679 = vsel %vm1129, %v2678, %v2493
        %v2680 = vsel %vm1131, %v2679, %v2496
        %v2681 = vsel %vm1133, %v2680, %v2499
        %v2682 = vsel %vm1135, %v2681, %v2668
        %v2683 = vsel %vm1137, %v2682, %v2671
        %v2685 = vrot.slane %v2565, 2
        %v2688 = vrot.slane %v2615, 4
        %v2691 = vrot.slane %v2665, 6
        %v2694 = vrot.slane %v2515, 2
        %2695 = vrot.lane.b32.xlu0 %v2694, 120
        %v2696 = vpop.permute.xlu0 %2695
        %v2698 = vrot.slane %v2565, 4
        %2699 = vrot.lane.b32.xlu0 %v2698, 120
        %v2700 = vpop.permute.xlu0 %2699
        %v2702 = vrot.slane %v2615, 6
        %2703 = vrot.lane.b32.xlu0 %v2702, 120
        %v2704 = vpop.permute.xlu0 %2703
        %2706 = vrot.lane.b32.xlu0 %v2665, 120
        %v2707 = vpop.permute.xlu0 %2706
        %v2710 = vrot.slane %v2683, 2
        %2711 = vrot.lane.b32.xlu0 %v2710, 120
        %v2712 = vpop.permute.xlu0 %2711
        %v2714 = vrot.slane %v2515, 4
        %2715 = vrot.lane.b32.xlu0 %v2714, 112
        %v2716 = vpop.permute.xlu0 %2715
        %v2718 = vrot.slane %v2565, 6
        %2719 = vrot.lane.b32.xlu0 %v2718, 112
        %v2720 = vpop.permute.xlu0 %2719
        %2722 = vrot.lane.b32.xlu0 %v2615, 112
        %v2723 = vpop.permute.xlu0 %2722
        %v2725 = vrot.slane %v2665, 2
        %2726 = vrot.lane.b32.xlu0 %v2725, 112
        %v2727 = vpop.permute.xlu0 %2726
        %v2729 = vrot.slane %v2683, 4
        %2730 = vrot.lane.b32.xlu0 %v2729, 112
        %v2731 = vpop.permute.xlu0 %2730
        %v2733 = vrot.slane %v2515, 6
        %2734 = vrot.lane.b32.xlu0 %v2733, 104
        %v2735 = vpop.permute.xlu0 %2734
        %v2737 = vsel %vm969, %v2515, %v2685
        %v2738 = vsel %vm1365, %v2685, %v2688
        %v2739 = vsel %vm1367, %v2688, %v2691
        %v2740 = vsel %vm969, %v2683, %v2696
        %v2741 = vsel %vm1365, %v2696, %v2700
        %v2742 = vsel %vm1367, %v2700, %v2704
        %v2743 = vsel %vm969, %v2707, %v2712
        %v2744 = vsel %vm1365, %v2712, %v2716
        %v2745 = vsel %vm1367, %v2716, %v2720
        %v2746 = vsel %vm969, %v2723, %v2727
        %v2747 = vsel %vm1365, %v2727, %v2731
        %v2748 = vsel %vm1367, %v2731, %v2735
        %v2749 = vrot.slane %v2615, 2
        %v2751 = vrot.slane %v2665, 4
        %v2753 = vrot.slane %v2683, 6
        %2755 = vrot.lane.b32.xlu0 %v2515, 120
        %v2756 = vpop.permute.xlu0 %2755
        %2758 = vrot.lane.b32.xlu0 %v2685, 120
        %v2759 = vpop.permute.xlu0 %2758
        %2761 = vrot.lane.b32.xlu0 %v2688, 120
        %v2762 = vpop.permute.xlu0 %2761
        %2764 = vrot.lane.b32.xlu0 %v2691, 120
        %v2765 = vpop.permute.xlu0 %2764
        %2767 = vrot.lane.b32.xlu0 %v2683, 120
        %v2768 = vpop.permute.xlu0 %2767
        %v2769 = vsel %vm969, %v2565, %v2749
        %v2770 = vsel %vm1365, %v2749, %v2751
        %v2771 = vsel %vm1367, %v2751, %v2753
        %v2772 = vsel %vm969, %v2756, %v2759
        %v2773 = vsel %vm1365, %v2759, %v2762
        %v2774 = vsel %vm1367, %v2762, %v2765
        %2781 = vrot.lane.b32.xlu0 %v2769, 104
        %v2782 = vpop.permute.xlu0 %2781
        %2783 = vrot.lane.b32.xlu0 %v2770, 104
        %v2784 = vpop.permute.xlu0 %2783
        %2785 = vrot.lane.b32.xlu0 %v2771, 104
        %v2786 = vpop.permute.xlu0 %2785
        %2787 = vrot.lane.b32.xlu0 %v2772, 104
        %v2788 = vpop.permute.xlu0 %2787
        %2789 = vrot.lane.b32.xlu0 %v2773, 104
        %v2790 = vpop.permute.xlu0 %2789
        %2791 = vrot.lane.b32.xlu0 %v2774, 104
        %v2792 = vpop.permute.xlu0 %2791
        %2793 = vrot.lane.b32.xlu0 %v2768, 104
        %v2794 = vpop.permute.xlu0 %2793
        %v2802 = vsel %vm1131, %v2737, 0.0
        %v2803 = vsel %vm1131, %v2738, 0.0
        %v2804 = vsel %vm1131, %v2739, 0.0
        %v2805 = vsel %vm1131, %v2740, 0.0
        %v2806 = vsel %vm1131, %v2741, 0.0
        %v2807 = vsel %vm1131, %v2742, 0.0
        %v2808 = vsel %vm1131, %v2743, 0.0
        %v2809 = vsel %vm1131, %v2744, 0.0
        %v2810 = vsel %vm1131, %v2745, 0.0
        %v2811 = vsel %vm1131, %v2746, 0.0
        %v2812 = vsel %vm1131, %v2747, 0.0
        %v2813 = vsel %vm1131, %v2748, 0.0
        %v2814 = vsel %vm1131, %v2782, 0.0
        %v2815 = vsel %vm1131, %v2784, 0.0
        %v2816 = vsel %vm1131, %v2786, 0.0
        %v2817 = vsel %vm1131, %v2788, 0.0
        %v2818 = vsel %vm1131, %v2790, 0.0
        %v2819 = vsel %vm1131, %v2792, 0.0
        %v2820 = vsel %vm1131, %v2794, 0.0
        %v2821 = vld [vmem:[%s3] sm:$0xff]
        %v2822 = vld [vmem:[%s3 + $0x8] sm:$0xff]
        %v2823 = vld [vmem:[%s3 + $0x10] sm:$0xff]
        %v2824 = vld [vmem:[%s3 + $0x18] sm:$0xff]
        %vm2825 = vcmask 179200
        %v2827 = vsel %vm2825, %v2822, 0
        %v2830 = vsel %vm2825, %v2824, 0
        %v2833 = vsel %vm969, %v1449, 0
        %v2836 = vsel %vm969, %v1906, 0
        %v2839 = vsel %vm969, %v2363, 0
        %v2842 = vsel %vm969, %v2820, 0
        %2844 = vmatpush.msra.mxu0 %v1446
        %2845 = vmatpush.msra.mxu0 %v1445
        %2846 = vmatpush.msra.mxu0 %v1444
        %2847 = vmatpush.msra.mxu0 %v1443
        %2848 = vmatpush.msra.mxu0 %v1442
        %2849 = vmatpush.msra.mxu0 %v1441
        %2850 = vmatpush.msra.mxu0 %v1440
        %2851 = vmatpush.msra.mxu0 %v1439
        %2852 = vmatpush.msra.mxu0 %v1438
        %2853 = vmatpush.msra.mxu0 %v1437
        %2854 = vmatpush.msra.mxu0 %v1436
        %2855 = vmatpush.msra.mxu0 %v1435
        %2856 = vmatpush.msra.mxu0 %v1434
        %2857 = vmatpush.msra.mxu0 %v1433
        %2858 = vmatpush.msra.mxu0 %v1432
        %2859 = vmatpush.msra.mxu0 %v1431
        %2860 = vmatmul.f32.gmra.mxu0 %v2821
        %v2861 = vpop.f32.mrf.mxu0
        %v2862 = vadd.f32 0.0, %v2861
        %2863 = vmatmul.f32.gmra.mxu0 %v2823
        %v2864 = vpop.f32.mrf.mxu0
        %v2865 = vadd.f32 0.0, %v2864
        %2866 = vdwg.mxu0
        %2867 = vmatpush.msra.mxu0 0.0
        %2868 = vmatpush.msra.mxu0 0.0
        %2869 = vmatpush.msra.mxu0 0.0
        %2870 = vmatpush.msra.mxu0 0.0
        %2871 = vmatpush.msra.mxu0 0.0
        %2872 = vmatpush.msra.mxu0 0.0
        %2873 = vmatpush.msra.mxu0 0.0
        %2874 = vmatpush.msra.mxu0 0.0
        %2875 = vmatpush.msra.mxu0 0.0
        %2876 = vmatpush.msra.mxu0 0.0
        %2877 = vmatpush.msra.mxu0 0.0
        %2878 = vmatpush.msra.mxu0 0.0
        %2879 = vmatpush.msra.mxu0 0.0
        %2880 = vmatpush.msra.mxu0 %v2833
        %2881 = vmatpush.msra.mxu0 %v1448
        %2882 = vmatpush.msra.mxu0 %v1447
        %2883 = vmatmul.f32.gmra.mxu0 %v2827
        %v2884 = vpop.f32.mrf.mxu0
        %v2885 = vadd.f32 %v2862, %v2884
        %2886 = vmatmul.f32.gmra.mxu0 %v2830
        %v2887 = vpop.f32.mrf.mxu0
        %v2888 = vadd.f32 %v2865, %v2887
        %2889 = vdwg.mxu0
        %2890 = vmatpush.msra.mxu0 %v1903
        %2891 = vmatpush.msra.mxu0 %v1902
        %2892 = vmatpush.msra.mxu0 %v1901
        %2893 = vmatpush.msra.mxu0 %v1900
        %2894 = vmatpush.msra.mxu0 %v1899
        %2895 = vmatpush.msra.mxu0 %v1898
        %2896 = vmatpush.msra.mxu0 %v1897
        %2897 = vmatpush.msra.mxu0 %v1896
        %2898 = vmatpush.msra.mxu0 %v1895
        %2899 = vmatpush.msra.mxu0 %v1894
        %2900 = vmatpush.msra.mxu0 %v1893
        %2901 = vmatpush.msra.mxu0 %v1892
        %2902 = vmatpush.msra.mxu0 %v1891
        %2903 = vmatpush.msra.mxu0 %v1890
        %2904 = vmatpush.msra.mxu0 %v1889
        %2905 = vmatpush.msra.mxu0 %v1888
        %2906 = vmatmul.f32.gmra.mxu0 %v2821
        %v2907 = vpop.f32.mrf.mxu0
        %v2908 = vadd.f32 0.0, %v2907
        %2909 = vmatmul.f32.gmra.mxu0 %v2823
        %v2910 = vpop.f32.mrf.mxu0
        %v2911 = vadd.f32 0.0, %v2910
        %2912 = vdwg.mxu0
        %2913 = vmatpush.msra.mxu0 0.0
        %2914 = vmatpush.msra.mxu0 0.0
        %2915 = vmatpush.msra.mxu0 0.0
        %2916 = vmatpush.msra.mxu0 0.0
        %2917 = vmatpush.msra.mxu0 0.0
        %2918 = vmatpush.msra.mxu0 0.0
        %2919 = vmatpush.msra.mxu0 0.0
        %2920 = vmatpush.msra.mxu0 0.0
        %2921 = vmatpush.msra.mxu0 0.0
        %2922 = vmatpush.msra.mxu0 0.0
        %2923 = vmatpush.msra.mxu0 0.0
        %2924 = vmatpush.msra.mxu0 0.0
        %2925 = vmatpush.msra.mxu0 0.0
        %2926 = vmatpush.msra.mxu0 %v2836
        %2927 = vmatpush.msra.mxu0 %v1905
        %2928 = vmatpush.msra.mxu0 %v1904
        %2929 = vmatmul.f32.gmra.mxu0 %v2827
        %v2930 = vpop.f32.mrf.mxu0
        %v2931 = vadd.f32 %v2908, %v2930
        %2932 = vmatmul.f32.gmra.mxu0 %v2830
        %v2933 = vpop.f32.mrf.mxu0
        %v2934 = vadd.f32 %v2911, %v2933
        %2935 = vdwg.mxu0
        %2936 = vmatpush.msra.mxu0 %v2360
        %2937 = vmatpush.msra.mxu0 %v2359
        %2938 = vmatpush.msra.mxu0 %v2358
        %2939 = vmatpush.msra.mxu0 %v2357
        %2940 = vmatpush.msra.mxu0 %v2356
        %2941 = vmatpush.msra.mxu0 %v2355
        %2942 = vmatpush.msra.mxu0 %v2354
        %2943 = vmatpush.msra.mxu0 %v2353
        %2944 = vmatpush.msra.mxu0 %v2352
        %2945 = vmatpush.msra.mxu0 %v2351
        %2946 = vmatpush.msra.mxu0 %v2350
        %2947 = vmatpush.msra.mxu0 %v2349
        %2948 = vmatpush.msra.mxu0 %v2348
        %2949 = vmatpush.msra.mxu0 %v2347
        %2950 = vmatpush.msra.mxu0 %v2346
        %2951 = vmatpush.msra.mxu0 %v2345
        %2952 = vmatmul.f32.gmra.mxu0 %v2821
        %v2953 = vpop.f32.mrf.mxu0
        %v2954 = vadd.f32 0.0, %v2953
        %2955 = vmatmul.f32.gmra.mxu0 %v2823
        %v2956 = vpop.f32.mrf.mxu0
        %v2957 = vadd.f32 0.0, %v2956
        %2958 = vdwg.mxu0
        %2959 = vmatpush.msra.mxu0 0.0
        %2960 = vmatpush.msra.mxu0 0.0
        %2961 = vmatpush.msra.mxu0 0.0
        %2962 = vmatpush.msra.mxu0 0.0
        %2963 = vmatpush.msra.mxu0 0.0
        %2964 = vmatpush.msra.mxu0 0.0
        %2965 = vmatpush.msra.mxu0 0.0
        %2966 = vmatpush.msra.mxu0 0.0
        %2967 = vmatpush.msra.mxu0 0.0
        %2968 = vmatpush.msra.mxu0 0.0
        %2969 = vmatpush.msra.mxu0 0.0
        %2970 = vmatpush.msra.mxu0 0.0
        %2971 = vmatpush.msra.mxu0 0.0
        %2972 = vmatpush.msra.mxu0 %v2839
        %2973 = vmatpush.msra.mxu0 %v2362
        %2974 = vmatpush.msra.mxu0 %v2361
        %2975 = vmatmul.f32.gmra.mxu0 %v2827
        %v2976 = vpop.f32.mrf.mxu0
        %v2977 = vadd.f32 %v2954, %v2976
        %2978 = vmatmul.f32.gmra.mxu0 %v2830
        %v2979 = vpop.f32.mrf.mxu0
        %v2980 = vadd.f32 %v2957, %v2979
        %2981 = vdwg.mxu0
        %2982 = vmatpush.msra.mxu0 %v2817
        %2983 = vmatpush.msra.mxu0 %v2816
        %2984 = vmatpush.msra.mxu0 %v2815
        %2985 = vmatpush.msra.mxu0 %v2814
        %2986 = vmatpush.msra.mxu0 %v2813
        %2987 = vmatpush.msra.mxu0 %v2812
        %2988 = vmatpush.msra.mxu0 %v2811
        %2989 = vmatpush.msra.mxu0 %v2810
        %2990 = vmatpush.msra.mxu0 %v2809
        %2991 = vmatpush.msra.mxu0 %v2808
        %2992 = vmatpush.msra.mxu0 %v2807
        %2993 = vmatpush.msra.mxu0 %v2806
        %2994 = vmatpush.msra.mxu0 %v2805
        %2995 = vmatpush.msra.mxu0 %v2804
        %2996 = vmatpush.msra.mxu0 %v2803
        %2997 = vmatpush.msra.mxu0 %v2802
        %2998 = vmatmul.f32.gmra.mxu0 %v2821
        %v2999 = vpop.f32.mrf.mxu0
        %v3000 = vadd.f32 0.0, %v2999
        %3001 = vmatmul.f32.gmra.mxu0 %v2823
        %v3002 = vpop.f32.mrf.mxu0
        %v3003 = vadd.f32 0.0, %v3002
        %3004 = vdwg.mxu0
        %3005 = vmatpush.msra.mxu0 0.0
        %3006 = vmatpush.msra.mxu0 0.0
        %3007 = vmatpush.msra.mxu0 0.0
        %3008 = vmatpush.msra.mxu0 0.0
        %3009 = vmatpush.msra.mxu0 0.0
        %3010 = vmatpush.msra.mxu0 0.0
        %3011 = vmatpush.msra.mxu0 0.0
        %3012 = vmatpush.msra.mxu0 0.0
        %3013 = vmatpush.msra.mxu0 0.0
        %3014 = vmatpush.msra.mxu0 0.0
        %3015 = vmatpush.msra.mxu0 0.0
        %3016 = vmatpush.msra.mxu0 0.0
        %3017 = vmatpush.msra.mxu0 0.0
        %3018 = vmatpush.msra.mxu0 %v2842
        %3019 = vmatpush.msra.mxu0 %v2819
        %3020 = vmatpush.msra.mxu0 %v2818
        %3021 = vmatmul.f32.gmra.mxu0 %v2827
        %v3022 = vpop.f32.mrf.mxu0
        %v3023 = vadd.f32 %v3000, %v3022
        %3024 = vmatmul.f32.gmra.mxu0 %v2830
        %v3025 = vpop.f32.mrf.mxu0
        %v3026 = vadd.f32 %v3003, %v3025
        %3027 = vdwg.mxu0
        %v3028 = vld [vmem:[%s5] sm:$0xff]
        %v3029 = vld [vmem:[%s5 + $0x8] sm:$0xff]
        %v3030 = vld [vmem:[%s5 + $0x10] sm:$0xff]
        %v3031 = vld [vmem:[%s5 + $0x18] sm:$0xff]
        %v3032 = vld [vmem:[%s5 + $0x20] sm:$0xff]
        %v3033 = vld [vmem:[%s5 + $0x28] sm:$0xff]
        %v3034 = vld [vmem:[%s5 + $0x30] sm:$0xff]
        %v3035 = vld [vmem:[%s5 + $0x38] sm:$0xff]
        %v3036 = vld [vmem:[%s4] sm:$0xff]
        %v3037 = vld [vmem:[%s4 + $0x8] sm:$0xff]
        %3039 = vset.pattern.permute.xlu0 0
        %3040 = vperm.xlu0 %3039, %v3036
        %v3041 = vpop.permute.xlu0 %3040
        %3044 = vset.pattern.permute.xlu0 0
        %3045 = vperm.xlu0 %3044, %v3037
        %v3046 = vpop.permute.xlu0 %3045
        %v3048 = vadd.f32 %v2885, %v3041
        %v3049 = vadd.f32 %v2888, %v3046
        %v3050 = vsel %vm1131, %v3048, 0.0
        %3051 = vadd.xlane.f32.xlu0 %v3050
        %v3052 = vpop.xlane.xlu0 %3051
        %v3053 = vsel %vm1131, %v3049, 0.0
        %3054 = vadd.xlane.f32.xlu0 %v3053
        %v3055 = vpop.xlane.xlu0 %3054
        %v3056 = vmul.f32 %v3052, 0.015625
        %v3057 = vmul.f32 %v3055, 0.015625
        %v3058 = vmul.f32 %v3048, %v3048
        %v3059 = vmul.f32 %v3049, %v3049
        %v3060 = vsel %vm1131, %v3058, 0.0
        %3061 = vadd.xlane.f32.xlu0 %v3060
        %v3062 = vpop.xlane.xlu0 %3061
        %v3063 = vsel %vm1131, %v3059, 0.0
        %3064 = vadd.xlane.f32.xlu0 %v3063
        %v3065 = vpop.xlane.xlu0 %3064
        %v3066 = vmul.f32 %v3062, 0.015625
        %v3067 = vmul.f32 %v3065, 0.015625
        %v3068 = vmul.f32 %v3056, %v3056
        %v3069 = vmul.f32 %v3057, %v3057
        %v3070 = vsub.f32 %v3066, %v3068
        %v3071 = vsub.f32 %v3067, %v3069
        %v3072 = vmax.f32 %v3070, 0.0
        %v3073 = vmax.f32 %v3071, 0.0
        %v3074 = vsub.f32 %v3048, %v3056
        %v3075 = vsub.f32 %v3049, %v3057
        %v3076 = vadd.f32 %v3072, 1e-05
        %v3077 = vadd.f32 %v3073, 1e-05
        %v3078 = vrsqrt.pop %v3076
        %v3079 = vmul.f32 %v3078, %v3076
        %v3080 = vmul.f32 %v3079, %v3078
        %v3081 = vmul.f32 0.5, %v3080
        %v3082 = vsub.f32 1.5, %v3081
        %v3083 = vmul.f32 %v3078, %v3082
        %vm3084 = vweird.f32 %v3076
        %vm3085 = vweird.f32 %v3078
        %vm3086 = vmor %vm3084, %vm3085
        %v3087 = vsel %vm3086, %v3078, %v3083
        %v3088 = vrsqrt.pop %v3077
        %v3089 = vmul.f32 %v3088, %v3077
        %v3090 = vmul.f32 %v3089, %v3088
        %v3091 = vmul.f32 0.5, %v3090
        %v3092 = vsub.f32 1.5, %v3091
        %v3093 = vmul.f32 %v3088, %v3092
        %vm3094 = vweird.f32 %v3077
        %vm3095 = vweird.f32 %v3088
        %vm3096 = vmor %vm3094, %vm3095
        %v3097 = vsel %vm3096, %v3088, %v3093
        %v3098 = vmul.f32 %v3074, %v3087
        %v3099 = vmul.f32 %v3075, %v3097
        %3100 = vset.pattern.permute.xlu0 1
        %3101 = vperm.xlu0 %3100, %v3036
        %v3102 = vpop.permute.xlu0 %3101
        %3104 = vset.pattern.permute.xlu0 1
        %3105 = vperm.xlu0 %3104, %v3037
        %v3106 = vpop.permute.xlu0 %3105
        %v3108 = vmul.f32 %v3098, %v3102
        %v3109 = vmul.f32 %v3099, %v3106
        %3110 = vset.pattern.permute.xlu0 2
        %3111 = vperm.xlu0 %3110, %v3036
        %v3112 = vpop.permute.xlu0 %3111
        %3114 = vset.pattern.permute.xlu0 2
        %3115 = vperm.xlu0 %3114, %v3037
        %v3116 = vpop.permute.xlu0 %3115
        %v3118 = vadd.f32 %v3108, %v3112
        %v3119 = vadd.f32 %v3109, %v3116
        %v3120 = vmax.f32 %v3118, 0.0
        %v3121 = vmax.f32 %v3119, 0.0
        %v3123 = vsel %vm1131, %v3120, 0
        %v3126 = vsel %vm1131, %v3121, 0
        %3128 = vmatpush.msra.mxu0 0.0
        %3129 = vmatpush.msra.mxu0 0.0
        %3130 = vmatpush.msra.mxu0 0.0
        %3131 = vmatpush.msra.mxu0 0.0
        %3132 = vmatpush.msra.mxu0 0.0
        %3133 = vmatpush.msra.mxu0 0.0
        %3134 = vmatpush.msra.mxu0 0.0
        %3135 = vmatpush.msra.mxu0 0.0
        %3136 = vmatpush.msra.mxu0 %v3035
        %3137 = vmatpush.msra.mxu0 %v3034
        %3138 = vmatpush.msra.mxu0 %v3033
        %3139 = vmatpush.msra.mxu0 %v3032
        %3140 = vmatpush.msra.mxu0 %v3031
        %3141 = vmatpush.msra.mxu0 %v3030
        %3142 = vmatpush.msra.mxu0 %v3029
        %3143 = vmatpush.msra.mxu0 %v3028
        %3144 = vmatmul.f32.gmra.mxu0 %v3123
        %v3145 = vpop.f32.mrf.mxu0
        %v3146 = vadd.f32 0.0, %v3145
        %3147 = vmatmul.f32.gmra.mxu0 %v3126
        %v3148 = vpop.f32.mrf.mxu0
        %v3149 = vadd.f32 0.0, %v3148
        %3150 = vdwg.mxu0
        %3153 = vrot.lane.b32.xlu0 %v3146, 112
        %v3154 = vpop.permute.xlu0 %3153
        %3155 = vrot.lane.b32.xlu0 %v3149, 112
        %v3156 = vpop.permute.xlu0 %3155
        %v3159 = vmax.f32 %v3146, %v3154
        %v3160 = vmax.f32 %v3149, %v3156
        %3163 = vrot.lane.b32.xlu0 %v3159, 96
        %v3164 = vpop.permute.xlu0 %3163
        %3165 = vrot.lane.b32.xlu0 %v3160, 96
        %v3166 = vpop.permute.xlu0 %3165
        %v3169 = vmax.f32 %v3159, %v3164
        %v3170 = vmax.f32 %v3160, %v3166
        %v3172 = vrot.slane %v3169, 1
        %3173 = vrot.lane.b32.xlu0 %v3172, 16
        %v3174 = vpop.permute.xlu0 %3173
        %v3176 = vrot.slane %v3169, 2
        %3177 = vrot.lane.b32.xlu0 %v3176, 32
        %v3178 = vpop.permute.xlu0 %3177
        %v3180 = vrot.slane %v3169, 3
        %3181 = vrot.lane.b32.xlu0 %v3180, 48
        %v3182 = vpop.permute.xlu0 %3181
        %v3184 = vrot.slane %v3169, 4
        %3185 = vrot.lane.b32.xlu0 %v3184, 64
        %v3186 = vpop.permute.xlu0 %3185
        %v3188 = vrot.slane %v3169, 5
        %3189 = vrot.lane.b32.xlu0 %v3188, 80
        %v3190 = vpop.permute.xlu0 %3189
        %v3192 = vrot.slane %v3169, 6
        %3193 = vrot.lane.b32.xlu0 %v3192, 96
        %v3194 = vpop.permute.xlu0 %3193
        %v3196 = vrot.slane %v3169, 7
        %3197 = vrot.lane.b32.xlu0 %v3196, 112
        %v3198 = vpop.permute.xlu0 %3197
        %v3201 = vrot.slane %v3170, 1
        %3202 = vrot.lane.b32.xlu0 %v3201, 16
        %v3203 = vpop.permute.xlu0 %3202
        %v3205 = vrot.slane %v3170, 2
        %3206 = vrot.lane.b32.xlu0 %v3205, 32
        %v3207 = vpop.permute.xlu0 %3206
        %v3209 = vrot.slane %v3170, 3
        %3210 = vrot.lane.b32.xlu0 %v3209, 48
        %v3211 = vpop.permute.xlu0 %3210
        %v3213 = vrot.slane %v3170, 4
        %3214 = vrot.lane.b32.xlu0 %v3213, 64
        %v3215 = vpop.permute.xlu0 %3214
        %v3217 = vrot.slane %v3170, 5
        %3218 = vrot.lane.b32.xlu0 %v3217, 80
        %v3219 = vpop.permute.xlu0 %3218
        %v3221 = vrot.slane %v3170, 6
        %3222 = vrot.lane.b32.xlu0 %v3221, 96
        %v3223 = vpop.permute.xlu0 %3222
        %v3225 = vrot.slane %v3170, 7
        %3226 = vrot.lane.b32.xlu0 %v3225, 112
        %v3227 = vpop.permute.xlu0 %3226
        %v3229 = vsel %vm1119, %v3169, %v3174
        %v3230 = vsel %vm1123, %v3229, %v3178
        %v3231 = vsel %vm1127, %v3230, %v3182
        %v3232 = vsel %vm1131, %v3231, %v3186
        %v3233 = vsel %vm1135, %v3232, %v3190
        %v3234 = vsel %vm1076, %v3233, %v3194
        %v3235 = vsel %vm1053, %v3234, %v3198
        %v3236 = vsel %vm1119, %v3170, %v3203
        %v3237 = vsel %vm1123, %v3236, %v3207
        %v3238 = vsel %vm1127, %v3237, %v3211
        %v3239 = vsel %vm1131, %v3238, %v3215
        %v3240 = vsel %vm1135, %v3239, %v3219
        %v3241 = vsel %vm1076, %v3240, %v3223
        %v3242 = vsel %vm1053, %v3241, %v3227
        %v3243 = vadd.f32 %v2931, %v3041
        %v3244 = vadd.f32 %v2934, %v3046
        %v3245 = vsel %vm1131, %v3243, 0.0
        %3246 = vadd.xlane.f32.xlu0 %v3245
        %v3247 = vpop.xlane.xlu0 %3246
        %v3248 = vsel %vm1131, %v3244, 0.0
        %3249 = vadd.xlane.f32.xlu0 %v3248
        %v3250 = vpop.xlane.xlu0 %3249
        %v3251 = vmul.f32 %v3247, 0.015625
        %v3252 = vmul.f32 %v3250, 0.015625
        %v3253 = vmul.f32 %v3243, %v3243
        %v3254 = vmul.f32 %v3244, %v3244
        %v3255 = vsel %vm1131, %v3253, 0.0
        %3256 = vadd.xlane.f32.xlu0 %v3255
        %v3257 = vpop.xlane.xlu0 %3256
        %v3258 = vsel %vm1131, %v3254, 0.0
        %3259 = vadd.xlane.f32.xlu0 %v3258
        %v3260 = vpop.xlane.xlu0 %3259
        %v3261 = vmul.f32 %v3257, 0.015625
        %v3262 = vmul.f32 %v3260, 0.015625
        %v3263 = vmul.f32 %v3251, %v3251
        %v3264 = vmul.f32 %v3252, %v3252
        %v3265 = vsub.f32 %v3261, %v3263
        %v3266 = vsub.f32 %v3262, %v3264
        %v3267 = vmax.f32 %v3265, 0.0
        %v3268 = vmax.f32 %v3266, 0.0
        %v3269 = vsub.f32 %v3243, %v3251
        %v3270 = vsub.f32 %v3244, %v3252
        %v3271 = vadd.f32 %v3267, 1e-05
        %v3272 = vadd.f32 %v3268, 1e-05
        %v3273 = vrsqrt.pop %v3271
        %v3274 = vmul.f32 %v3273, %v3271
        %v3275 = vmul.f32 %v3274, %v3273
        %v3276 = vmul.f32 0.5, %v3275
        %v3277 = vsub.f32 1.5, %v3276
        %v3278 = vmul.f32 %v3273, %v3277
        %vm3279 = vweird.f32 %v3271
        %vm3280 = vweird.f32 %v3273
        %vm3281 = vmor %vm3279, %vm3280
        %v3282 = vsel %vm3281, %v3273, %v3278
        %v3283 = vrsqrt.pop %v3272
        %v3284 = vmul.f32 %v3283, %v3272
        %v3285 = vmul.f32 %v3284, %v3283
        %v3286 = vmul.f32 0.5, %v3285
        %v3287 = vsub.f32 1.5, %v3286
        %v3288 = vmul.f32 %v3283, %v3287
        %vm3289 = vweird.f32 %v3272
        %vm3290 = vweird.f32 %v3283
        %vm3291 = vmor %vm3289, %vm3290
        %v3292 = vsel %vm3291, %v3283, %v3288
        %v3293 = vmul.f32 %v3269, %v3282
        %v3294 = vmul.f32 %v3270, %v3292
        %v3295 = vmul.f32 %v3293, %v3102
        %v3296 = vmul.f32 %v3294, %v3106
        %v3297 = vadd.f32 %v3295, %v3112
        %v3298 = vadd.f32 %v3296, %v3116
        %v3299 = vmax.f32 %v3297, 0.0
        %v3300 = vmax.f32 %v3298, 0.0
        %v3302 = vsel %vm1131, %v3299, 0
        %v3305 = vsel %vm1131, %v3300, 0
        %3307 = vmatpush.msra.mxu0 0.0
        %3308 = vmatpush.msra.mxu0 0.0
        %3309 = vmatpush.msra.mxu0 0.0
        %3310 = vmatpush.msra.mxu0 0.0
        %3311 = vmatpush.msra.mxu0 0.0
        %3312 = vmatpush.msra.mxu0 0.0
        %3313 = vmatpush.msra.mxu0 0.0
        %3314 = vmatpush.msra.mxu0 0.0
        %3315 = vmatpush.msra.mxu0 %v3035
        %3316 = vmatpush.msra.mxu0 %v3034
        %3317 = vmatpush.msra.mxu0 %v3033
        %3318 = vmatpush.msra.mxu0 %v3032
        %3319 = vmatpush.msra.mxu0 %v3031
        %3320 = vmatpush.msra.mxu0 %v3030
        %3321 = vmatpush.msra.mxu0 %v3029
        %3322 = vmatpush.msra.mxu0 %v3028
        %3323 = vmatmul.f32.gmra.mxu0 %v3302
        %v3324 = vpop.f32.mrf.mxu0
        %v3325 = vadd.f32 0.0, %v3324
        %3326 = vmatmul.f32.gmra.mxu0 %v3305
        %v3327 = vpop.f32.mrf.mxu0
        %v3328 = vadd.f32 0.0, %v3327
        %3329 = vdwg.mxu0
        %3332 = vrot.lane.b32.xlu0 %v3325, 112
        %v3333 = vpop.permute.xlu0 %3332
        %3334 = vrot.lane.b32.xlu0 %v3328, 112
        %v3335 = vpop.permute.xlu0 %3334
        %v3338 = vmax.f32 %v3325, %v3333
        %v3339 = vmax.f32 %v3328, %v3335
        %3342 = vrot.lane.b32.xlu0 %v3338, 96
        %v3343 = vpop.permute.xlu0 %3342
        %3344 = vrot.lane.b32.xlu0 %v3339, 96
        %v3345 = vpop.permute.xlu0 %3344
        %v3348 = vmax.f32 %v3338, %v3343
        %v3349 = vmax.f32 %v3339, %v3345
        %v3351 = vrot.slane %v3348, 1
        %3352 = vrot.lane.b32.xlu0 %v3351, 16
        %v3353 = vpop.permute.xlu0 %3352
        %v3355 = vrot.slane %v3348, 2
        %3356 = vrot.lane.b32.xlu0 %v3355, 32
        %v3357 = vpop.permute.xlu0 %3356
        %v3359 = vrot.slane %v3348, 3
        %3360 = vrot.lane.b32.xlu0 %v3359, 48
        %v3361 = vpop.permute.xlu0 %3360
        %v3363 = vrot.slane %v3348, 4
        %3364 = vrot.lane.b32.xlu0 %v3363, 64
        %v3365 = vpop.permute.xlu0 %3364
        %v3367 = vrot.slane %v3348, 5
        %3368 = vrot.lane.b32.xlu0 %v3367, 80
        %v3369 = vpop.permute.xlu0 %3368
        %v3371 = vrot.slane %v3348, 6
        %3372 = vrot.lane.b32.xlu0 %v3371, 96
        %v3373 = vpop.permute.xlu0 %3372
        %v3375 = vrot.slane %v3348, 7
        %3376 = vrot.lane.b32.xlu0 %v3375, 112
        %v3377 = vpop.permute.xlu0 %3376
        %v3380 = vrot.slane %v3349, 1
        %3381 = vrot.lane.b32.xlu0 %v3380, 16
        %v3382 = vpop.permute.xlu0 %3381
        %v3384 = vrot.slane %v3349, 2
        %3385 = vrot.lane.b32.xlu0 %v3384, 32
        %v3386 = vpop.permute.xlu0 %3385
        %v3388 = vrot.slane %v3349, 3
        %3389 = vrot.lane.b32.xlu0 %v3388, 48
        %v3390 = vpop.permute.xlu0 %3389
        %v3392 = vrot.slane %v3349, 4
        %3393 = vrot.lane.b32.xlu0 %v3392, 64
        %v3394 = vpop.permute.xlu0 %3393
        %v3396 = vrot.slane %v3349, 5
        %3397 = vrot.lane.b32.xlu0 %v3396, 80
        %v3398 = vpop.permute.xlu0 %3397
        %v3400 = vrot.slane %v3349, 6
        %3401 = vrot.lane.b32.xlu0 %v3400, 96
        %v3402 = vpop.permute.xlu0 %3401
        %v3404 = vrot.slane %v3349, 7
        %3405 = vrot.lane.b32.xlu0 %v3404, 112
        %v3406 = vpop.permute.xlu0 %3405
        %v3408 = vsel %vm1119, %v3348, %v3353
        %v3409 = vsel %vm1123, %v3408, %v3357
        %v3410 = vsel %vm1127, %v3409, %v3361
        %v3411 = vsel %vm1131, %v3410, %v3365
        %v3412 = vsel %vm1135, %v3411, %v3369
        %v3413 = vsel %vm1076, %v3412, %v3373
        %v3414 = vsel %vm1053, %v3413, %v3377
        %v3415 = vsel %vm1119, %v3349, %v3382
        %v3416 = vsel %vm1123, %v3415, %v3386
        %v3417 = vsel %vm1127, %v3416, %v3390
        %v3418 = vsel %vm1131, %v3417, %v3394
        %v3419 = vsel %vm1135, %v3418, %v3398
        %v3420 = vsel %vm1076, %v3419, %v3402
        %v3421 = vsel %vm1053, %v3420, %v3406
        %v3422 = vadd.f32 %v2977, %v3041
        %v3423 = vadd.f32 %v2980, %v3046
        %v3424 = vsel %vm1131, %v3422, 0.0
        %3425 = vadd.xlane.f32.xlu0 %v3424
        %v3426 = vpop.xlane.xlu0 %3425
        %v3427 = vsel %vm1131, %v3423, 0.0
        %3428 = vadd.xlane.f32.xlu0 %v3427
        %v3429 = vpop.xlane.xlu0 %3428
        %v3430 = vmul.f32 %v3426, 0.015625
        %v3431 = vmul.f32 %v3429, 0.015625
        %v3432 = vmul.f32 %v3422, %v3422
        %v3433 = vmul.f32 %v3423, %v3423
        %v3434 = vsel %vm1131, %v3432, 0.0
        %3435 = vadd.xlane.f32.xlu0 %v3434
        %v3436 = vpop.xlane.xlu0 %3435
        %v3437 = vsel %vm1131, %v3433, 0.0
        %3438 = vadd.xlane.f32.xlu0 %v3437
        %v3439 = vpop.xlane.xlu0 %3438
        %v3440 = vmul.f32 %v3436, 0.015625
        %v3441 = vmul.f32 %v3439, 0.015625
        %v3442 = vmul.f32 %v3430, %v3430
        %v3443 = vmul.f32 %v3431, %v3431
        %v3444 = vsub.f32 %v3440, %v3442
        %v3445 = vsub.f32 %v3441, %v3443
        %v3446 = vmax.f32 %v3444, 0.0
        %v3447 = vmax.f32 %v3445, 0.0
        %v3448 = vsub.f32 %v3422, %v3430
        %v3449 = vsub.f32 %v3423, %v3431
        %v3450 = vadd.f32 %v3446, 1e-05
        %v3451 = vadd.f32 %v3447, 1e-05
        %v3452 = vrsqrt.pop %v3450
        %v3453 = vmul.f32 %v3452, %v3450
        %v3454 = vmul.f32 %v3453, %v3452
        %v3455 = vmul.f32 0.5, %v3454
        %v3456 = vsub.f32 1.5, %v3455
        %v3457 = vmul.f32 %v3452, %v3456
        %vm3458 = vweird.f32 %v3450
        %vm3459 = vweird.f32 %v3452
        %vm3460 = vmor %vm3458, %vm3459
        %v3461 = vsel %vm3460, %v3452, %v3457
        %v3462 = vrsqrt.pop %v3451
        %v3463 = vmul.f32 %v3462, %v3451
        %v3464 = vmul.f32 %v3463, %v3462
        %v3465 = vmul.f32 0.5, %v3464
        %v3466 = vsub.f32 1.5, %v3465
        %v3467 = vmul.f32 %v3462, %v3466
        %vm3468 = vweird.f32 %v3451
        %vm3469 = vweird.f32 %v3462
        %vm3470 = vmor %vm3468, %vm3469
        %v3471 = vsel %vm3470, %v3462, %v3467
        %v3472 = vmul.f32 %v3448, %v3461
        %v3473 = vmul.f32 %v3449, %v3471
        %v3474 = vmul.f32 %v3472, %v3102
        %v3475 = vmul.f32 %v3473, %v3106
        %v3476 = vadd.f32 %v3474, %v3112
        %v3477 = vadd.f32 %v3475, %v3116
        %v3478 = vmax.f32 %v3476, 0.0
        %v3479 = vmax.f32 %v3477, 0.0
        %v3481 = vsel %vm1131, %v3478, 0
        %v3484 = vsel %vm1131, %v3479, 0
        %3486 = vmatpush.msra.mxu0 0.0
        %3487 = vmatpush.msra.mxu0 0.0
        %3488 = vmatpush.msra.mxu0 0.0
        %3489 = vmatpush.msra.mxu0 0.0
        %3490 = vmatpush.msra.mxu0 0.0
        %3491 = vmatpush.msra.mxu0 0.0
        %3492 = vmatpush.msra.mxu0 0.0
        %3493 = vmatpush.msra.mxu0 0.0
        %3494 = vmatpush.msra.mxu0 %v3035
        %3495 = vmatpush.msra.mxu0 %v3034
        %3496 = vmatpush.msra.mxu0 %v3033
        %3497 = vmatpush.msra.mxu0 %v3032
        %3498 = vmatpush.msra.mxu0 %v3031
        %3499 = vmatpush.msra.mxu0 %v3030
        %3500 = vmatpush.msra.mxu0 %v3029
        %3501 = vmatpush.msra.mxu0 %v3028
        %3502 = vmatmul.f32.gmra.mxu0 %v3481
        %v3503 = vpop.f32.mrf.mxu0
        %v3504 = vadd.f32 0.0, %v3503
        %3505 = vmatmul.f32.gmra.mxu0 %v3484
        %v3506 = vpop.f32.mrf.mxu0
        %v3507 = vadd.f32 0.0, %v3506
        %3508 = vdwg.mxu0
        %3511 = vrot.lane.b32.xlu0 %v3504, 112
        %v3512 = vpop.permute.xlu0 %3511
        %3513 = vrot.lane.b32.xlu0 %v3507, 112
        %v3514 = vpop.permute.xlu0 %3513
        %v3517 = vmax.f32 %v3504, %v3512
        %v3518 = vmax.f32 %v3507, %v3514
        %3521 = vrot.lane.b32.xlu0 %v3517, 96
        %v3522 = vpop.permute.xlu0 %3521
        %3523 = vrot.lane.b32.xlu0 %v3518, 96
        %v3524 = vpop.permute.xlu0 %3523
        %v3527 = vmax.f32 %v3517, %v3522
        %v3528 = vmax.f32 %v3518, %v3524
        %v3530 = vrot.slane %v3527, 1
        %3531 = vrot.lane.b32.xlu0 %v3530, 16
        %v3532 = vpop.permute.xlu0 %3531
        %v3534 = vrot.slane %v3527, 2
        %3535 = vrot.lane.b32.xlu0 %v3534, 32
        %v3536 = vpop.permute.xlu0 %3535
        %v3538 = vrot.slane %v3527, 3
        %3539 = vrot.lane.b32.xlu0 %v3538, 48
        %v3540 = vpop.permute.xlu0 %3539
        %v3542 = vrot.slane %v3527, 4
        %3543 = vrot.lane.b32.xlu0 %v3542, 64
        %v3544 = vpop.permute.xlu0 %3543
        %v3546 = vrot.slane %v3527, 5
        %3547 = vrot.lane.b32.xlu0 %v3546, 80
        %v3548 = vpop.permute.xlu0 %3547
        %v3550 = vrot.slane %v3527, 6
        %3551 = vrot.lane.b32.xlu0 %v3550, 96
        %v3552 = vpop.permute.xlu0 %3551
        %v3554 = vrot.slane %v3527, 7
        %3555 = vrot.lane.b32.xlu0 %v3554, 112
        %v3556 = vpop.permute.xlu0 %3555
        %v3559 = vrot.slane %v3528, 1
        %3560 = vrot.lane.b32.xlu0 %v3559, 16
        %v3561 = vpop.permute.xlu0 %3560
        %v3563 = vrot.slane %v3528, 2
        %3564 = vrot.lane.b32.xlu0 %v3563, 32
        %v3565 = vpop.permute.xlu0 %3564
        %v3567 = vrot.slane %v3528, 3
        %3568 = vrot.lane.b32.xlu0 %v3567, 48
        %v3569 = vpop.permute.xlu0 %3568
        %v3571 = vrot.slane %v3528, 4
        %3572 = vrot.lane.b32.xlu0 %v3571, 64
        %v3573 = vpop.permute.xlu0 %3572
        %v3575 = vrot.slane %v3528, 5
        %3576 = vrot.lane.b32.xlu0 %v3575, 80
        %v3577 = vpop.permute.xlu0 %3576
        %v3579 = vrot.slane %v3528, 6
        %3580 = vrot.lane.b32.xlu0 %v3579, 96
        %v3581 = vpop.permute.xlu0 %3580
        %v3583 = vrot.slane %v3528, 7
        %3584 = vrot.lane.b32.xlu0 %v3583, 112
        %v3585 = vpop.permute.xlu0 %3584
        %v3587 = vsel %vm1119, %v3527, %v3532
        %v3588 = vsel %vm1123, %v3587, %v3536
        %v3589 = vsel %vm1127, %v3588, %v3540
        %v3590 = vsel %vm1131, %v3589, %v3544
        %v3591 = vsel %vm1135, %v3590, %v3548
        %v3592 = vsel %vm1076, %v3591, %v3552
        %v3593 = vsel %vm1053, %v3592, %v3556
        %v3594 = vsel %vm1119, %v3528, %v3561
        %v3595 = vsel %vm1123, %v3594, %v3565
        %v3596 = vsel %vm1127, %v3595, %v3569
        %v3597 = vsel %vm1131, %v3596, %v3573
        %v3598 = vsel %vm1135, %v3597, %v3577
        %v3599 = vsel %vm1076, %v3598, %v3581
        %v3600 = vsel %vm1053, %v3599, %v3585
        %v3601 = vadd.f32 %v3023, %v3041
        %v3602 = vadd.f32 %v3026, %v3046
        %v3603 = vsel %vm1131, %v3601, 0.0
        %3604 = vadd.xlane.f32.xlu0 %v3603
        %v3605 = vpop.xlane.xlu0 %3604
        %v3606 = vsel %vm1131, %v3602, 0.0
        %3607 = vadd.xlane.f32.xlu0 %v3606
        %v3608 = vpop.xlane.xlu0 %3607
        %v3609 = vmul.f32 %v3605, 0.015625
        %v3610 = vmul.f32 %v3608, 0.015625
        %v3611 = vmul.f32 %v3601, %v3601
        %v3612 = vmul.f32 %v3602, %v3602
        %v3613 = vsel %vm1131, %v3611, 0.0
        %3614 = vadd.xlane.f32.xlu0 %v3613
        %v3615 = vpop.xlane.xlu0 %3614
        %v3616 = vsel %vm1131, %v3612, 0.0
        %3617 = vadd.xlane.f32.xlu0 %v3616
        %v3618 = vpop.xlane.xlu0 %3617
        %v3619 = vmul.f32 %v3615, 0.015625
        %v3620 = vmul.f32 %v3618, 0.015625
        %v3621 = vmul.f32 %v3609, %v3609
        %v3622 = vmul.f32 %v3610, %v3610
        %v3623 = vsub.f32 %v3619, %v3621
        %v3624 = vsub.f32 %v3620, %v3622
        %v3625 = vmax.f32 %v3623, 0.0
        %v3626 = vmax.f32 %v3624, 0.0
        %v3627 = vsub.f32 %v3601, %v3609
        %v3628 = vsub.f32 %v3602, %v3610
        %v3629 = vadd.f32 %v3625, 1e-05
        %v3630 = vadd.f32 %v3626, 1e-05
        %v3631 = vrsqrt.pop %v3629
        %v3632 = vmul.f32 %v3631, %v3629
        %v3633 = vmul.f32 %v3632, %v3631
        %v3634 = vmul.f32 0.5, %v3633
        %v3635 = vsub.f32 1.5, %v3634
        %v3636 = vmul.f32 %v3631, %v3635
        %vm3637 = vweird.f32 %v3629
        %vm3638 = vweird.f32 %v3631
        %vm3639 = vmor %vm3637, %vm3638
        %v3640 = vsel %vm3639, %v3631, %v3636
        %v3641 = vrsqrt.pop %v3630
        %v3642 = vmul.f32 %v3641, %v3630
        %v3643 = vmul.f32 %v3642, %v3641
        %v3644 = vmul.f32 0.5, %v3643
        %v3645 = vsub.f32 1.5, %v3644
        %v3646 = vmul.f32 %v3641, %v3645
        %vm3647 = vweird.f32 %v3630
        %vm3648 = vweird.f32 %v3641
        %vm3649 = vmor %vm3647, %vm3648
        %v3650 = vsel %vm3649, %v3641, %v3646
        %v3651 = vmul.f32 %v3627, %v3640
        %v3652 = vmul.f32 %v3628, %v3650
        %v3653 = vmul.f32 %v3651, %v3102
        %v3654 = vmul.f32 %v3652, %v3106
        %v3655 = vadd.f32 %v3653, %v3112
        %v3656 = vadd.f32 %v3654, %v3116
        %v3657 = vmax.f32 %v3655, 0.0
        %v3658 = vmax.f32 %v3656, 0.0
        %v3660 = vsel %vm1131, %v3657, 0
        %v3663 = vsel %vm1131, %v3658, 0
        %3665 = vmatpush.msra.mxu0 0.0
        %3666 = vmatpush.msra.mxu0 0.0
        %3667 = vmatpush.msra.mxu0 0.0
        %3668 = vmatpush.msra.mxu0 0.0
        %3669 = vmatpush.msra.mxu0 0.0
        %3670 = vmatpush.msra.mxu0 0.0
        %3671 = vmatpush.msra.mxu0 0.0
        %3672 = vmatpush.msra.mxu0 0.0
        %3673 = vmatpush.msra.mxu0 %v3035
        %3674 = vmatpush.msra.mxu0 %v3034
        %3675 = vmatpush.msra.mxu0 %v3033
        %3676 = vmatpush.msra.mxu0 %v3032
        %3677 = vmatpush.msra.mxu0 %v3031
        %3678 = vmatpush.msra.mxu0 %v3030
        %3679 = vmatpush.msra.mxu0 %v3029
        %3680 = vmatpush.msra.mxu0 %v3028
        %3681 = vmatmul.f32.gmra.mxu0 %v3660
        %v3682 = vpop.f32.mrf.mxu0
        %v3683 = vadd.f32 0.0, %v3682
        %3684 = vmatmul.f32.gmra.mxu0 %v3663
        %v3685 = vpop.f32.mrf.mxu0
        %v3686 = vadd.f32 0.0, %v3685
        %3687 = vdwg.mxu0
        %3690 = vrot.lane.b32.xlu0 %v3683, 112
        %v3691 = vpop.permute.xlu0 %3690
        %3692 = vrot.lane.b32.xlu0 %v3686, 112
        %v3693 = vpop.permute.xlu0 %3692
        %v3696 = vmax.f32 %v3683, %v3691
        %v3697 = vmax.f32 %v3686, %v3693
        %3700 = vrot.lane.b32.xlu0 %v3696, 96
        %v3701 = vpop.permute.xlu0 %3700
        %3702 = vrot.lane.b32.xlu0 %v3697, 96
        %v3703 = vpop.permute.xlu0 %3702
        %v3706 = vmax.f32 %v3696, %v3701
        %v3707 = vmax.f32 %v3697, %v3703
        %v3709 = vrot.slane %v3706, 1
        %3710 = vrot.lane.b32.xlu0 %v3709, 16
        %v3711 = vpop.permute.xlu0 %3710
        %v3713 = vrot.slane %v3706, 2
        %3714 = vrot.lane.b32.xlu0 %v3713, 32
        %v3715 = vpop.permute.xlu0 %3714
        %v3717 = vrot.slane %v3706, 3
        %3718 = vrot.lane.b32.xlu0 %v3717, 48
        %v3719 = vpop.permute.xlu0 %3718
        %v3721 = vrot.slane %v3706, 4
        %3722 = vrot.lane.b32.xlu0 %v3721, 64
        %v3723 = vpop.permute.xlu0 %3722
        %v3725 = vrot.slane %v3706, 5
        %3726 = vrot.lane.b32.xlu0 %v3725, 80
        %v3727 = vpop.permute.xlu0 %3726
        %v3729 = vrot.slane %v3706, 6
        %3730 = vrot.lane.b32.xlu0 %v3729, 96
        %v3731 = vpop.permute.xlu0 %3730
        %v3733 = vrot.slane %v3706, 7
        %3734 = vrot.lane.b32.xlu0 %v3733, 112
        %v3735 = vpop.permute.xlu0 %3734
        %v3738 = vrot.slane %v3707, 1
        %3739 = vrot.lane.b32.xlu0 %v3738, 16
        %v3740 = vpop.permute.xlu0 %3739
        %v3742 = vrot.slane %v3707, 2
        %3743 = vrot.lane.b32.xlu0 %v3742, 32
        %v3744 = vpop.permute.xlu0 %3743
        %v3746 = vrot.slane %v3707, 3
        %3747 = vrot.lane.b32.xlu0 %v3746, 48
        %v3748 = vpop.permute.xlu0 %3747
        %v3750 = vrot.slane %v3707, 4
        %3751 = vrot.lane.b32.xlu0 %v3750, 64
        %v3752 = vpop.permute.xlu0 %3751
        %v3754 = vrot.slane %v3707, 5
        %3755 = vrot.lane.b32.xlu0 %v3754, 80
        %v3756 = vpop.permute.xlu0 %3755
        %v3758 = vrot.slane %v3707, 6
        %3759 = vrot.lane.b32.xlu0 %v3758, 96
        %v3760 = vpop.permute.xlu0 %3759
        %v3762 = vrot.slane %v3707, 7
        %3763 = vrot.lane.b32.xlu0 %v3762, 112
        %v3764 = vpop.permute.xlu0 %3763
        %v3766 = vsel %vm1119, %v3706, %v3711
        %v3767 = vsel %vm1123, %v3766, %v3715
        %v3768 = vsel %vm1127, %v3767, %v3719
        %v3769 = vsel %vm1131, %v3768, %v3723
        %v3770 = vsel %vm1135, %v3769, %v3727
        %v3771 = vsel %vm1076, %v3770, %v3731
        %v3772 = vsel %vm1053, %v3771, %v3735
        %v3773 = vsel %vm1119, %v3707, %v3740
        %v3774 = vsel %vm1123, %v3773, %v3744
        %v3775 = vsel %vm1127, %v3774, %v3748
        %v3776 = vsel %vm1131, %v3775, %v3752
        %v3777 = vsel %vm1135, %v3776, %v3756
        %v3778 = vsel %vm1076, %v3777, %v3760
        %v3779 = vsel %vm1053, %v3778, %v3764
        %v3782 = vrot.slane %v3414, 7
        %v3783 = vrot.slane %v3421, 7
        %v3788 = vrot.slane %v3593, 6
        %v3789 = vrot.slane %v3600, 6
        %v3794 = vrot.slane %v3772, 5
        %v3795 = vrot.slane %v3779, 5
        %v3798 = vsel %vm497, %v3235, %v3782
        %v3799 = vsel %vm497, %v3242, %v3783
        %v3800 = vsel %vm1367, %v3798, %v3788
        %v3801 = vsel %vm1367, %v3799, %v3789
        %vm3802 = vcmask 1042432
        %v3803 = vsel %vm3802, %v3800, %v3794
        %v3804 = vsel %vm3802, %v3801, %v3795
        %v3805 = vld [vmem:[%s6] sm:$0xff]
        %v3806 = vld [vmem:[%s6 + $0x8] sm:$0xff]
        %v3807 = vld [vmem:[%s6 + $0x10] sm:$0xff]
        %v3808 = vld [vmem:[%s6 + $0x18] sm:$0xff]
        %v3809 = vld [vmem:[%s6 + $0x20] sm:$0xff]
        %v3810 = vld [vmem:[%s6 + $0x28] sm:$0xff]
        %v3811 = vld [vmem:[%s6 + $0x30] sm:$0xff]
        %v3812 = vld [vmem:[%s6 + $0x38] sm:$0xff]
        %v3813 = vld [vmem:[%s6 + $0x40] sm:$0xff]
        %v3814 = vld [vmem:[%s6 + $0x48] sm:$0xff]
        %v3815 = vld [vmem:[%s6 + $0x50] sm:$0xff]
        %v3816 = vld [vmem:[%s6 + $0x58] sm:$0xff]
        %v3817 = vld [vmem:[%s6 + $0x60] sm:$0xff]
        %v3818 = vld [vmem:[%s6 + $0x68] sm:$0xff]
        %v3819 = vld [vmem:[%s6 + $0x70] sm:$0xff]
        %v3820 = vld [vmem:[%s6 + $0x78] sm:$0xff]
        %v3821 = vld [vmem:[%s6 + $0x80] sm:$0xff]
        %v3822 = vld [vmem:[%s6 + $0x88] sm:$0xff]
        %v3823 = vld [vmem:[%s6 + $0x90] sm:$0xff]
        %v3824 = vld [vmem:[%s6 + $0x98] sm:$0xff]
        %v3825 = vld [vmem:[%s6 + $0xa0] sm:$0xff]
        %v3826 = vld [vmem:[%s6 + $0xa8] sm:$0xff]
        %v3827 = vld [vmem:[%s6 + $0xb0] sm:$0xff]
        %v3828 = vld [vmem:[%s6 + $0xb8] sm:$0xff]
        %v3829 = vld [vmem:[%s6 + $0xc0] sm:$0xff]
        %v3830 = vld [vmem:[%s6 + $0xc8] sm:$0xff]
        %v3831 = vld [vmem:[%s6 + $0xd0] sm:$0xff]
        %v3832 = vld [vmem:[%s6 + $0xd8] sm:$0xff]
        %v3833 = vld [vmem:[%s6 + $0xe0] sm:$0xff]
        %v3834 = vld [vmem:[%s6 + $0xe8] sm:$0xff]
        %v3835 = vld [vmem:[%s6 + $0xf0] sm:$0xff]
        %v3836 = vld [vmem:[%s6 + $0xf8] sm:$0xff]
        %v3837 = vld [vmem:[%s7] sm:$0x1]
        %v3838 = vperm.slane %v3837, 0
        %3839 = vmatpush.msra.mxu0 %v3820
        %3840 = vmatpush.msra.mxu0 %v3819
        %3841 = vmatpush.msra.mxu0 %v3818
        %3842 = vmatpush.msra.mxu0 %v3817
        %3843 = vmatpush.msra.mxu0 %v3816
        %3844 = vmatpush.msra.mxu0 %v3815
        %3845 = vmatpush.msra.mxu0 %v3814
        %3846 = vmatpush.msra.mxu0 %v3813
        %3847 = vmatpush.msra.mxu0 %v3812
        %3848 = vmatpush.msra.mxu0 %v3811
        %3849 = vmatpush.msra.mxu0 %v3810
        %3850 = vmatpush.msra.mxu0 %v3809
        %3851 = vmatpush.msra.mxu0 %v3808
        %3852 = vmatpush.msra.mxu0 %v3807
        %3853 = vmatpush.msra.mxu0 %v3806
        %3854 = vmatpush.msra.mxu0 %v3805
        %3855 = vmatmul.f32.gmra.mxu0 %v3803
        %v3856 = vpop.f32.mrf.mxu0
        %v3857 = vadd.f32 %v3838, %v3856
        %3858 = vdwg.mxu0
        %3859 = vmatpush.msra.mxu0 %v3836
        %3860 = vmatpush.msra.mxu0 %v3835
        %3861 = vmatpush.msra.mxu0 %v3834
        %3862 = vmatpush.msra.mxu0 %v3833
        %3863 = vmatpush.msra.mxu0 %v3832
        %3864 = vmatpush.msra.mxu0 %v3831
        %3865 = vmatpush.msra.mxu0 %v3830
        %3866 = vmatpush.msra.mxu0 %v3829
        %3867 = vmatpush.msra.mxu0 %v3828
        %3868 = vmatpush.msra.mxu0 %v3827
        %3869 = vmatpush.msra.mxu0 %v3826
        %3870 = vmatpush.msra.mxu0 %v3825
        %3871 = vmatpush.msra.mxu0 %v3824
        %3872 = vmatpush.msra.mxu0 %v3823
        %3873 = vmatpush.msra.mxu0 %v3822
        %3874 = vmatpush.msra.mxu0 %v3821
        %3875 = vmatmul.f32.gmra.mxu0 %v3804
        %v3876 = vpop.f32.mrf.mxu0
        %v3877 = vadd.f32 %v3857, %v3876
        %3878 = vdwg.mxu0
        %v3879 = vld [vmem:[%s7 + $0x1] sm:$0x1]
        %v3880 = vld [vmem:[%s7 + $0x2] sm:$0x1]
        %vm3881 = vcmask 977920
        %v3882 = vsel %vm3881, %v3877, 0.0
        %3883 = vadd.xlane.f32.xlu0 %v3882
        %v3884 = vpop.xlane.xlu0 %3883
        %v3885 = vrcp.pop 120.0
        %v3886 = vmul.f32 120.0, %v3885
        %v3887 = vsub.f32 1.0, %v3886
        %v3888 = vmul.f32 %v3885, %v3887
        %v3889 = vadd.f32 %v3885, %v3888
        %vm3890 = vweird.f32 %v3885
        %v3891 = vsel %vm3890, %v3885, %v3889
        %v3892 = vmul.f32 %v3884, %v3891
        %v3893 = vsub.f32 %v3877, %v3892
        %v3894 = vmul.f32 %v3893, %v3893
        %v3895 = vsel %vm3881, %v3894, 0.0
        %3896 = vadd.xlane.f32.xlu0 %v3895
        %v3897 = vpop.xlane.xlu0 %3896
        %v3898 = vmul.f32 %v3897, %v3891
        %v3899 = vadd.f32 %v3898, 1e-05
        %v3900 = vrsqrt.pop %v3899
        %v3901 = vmul.f32 %v3900, %v3899
        %v3902 = vmul.f32 %v3901, %v3900
        %v3903 = vmul.f32 0.5, %v3902
        %v3904 = vsub.f32 1.5, %v3903
        %v3905 = vmul.f32 %v3900, %v3904
        %vm3906 = vweird.f32 %v3899
        %vm3907 = vweird.f32 %v3900
        %vm3908 = vmor %vm3906, %vm3907
        %v3909 = vsel %vm3908, %v3900, %v3905
        %v3910 = vmul.f32 %v3893, %v3909
        %v3911 = vperm.slane %v3879, 0
        %v3912 = vmul.f32 %v3910, %v3911
        %v3913 = vperm.slane %v3880, 0
        %v3914 = vadd.f32 %v3912, %v3913
        %v3915 = vmax.f32 %v3914, 0.0
        %v3916 = vld [vmem:[%s8] sm:$0xff]
        %v3917 = vld [vmem:[%s8 + $0x8] sm:$0xff]
        %v3918 = vld [vmem:[%s8 + $0x10] sm:$0xff]
        %v3919 = vld [vmem:[%s8 + $0x18] sm:$0xff]
        %v3920 = vld [vmem:[%s8 + $0x20] sm:$0xff]
        %v3921 = vld [vmem:[%s8 + $0x28] sm:$0xff]
        %v3922 = vld [vmem:[%s8 + $0x30] sm:$0xff]
        %v3923 = vld [vmem:[%s8 + $0x38] sm:$0xff]
        %v3924 = vld [vmem:[%s8 + $0x40] sm:$0xff]
        %v3925 = vld [vmem:[%s8 + $0x48] sm:$0xff]
        %v3926 = vld [vmem:[%s8 + $0x50] sm:$0xff]
        %v3927 = vld [vmem:[%s8 + $0x58] sm:$0xff]
        %v3928 = vld [vmem:[%s8 + $0x60] sm:$0xff]
        %v3929 = vld [vmem:[%s8 + $0x68] sm:$0xff]
        %v3930 = vld [vmem:[%s8 + $0x70] sm:$0xff]
        %v3931 = vld [vmem:[%s9] sm:$0x1]
        %v3932 = vperm.slane %v3931, 0
        %vm3933 = vcmask 982016
        %v3935 = vsel %vm3933, %v3915, 0
        %3937 = vmatpush.msra.mxu0 0.0
        %3938 = vmatpush.msra.mxu0 %v3930
        %3939 = vmatpush.msra.mxu0 %v3929
        %3940 = vmatpush.msra.mxu0 %v3928
        %3941 = vmatpush.msra.mxu0 %v3927
        %3942 = vmatpush.msra.mxu0 %v3926
        %3943 = vmatpush.msra.mxu0 %v3925
        %3944 = vmatpush.msra.mxu0 %v3924
        %3945 = vmatpush.msra.mxu0 %v3923
        %3946 = vmatpush.msra.mxu0 %v3922
        %3947 = vmatpush.msra.mxu0 %v3921
        %3948 = vmatpush.msra.mxu0 %v3920
        %3949 = vmatpush.msra.mxu0 %v3919
        %3950 = vmatpush.msra.mxu0 %v3918
        %3951 = vmatpush.msra.mxu0 %v3917
        %3952 = vmatpush.msra.mxu0 %v3916
        %3953 = vmatmul.f32.gmra.mxu0 %v3935
        %v3954 = vpop.f32.mrf.mxu0
        %v3955 = vadd.f32 %v3932, %v3954
        %3956 = vdwg.mxu0
        %v3957 = vld [vmem:[%s9 + $0x1] sm:$0x1]
        %v3958 = vld [vmem:[%s9 + $0x2] sm:$0x1]
        %vm3959 = vcmask 683008
        %v3960 = vsel %vm3959, %v3955, 0.0
        %3961 = vadd.xlane.f32.xlu0 %v3960
        %v3962 = vpop.xlane.xlu0 %3961
        %v3963 = vrcp.pop 84.0
        %v3964 = vmul.f32 84.0, %v3963
        %v3965 = vsub.f32 1.0, %v3964
        %v3966 = vmul.f32 %v3963, %v3965
        %v3967 = vadd.f32 %v3963, %v3966
        %vm3968 = vweird.f32 %v3963
        %v3969 = vsel %vm3968, %v3963, %v3967
        %v3970 = vmul.f32 %v3962, %v3969
        %v3971 = vsub.f32 %v3955, %v3970
        %v3972 = vmul.f32 %v3971, %v3971
        %v3973 = vsel %vm3959, %v3972, 0.0
        %3974 = vadd.xlane.f32.xlu0 %v3973
        %v3975 = vpop.xlane.xlu0 %3974
        %v3976 = vmul.f32 %v3975, %v3969
        %v3977 = vadd.f32 %v3976, 1e-05
        %v3978 = vrsqrt.pop %v3977
        %v3979 = vmul.f32 %v3978, %v3977
        %v3980 = vmul.f32 %v3979, %v3978
        %v3981 = vmul.f32 0.5, %v3980
        %v3982 = vsub.f32 1.5, %v3981
        %v3983 = vmul.f32 %v3978, %v3982
        %vm3984 = vweird.f32 %v3977
        %vm3985 = vweird.f32 %v3978
        %vm3986 = vmor %vm3984, %vm3985
        %v3987 = vsel %vm3986, %v3978, %v3983
        %v3988 = vmul.f32 %v3971, %v3987
        %v3989 = vperm.slane %v3957, 0
        %v3990 = vmul.f32 %v3988, %v3989
        %v3991 = vperm.slane %v3958, 0
        %v3992 = vadd.f32 %v3990, %v3991
        %v3993 = vmax.f32 %v3992, 0.0
        %v3994 = vld [vmem:[%s10] sm:$0xff]
        %v3995 = vld [vmem:[%s10 + $0x8] sm:$0xff]
        %v3996 = vld [vmem:[%s10 + $0x10] sm:$0xff]
        %v3997 = vld [vmem:[%s10 + $0x18] sm:$0xff]
        %v3998 = vld [vmem:[%s10 + $0x20] sm:$0xff]
        %v3999 = vld [vmem:[%s10 + $0x28] sm:$0xff]
        %v4000 = vld [vmem:[%s10 + $0x30] sm:$0xff]
        %v4001 = vld [vmem:[%s10 + $0x38] sm:$0xff]
        %v4002 = vld [vmem:[%s10 + $0x40] sm:$0xff]
        %v4003 = vld [vmem:[%s10 + $0x48] sm:$0xff]
        %v4004 = vld [vmem:[%s10 + $0x50] sm:$0xf]
        %v4005 = vld [vmem:[%s11] sm:$0x1]
        %v4007 = vperm.slane %v4005, 0
        %v4010 = vsel %vm1294, %v3993, 0
        %v4013 = vsel %vm1365, %v4004, 0
        %4015 = vmatpush.msra.mxu0 0.0
        %4016 = vmatpush.msra.mxu0 0.0
        %4017 = vmatpush.msra.mxu0 0.0
        %4018 = vmatpush.msra.mxu0 0.0
        %4019 = vmatpush.msra.mxu0 0.0
        %4020 = vmatpush.msra.mxu0 %v4013
        %4021 = vmatpush.msra.mxu0 %v4003
        %4022 = vmatpush.msra.mxu0 %v4002
        %4023 = vmatpush.msra.mxu0 %v4001
        %4024 = vmatpush.msra.mxu0 %v4000
        %4025 = vmatpush.msra.mxu0 %v3999
        %4026 = vmatpush.msra.mxu0 %v3998
        %4027 = vmatpush.msra.mxu0 %v3997
        %4028 = vmatpush.msra.mxu0 %v3996
        %4029 = vmatpush.msra.mxu0 %v3995
        %4030 = vmatpush.msra.mxu0 %v3994
        %4031 = vmatmul.f32.gmra.mxu0 %v4010
        %v4032 = vpop.f32.mrf.mxu0
        %v4033 = vadd.f32 %v4007, %v4032
        %4034 = vdwg.mxu0
        %vm4035 = vcmask 76800
        %4036 = vst.msk [vmem:[%s406] sm:$0xf] %vm4035, %v4033
        %s4037 = sand.u32 %s291, 1
        %s4038 = scalar_lea.sflag [#allocation3], %s4037
        %s4039 = sand.u32 %s291, 1
        %s4040 = smul.addr %s4039, 4
        %s4041 = scalar_lea.vmem [#allocation2], %s4040
        // Predicated region
        $region69: #{forward.1} parent=67 // pred_check
          %p4042 = pneg %p301
        $region70: #{forward.1} parent=67 // pred_check_branch
          %4044 = sbr.rel (%p4042) target = $region72
        $region71: #{forward.1} parent=67 // pred_region
          %4046 = vsyncadd %s4038, 0
          %s4047 = smul.addr %s26, 4
          %s4048 = scalar_lea.hbm %s12, %s4047
          %s4050 = sshll.u32 %s4041, 4
          %s4051 = int_to_ptr.vmem [resolvable:$true] %s4050
          %s4052 = sshll.u32 %s4048, 4
          %s4053 = int_to_ptr.hbm [resolvable:$true] %s4052
          %4055 = dma.vmem_to_hbm [thread:$0]  %s4051, 64, %s4053, %s4038
        $region72: #{forward.1} parent=67 // pred_fallthru
          _
      $region68: #{forward.1} parent=5 // pred_fallthru
        _
      %p4056 = scmp.le.s32.totalorder 2, %s21
      // Predicated region
      $region73: #{forward.1} parent=5 // pred_check
        %p4057 = pneg %p4056
      $region74: #{forward.1} parent=5 // pred_check_branch
        %4059 = sbr.rel (%p4057) target = $region76
      $region75: #{forward.1} parent=5 // pred_region
        %s4060 = ssub.s32 %s21, 2
        // Predicated region
        $region77: #{forward.1} parent=75 // pred_check
          %p4061 = pneg %p307
        $region78: #{forward.1} parent=75 // pred_check_branch
          %4063 = sbr.rel (%p4061) target = $region80
        $region79: #{forward.1} parent=75 // pred_region
          %s4064 = sand.u32 %s292, 1
          %s4065 = scalar_lea.sflag [#allocation3], %s4064
          %s4066 = sand.u32 %s292, 1
          %s4067 = smul.addr %s4066, 4
          %s4068 = scalar_lea.vmem [#allocation2], %s4067
          %4070 = dma.done %s4065, 64
        $region80: #{forward.1} parent=75 // pred_fallthru
          _
      $region76: #{forward.1} parent=5 // pred_fallthru
        _
    $region6: #{forward.1} parent=1 // loop_footer
      %s25 = sadd.s32 1, %s21
    $region7: #{forward.1} parent=1 // loop_footer_branch
      %20 = sbr.rel target = $region3
    $region8: #{forward.1} parent=1 // loop_exit
      _
    %4071 = vsyncpa [#allocation3], 1
    %s4072 = scalar_lea.sflag [#allocation3], 1
    %4073 = vsyncpa %s4072, 1

</llo_original>
